<compile_context>
chip_gen: v6e
topology: v6e:2x2x1
jax: 0.10.0
libtpu: 0.0.40
codegen_flags: <defaults>
</compile_context>

<pallas_src>
import functools

import jax
import jax.numpy as jnp
from jax import lax
from jax.experimental import pallas as pl
from jax.experimental.pallas import tpu as pltpu


# ------------------------------- helpers ------------------------------------

def _round_up(x, m):
    return ((x + m - 1) // m) * m


def _pack_gate_weight(w, d_in_pad, Hp):
    """PyTorch gate-stacked weight (3H, D_in) -> (d_in_pad, 3*Hp).

    Gate g occupies lane-aligned columns [g*Hp, g*Hp + H); padding is zeros, so the
    padded matmul is exact and padded hidden columns stay identically zero.
    """
    H3, d_in = w.shape
    H = H3 // 3
    w = jnp.transpose(w.reshape(3, H, d_in), (2, 0, 1))          # (d_in, 3, H)
    w = jnp.pad(w, ((0, d_in_pad - d_in), (0, 0), (0, Hp - H)))  # (d_in_pad, 3, Hp)
    return w.reshape(d_in_pad, 3 * Hp)


def _pack_gate_bias(b, Hp):
    """(3H,) -> (1, 3*Hp) with each gate in its own lane-aligned Hp block."""
    H = b.shape[0] // 3
    b = jnp.pad(b.reshape(3, H), ((0, 0), (0, Hp - H)))
    return b.reshape(1, 3 * Hp)


# ----------------------------- one-time packing -------------------------------

def pack_params(params, matmul_dtype=jnp.bfloat16):
    """One-time repack of PyTorch-layout params into the kernel layout.

    Do this ONCE and reuse the result; it is deliberately NOT inside gru_forward so
    the per-call path launches no pad/transpose/reshape ops.
    Returns (packed_pytree, tagset_size).
    """
    vocab, E = params["emb"].shape
    H = params["gru"][0]["w_hh"].shape[1]
    C = params["fc_w"].shape[0]

    Hp = _round_up(H, 128)     # lane-pad hidden -> lane-aligned gate blocks
    Ep = _round_up(E, 128)     # lane-dense K dim for the layer-0 input projection
    Cp = _round_up(C, 128)     # lane-dense output slab
    Vp = _round_up(vocab, 8)   # sublane-pad vocab for the in-kernel one-hot gather

    emb_p = jnp.pad(params["emb"],
                    ((0, Vp - vocab), (0, Ep - E))).astype(matmul_dtype)   # (Vp, Ep)

    layers = []
    for l, layer in enumerate(params["gru"]):
        d_in_pad = Ep if l == 0 else Hp
        w_ih_p = _pack_gate_weight(layer["w_ih"], d_in_pad, Hp).astype(matmul_dtype)
        w_hh_p = _pack_gate_weight(layer["w_hh"], Hp, Hp).astype(matmul_dtype)
        b_ih_p = _pack_gate_bias(layer["b_ih"], Hp)
        b_hh_p = _pack_gate_bias(layer["b_hh"], Hp)
        # Fold b_hr, b_hz into the hoisted gi bias; b_hn must stay inside r * (.).
        b_gi = (b_ih_p + b_hh_p.at[:, 2 * Hp:].set(0.0)).astype(jnp.float32)
        b_hn = b_hh_p[:, 2 * Hp:3 * Hp].astype(jnp.float32)               # (1, Hp)
        layers.append(dict(w_ih=w_ih_p, w_hh=w_hh_p, b_gi=b_gi, b_hn=b_hn))

    fc_w_p = jnp.pad(jnp.transpose(params["fc_w"]),
                     ((0, Hp - H), (0, Cp - C))).astype(matmul_dtype)       # (Hp, Cp)
    fc_b_p = jnp.pad(params["fc_b"], ((0, Cp - C),)).reshape(1, Cp).astype(jnp.float32)

    packed = dict(emb=emb_p, layers=layers, fc_w=fc_w_p, fc_b=fc_b_p)
    return packed, C


# --------------------------- fused model kernel ------------------------------

def _gru_model_kernel(*refs, n_layers, T, Bp, Hp, Vp, matmul_dtype):
    """refs = [ids, emb, (w_ih, w_hh, b_gi, b_hn)*n_layers, fc_w, fc_b, out, gi, seq]."""
    ids_ref = refs[0]
    emb_ref = refs[1]
    layer_refs = refs[2:2 + 4 * n_layers]
    fc_w_ref = refs[2 + 4 * n_layers]
    fc_b_ref = refs[3 + 4 * n_layers]
    out_ref = refs[4 + 4 * n_layers]
    gi_ref = refs[5 + 4 * n_layers]      # (T, Bp, 3*Hp)  hoisted input projection
    seq_ref = refs[6 + 4 * n_layers]     # (T, Bp, Hp)    previous layer's hidden sequence

    H3 = 3 * Hp
    TB = T * Bp

    # ---- in-kernel embedding lookup as a one-hot MXU matmul (tiny vocab) ----
    ids = ids_ref[...]                                                    # (TB, 1) int32
    onehot = jnp.where(ids == lax.broadcasted_iota(jnp.int32, (TB, Vp), 1),
                       1.0, 0.0).astype(matmul_dtype)                     # (TB, Vp)
    x2d = jnp.dot(onehot, emb_ref[...],
                  preferred_element_type=jnp.float32)                     # (TB, Ep) f32

    def run_layer(l, in_2d, write_seq):
        w_ih = layer_refs[4 * l][...]
        w_hh = layer_refs[4 * l + 1][...]
        b_gi = layer_refs[4 * l + 2][...]     # b_ih (all gates) + b_hr, b_hz folded in
        b_hn = layer_refs[4 * l + 3][...]     # kept separate: must sit inside r * (.)

        # Hoisted, time-invariant input projection: one big MXU matmul over T*Bp rows.
        gi_all = jnp.dot(in_2d.astype(w_ih.dtype), w_ih,
                         preferred_element_type=jnp.float32) + b_gi
        gi_ref[...] = gi_all.reshape(T, Bp, H3)

        # Hoist the broadcast out of the unrolled loop (JAX does not CSE it).
        b_hn_b = jnp.broadcast_to(b_hn, (Bp, Hp))

        def step(t, h):
            gi = gi_ref[t]                                            # (Bp, 3*Hp)
            gh = jnp.dot(h.astype(w_hh.dtype), w_hh,
                         preferred_element_type=jnp.float32)          # (Bp, 3*Hp)
            # Lane-aligned gate slices (Hp is a multiple of 128). PyTorch order r, z, n.
            r = jax.nn.sigmoid(gi[:, 0:Hp] + gh[:, 0:Hp])
            z = jax.nn.sigmoid(gi[:, Hp:2 * Hp] + gh[:, Hp:2 * Hp])
            n = jnp.tanh(gi[:, 2 * Hp:] + r * (gh[:, 2 * Hp:] + b_hn_b))
            h_new = (1.0 - z) * n + z * h
            if write_seq:
                seq_ref[t] = h_new
            return h_new

        h0 = jnp.zeros((Bp, Hp), jnp.float32)
        # Bounded unroll: keeps LLO scheduling visibility without blowing up vreg
        # live ranges / compile time at realistic T.
        return lax.fori_loop(0, T, step, h0, unroll=min(T, 8))

    # Layer 0 consumes the embedded input; later layers consume the previous layer's
    # hidden sequence, which stays resident in VMEM scratch (no HBM round-trip).
    h = run_layer(0, x2d, write_seq=(n_layers > 1))
    for l in range(1, n_layers):
        h = run_layer(l, seq_ref[...].reshape(TB, Hp),
                      write_seq=(l < n_layers - 1))

    # FC + sigmoid head on the final hidden state only (== gru_out[:, -1, :]).
    fc_w = fc_w_ref[...]
    logits = jnp.dot(h.astype(fc_w.dtype), fc_w,
                     preferred_element_type=jnp.float32) + fc_b_ref[...]
    out_ref[...] = jax.nn.sigmoid(logits).astype(out_ref.dtype)


# --------------------------------- wrapper -----------------------------------

def gru_forward(packed, x_ids, *, tagset_size):
    """x_ids: (B, T) int32 token ids -> sigmoid(fc(gru_out[:, -1, :])).squeeze().

    `packed` is the output of pack_params() (precomputed once).
    """
    B, T = x_ids.shape
    emb = packed["emb"]
    Vp, Ep = emb.shape
    layers = packed["layers"]
    n_layers = len(layers)
    Hp = layers[0]["w_hh"].shape[0]
    Cp = packed["fc_w"].shape[1]
    C = tagset_size
    matmul_dtype = emb.dtype

    Bp = _round_up(B, 8)       # sublane-pad batch

    # Time-major ids, batch padded with token 0 (padded rows compute garbage that is
    # sliced off).  This is the only per-call host-side prep: one tiny int reshape.
    ids_tb = jnp.pad(jnp.transpose(x_ids).astype(jnp.int32), ((0, 0), (0, Bp - B)))
    ids_2d = ids_tb.reshape(T * Bp, 1)

    flat_in = [ids_2d, emb]
    for layer in layers:
        flat_in += [layer["w_ih"], layer["w_hh"], layer["b_gi"], layer["b_hn"]]
    flat_in += [packed["fc_w"], packed["fc_b"]]

    def _full_block(a):
        nd = a.ndim
        return pl.BlockSpec(a.shape, lambda *_: (0,) * nd)

    # Explicit VMEM budget from the actual footprint (v5e scoped default is only 16 MiB).
    def _nbytes(a):
        return int(a.size) * a.dtype.itemsize
    scratch_bytes = T * Bp * 3 * Hp * 4 + T * Bp * Hp * 4
    vmem_bytes = sum(_nbytes(a) for a in flat_in) + Bp * Cp * 4 + scratch_bytes
    vmem_limit = int(min(max(2 * vmem_bytes + (4 << 20), 32 << 20), 120 << 20))

    kern = functools.partial(_gru_model_kernel, n_layers=n_layers, T=T, Bp=Bp,
                             Hp=Hp, Vp=Vp, matmul_dtype=matmul_dtype)

    out = pl.pallas_call(
        kern,
        out_shape=jax.ShapeDtypeStruct((Bp, Cp), jnp.float32),
        in_specs=[_full_block(a) for a in flat_in],
        out_specs=pl.BlockSpec((Bp, Cp), lambda: (0, 0)),
        scratch_shapes=[
            pltpu.VMEM((T, Bp, 3 * Hp), jnp.float32),   # hoisted gi of current layer
            pltpu.VMEM((T, Bp, Hp), jnp.float32),       # previous layer's hidden sequence
        ],
        compiler_params=pltpu.CompilerParams(vmem_limit_bytes=vmem_limit),
    )(*flat_in)

    return jnp.squeeze(out[:B, :C])


# ----------------------------- params / reference ----------------------------

def init_params(key, vocab_size, embedding_dim, hidden_size, tagset_size, n_layers):
    """Deterministic parameter init matching PyTorch shapes."""
    params = {}
    k_emb, key = jax.random.split(key)
    params["emb"] = jax.random.normal(k_emb, (vocab_size, embedding_dim), jnp.float32)

    bound = 1.0 / jnp.sqrt(hidden_size)
    layers = []
    for l in range(n_layers):
        d_in = embedding_dim if l == 0 else hidden_size
        k1, k2, k3, k4, key = jax.random.split(key, 5)
        w_ih = jax.random.uniform(k1, (3 * hidden_size, d_in), jnp.float32, -bound, bound)
        w_hh = jax.random.uniform(k2, (3 * hidden_size, hidden_size), jnp.float32, -bound, bound)
        b_ih = jax.random.uniform(k3, (3 * hidden_size,), jnp.float32, -bound, bound)
        b_hh = jax.random.uniform(k4, (3 * hidden_size,), jnp.float32, -bound, bound)
        layers.append(dict(w_ih=w_ih, w_hh=w_hh, b_ih=b_ih, b_hh=b_hh))
    params["gru"] = layers

    k5, k6, key = jax.random.split(key, 3)
    params["fc_w"] = jax.random.uniform(k5, (tagset_size, hidden_size), jnp.float32, -bound, bound)
    params["fc_b"] = jax.random.uniform(k6, (tagset_size,), jnp.float32, -bound, bound)
    return params


def gru_forward_reference(params, x_ids):
    """Pure-JAX fp32 reference (PyTorch GRU semantics) for a correctness spot check."""
    hi = lax.Precision.HIGHEST
    x = params["emb"][x_ids]                      # (B, T, E)
    B = x.shape[0]
    H = params["gru"][0]["w_hh"].shape[1]
    seq = jnp.transpose(x, (1, 0, 2))             # (T, B, E)
    for layer in params["gru"]:
        w_ih_t = jnp.transpose(layer["w_ih"])
        w_hh_t = jnp.transpose(layer["w_hh"])
        b_ih, b_hh = layer["b_ih"], layer["b_hh"]
        h = jnp.zeros((B, H), jnp.float32)
        outs = []
        for t in range(seq.shape[0]):
            gi = jnp.dot(seq[t], w_ih_t, precision=hi) + b_ih
            gh = jnp.dot(h, w_hh_t, precision=hi) + b_hh
            r = jax.nn.sigmoid(gi[:, :H] + gh[:, :H])
            z = jax.nn.sigmoid(gi[:, H:2 * H] + gh[:, H:2 * H])
            n = jnp.tanh(gi[:, 2 * H:] + r * gh[:, 2 * H:])
            h = (1.0 - z) * n + z * h
            outs.append(h)
        seq = jnp.stack(outs)
    logits = jnp.dot(seq[-1], jnp.transpose(params["fc_w"]), precision=hi) + params["fc_b"]
    return jnp.squeeze(jax.nn.sigmoid(logits))


# ----------------------------------- main ------------------------------------

if __name__ == "__main__":
    vocab_size = 32
    embedding_dim = 16
    hidden_size = 32
    tagset_size = 4
    n_layers = 2
    batch = 2
    seq_len = 8

    key = jax.random.PRNGKey(0)
    k_params, k_data = jax.random.split(key)
    params = init_params(k_params, vocab_size, embedding_dim, hidden_size,
                         tagset_size, n_layers)
    x_ids = jax.random.randint(k_data, (batch, seq_len), 0, vocab_size, dtype=jnp.int32)

    # One-time packing (bf16 MXU operands by default on all TPU generations);
    # NOT in the per-call path.
    packed, tagset = pack_params(params, matmul_dtype=jnp.bfloat16)
    packed = jax.block_until_ready(packed)

    fwd = jax.jit(functools.partial(gru_forward, tagset_size=tagset))
    out = fwd(packed, x_ids)
    jax.block_until_ready(out)
    assert out.shape == (batch, tagset_size)

    ref = gru_forward_reference(params, x_ids)
    max_err = float(jnp.max(jnp.abs(out - ref)))
    # bf16 MXU operands vs fp32 reference: allow a slightly looser tolerance.
    assert jnp.allclose(out, ref, atol=2e-2, rtol=2e-2), f"max abs err vs reference: {max_err}"

    print("KERNEL_OK")
</pallas_src>

<mosaic_0001>
module attributes {stable_mosaic.version = 11 : i64} {
  func.func @_gru_model_kernel(%arg0: memref<64x1xi32, #tpu.memory_space<vmem>>, %arg1: memref<32x128xbf16, #tpu.memory_space<vmem>>, %arg2: memref<128x384xbf16, #tpu.memory_space<vmem>>, %arg3: memref<128x384xbf16, #tpu.memory_space<vmem>>, %arg4: memref<1x384xf32, #tpu.memory_space<vmem>>, %arg5: memref<1x128xf32, #tpu.memory_space<vmem>>, %arg6: memref<128x384xbf16, #tpu.memory_space<vmem>>, %arg7: memref<128x384xbf16, #tpu.memory_space<vmem>>, %arg8: memref<1x384xf32, #tpu.memory_space<vmem>>, %arg9: memref<1x128xf32, #tpu.memory_space<vmem>>, %arg10: memref<128x128xbf16, #tpu.memory_space<vmem>>, %arg11: memref<1x128xf32, #tpu.memory_space<vmem>>, %arg12: memref<8x128xf32, #tpu.memory_space<vmem>>, %arg13: memref<8x8x384xf32, #tpu.memory_space<vmem>>, %arg14: memref<8x8x128xf32, #tpu.memory_space<vmem>>) attributes {dimension_semantics = [], scalar_prefetch = 0 : i64, scratch_operands = 2 : i64, tpu.core_type = #tpu.core_type<tc>} {
    %c0 = arith.constant 0 : index
    %c0_0 = arith.constant 0 : index
    %0 = vector.load %arg0[%c0, %c0_0] : memref<64x1xi32, #tpu.memory_space<vmem>>, vector<64x1xi32>
    %1 = tpu.iota {dimensions = array<i32: 1>} : vector<64x32xi32>
    %2 = vector.broadcast %0 : vector<64x1xi32> to vector<64x32xi32>
    %3 = arith.cmpi eq, %2, %1 : vector<64x32xi32>
    %cst = arith.constant 1.000000e+00 : f32
    %cst_1 = arith.constant 0.000000e+00 : f32
    %4 = vector.broadcast %cst : f32 to vector<64x32xf32>
    %5 = vector.broadcast %cst_1 : f32 to vector<64x32xf32>
    %6 = arith.select %3, %4, %5 : vector<64x32xi1>, vector<64x32xf32>
    %7 = arith.truncf %6 : vector<64x32xf32> to vector<64x32xbf16>
    %c0_2 = arith.constant 0 : index
    %c0_3 = arith.constant 0 : index
    %8 = vector.load %arg1[%c0_2, %c0_3] : memref<32x128xbf16, #tpu.memory_space<vmem>>, vector<32x128xbf16>
    %cst_4 = arith.constant dense<0.000000e+00> : vector<64x128xf32>
    %9 = tpu.matmul %7, %8, %cst_4 {dimension_numbers = #tpu.dot_dimension_numbers<[1], [0], [0], [1], [0, 0, 1, 1], [], []>} : vector<64x32xbf16>, vector<32x128xbf16>, vector<64x128xf32> -> vector<64x128xf32>
    %c0_5 = arith.constant 0 : index
    %c0_6 = arith.constant 0 : index
    %10 = vector.load %arg2[%c0_5, %c0_6] : memref<128x384xbf16, #tpu.memory_space<vmem>>, vector<128x384xbf16>
    %c0_7 = arith.constant 0 : index
    %c0_8 = arith.constant 0 : index
    %11 = vector.load %arg3[%c0_7, %c0_8] : memref<128x384xbf16, #tpu.memory_space<vmem>>, vector<128x384xbf16>
    %c0_9 = arith.constant 0 : index
    %c0_10 = arith.constant 0 : index
    %12 = vector.load %arg4[%c0_9, %c0_10] : memref<1x384xf32, #tpu.memory_space<vmem>>, vector<1x384xf32>
    %c0_11 = arith.constant 0 : index
    %c0_12 = arith.constant 0 : index
    %13 = vector.load %arg5[%c0_11, %c0_12] : memref<1x128xf32, #tpu.memory_space<vmem>>, vector<1x128xf32>
    %14 = arith.truncf %9 : vector<64x128xf32> to vector<64x128xbf16>
    %cst_13 = arith.constant dense<0.000000e+00> : vector<64x384xf32>
    %15 = tpu.matmul %14, %10, %cst_13 {dimension_numbers = #tpu.dot_dimension_numbers<[1], [0], [0], [1], [0, 0, 1, 1], [], []>} : vector<64x128xbf16>, vector<128x384xbf16>, vector<64x384xf32> -> vector<64x384xf32>
    %16 = vector.broadcast %12 : vector<1x384xf32> to vector<64x384xf32>
    %17 = arith.addf %15, %16 : vector<64x384xf32>
    %18 = vector.shape_cast %17 : vector<64x384xf32> to vector<8x8x384xf32>
    %c0_14 = arith.constant 0 : index
    %c0_15 = arith.constant 0 : index
    %c0_16 = arith.constant 0 : index
    %19 = vector.load %arg13[%c0_14, %c0_15, %c0_16] : memref<8x8x384xf32, #tpu.memory_space<vmem>>, vector<8x8x384xf32>
    tpu.vector_store %arg13[%c0_14, %c0_15, %c0_16], %18 {strides = array<i32>} : memref<8x8x384xf32, #tpu.memory_space<vmem>>, vector<8x8x384xf32>,
    %20 = vector.shape_cast %13 : vector<1x128xf32> to vector<1x128xf32>
    %21 = vector.broadcast %20 : vector<1x128xf32> to vector<8x128xf32>
    %cst_17 = arith.constant 0.000000e+00 : f32
    %22 = vector.broadcast %cst_17 : f32 to vector<8x128xf32>
    %c0_i32 = arith.constant 0 : i32
    %23 = arith.index_cast %c0_i32 : i32 to index
    %c0_18 = arith.constant 0 : index
    %c0_19 = arith.constant 0 : index
    %24 = vector.load %arg13[%23, %c0_18, %c0_19] : memref<8x8x384xf32, #tpu.memory_space<vmem>>, vector<1x8x384xf32>
    %25 = vector.shape_cast %24 : vector<1x8x384xf32> to vector<8x384xf32>
    %26 = arith.truncf %22 : vector<8x128xf32> to vector<8x128xbf16>
    %cst_20 = arith.constant dense<0.000000e+00> : vector<8x384xf32>
    %27 = tpu.matmul %26, %11, %cst_20 {dimension_numbers = #tpu.dot_dimension_numbers<[1], [0], [0], [1], [0, 0, 1, 1], [], []>} : vector<8x128xbf16>, vector<128x384xbf16>, vector<8x384xf32> -> vector<8x384xf32>
    %28 = vector.extract_strided_slice %25 {offsets = [0, 0], sizes = [8, 128], strides = [1, 1]} : vector<8x384xf32> to vector<8x128xf32>
    %29 = vector.extract_strided_slice %27 {offsets = [0, 0], sizes = [8, 128], strides = [1, 1]} : vector<8x384xf32> to vector<8x128xf32>
    %30 = arith.addf %28, %29 : vector<8x128xf32>
    %31 = arith.negf %30 : vector<8x128xf32>
    %32 = math.exp %31 : vector<8x128xf32>
    %cst_21 = arith.constant 1.000000e+00 : f32
    %33 = vector.broadcast %cst_21 : f32 to vector<8x128xf32>
    %34 = arith.addf %33, %32 : vector<8x128xf32>
    %35 = arith.divf %33, %34 : vector<8x128xf32>
    %36 = vector.extract_strided_slice %25 {offsets = [0, 128], sizes = [8, 128], strides = [1, 1]} : vector<8x384xf32> to vector<8x128xf32>
    %37 = vector.extract_strided_slice %27 {offsets = [0, 128], sizes = [8, 128], strides = [1, 1]} : vector<8x384xf32> to vector<8x128xf32>
    %38 = arith.addf %36, %37 : vector<8x128xf32>
    %39 = arith.negf %38 : vector<8x128xf32>
    %40 = math.exp %39 : vector<8x128xf32>
    %cst_22 = arith.constant 1.000000e+00 : f32
    %41 = vector.broadcast %cst_22 : f32 to vector<8x128xf32>
    %42 = arith.addf %41, %40 : vector<8x128xf32>
    %43 = arith.divf %41, %42 : vector<8x128xf32>
    %44 = vector.extract_strided_slice %25 {offsets = [0, 256], sizes = [8, 128], strides = [1, 1]} : vector<8x384xf32> to vector<8x128xf32>
    %45 = vector.extract_strided_slice %27 {offsets = [0, 256], sizes = [8, 128], strides = [1, 1]} : vector<8x384xf32> to vector<8x128xf32>
    %46 = arith.addf %45, %21 : vector<8x128xf32>
    %47 = arith.mulf %35, %46 : vector<8x128xf32>
    %48 = arith.addf %44, %47 : vector<8x128xf32>
    %49 = math.tanh %48 : vector<8x128xf32>
    %cst_23 = arith.constant 1.000000e+00 : f32
    %50 = vector.broadcast %cst_23 : f32 to vector<8x128xf32>
    %51 = arith.subf %50, %43 : vector<8x128xf32>
    %52 = arith.mulf %51, %49 : vector<8x128xf32>
    %53 = arith.mulf %43, %22 : vector<8x128xf32>
    %54 = arith.addf %52, %53 : vector<8x128xf32>
    %55 = arith.index_cast %c0_i32 : i32 to index
    %c0_24 = arith.constant 0 : index
    %c0_25 = arith.constant 0 : index
    %56 = vector.load %arg14[%55, %c0_24, %c0_25] : memref<8x8x128xf32, #tpu.memory_space<vmem>>, vector<1x8x128xf32>
    %57 = vector.shape_cast %56 : vector<1x8x128xf32> to vector<8x128xf32>
    %58 = vector.shape_cast %54 : vector<8x128xf32> to vector<1x8x128xf32>
    tpu.vector_store %arg14[%55, %c0_24, %c0_25], %58 {strides = array<i32>} : memref<8x8x128xf32, #tpu.memory_space<vmem>>, vector<1x8x128xf32>,
    %c1_i32 = arith.constant 1 : i32
    %59 = arith.index_cast %c1_i32 : i32 to index
    %c0_26 = arith.constant 0 : index
    %c0_27 = arith.constant 0 : index
    %60 = vector.load %arg13[%59, %c0_26, %c0_27] : memref<8x8x384xf32, #tpu.memory_space<vmem>>, vector<1x8x384xf32>
    %61 = vector.shape_cast %60 : vector<1x8x384xf32> to vector<8x384xf32>
    %62 = arith.truncf %54 : vector<8x128xf32> to vector<8x128xbf16>
    %cst_28 = arith.constant dense<0.000000e+00> : vector<8x384xf32>
    %63 = tpu.matmul %62, %11, %cst_28 {dimension_numbers = #tpu.dot_dimension_numbers<[1], [0], [0], [1], [0, 0, 1, 1], [], []>} : vector<8x128xbf16>, vector<128x384xbf16>, vector<8x384xf32> -> vector<8x384xf32>
    %64 = vector.extract_strided_slice %61 {offsets = [0, 0], sizes = [8, 128], strides = [1, 1]} : vector<8x384xf32> to vector<8x128xf32>
    %65 = vector.extract_strided_slice %63 {offsets = [0, 0], sizes = [8, 128], strides = [1, 1]} : vector<8x384xf32> to vector<8x128xf32>
    %66 = arith.addf %64, %65 : vector<8x128xf32>
    %67 = arith.negf %66 : vector<8x128xf32>
    %68 = math.exp %67 : vector<8x128xf32>
    %cst_29 = arith.constant 1.000000e+00 : f32
    %69 = vector.broadcast %cst_29 : f32 to vector<8x128xf32>
    %70 = arith.addf %69, %68 : vector<8x128xf32>
    %71 = arith.divf %69, %70 : vector<8x128xf32>
    %72 = vector.extract_strided_slice %61 {offsets = [0, 128], sizes = [8, 128], strides = [1, 1]} : vector<8x384xf32> to vector<8x128xf32>
    %73 = vector.extract_strided_slice %63 {offsets = [0, 128], sizes = [8, 128], strides = [1, 1]} : vector<8x384xf32> to vector<8x128xf32>
    %74 = arith.addf %72, %73 : vector<8x128xf32>
    %75 = arith.negf %74 : vector<8x128xf32>
    %76 = math.exp %75 : vector<8x128xf32>
    %cst_30 = arith.constant 1.000000e+00 : f32
    %77 = vector.broadcast %cst_30 : f32 to vector<8x128xf32>
    %78 = arith.addf %77, %76 : vector<8x128xf32>
    %79 = arith.divf %77, %78 : vector<8x128xf32>
    %80 = vector.extract_strided_slice %61 {offsets = [0, 256], sizes = [8, 128], strides = [1, 1]} : vector<8x384xf32> to vector<8x128xf32>
    %81 = vector.extract_strided_slice %63 {offsets = [0, 256], sizes = [8, 128], strides = [1, 1]} : vector<8x384xf32> to vector<8x128xf32>
    %82 = arith.addf %81, %21 : vector<8x128xf32>
    %83 = arith.mulf %71, %82 : vector<8x128xf32>
    %84 = arith.addf %80, %83 : vector<8x128xf32>
    %85 = math.tanh %84 : vector<8x128xf32>
    %cst_31 = arith.constant 1.000000e+00 : f32
    %86 = vector.broadcast %cst_31 : f32 to vector<8x128xf32>
    %87 = arith.subf %86, %79 : vector<8x128xf32>
    %88 = arith.mulf %87, %85 : vector<8x128xf32>
    %89 = arith.mulf %79, %54 : vector<8x128xf32>
    %90 = arith.addf %88, %89 : vector<8x128xf32>
    %91 = arith.index_cast %c1_i32 : i32 to index
    %c0_32 = arith.constant 0 : index
    %c0_33 = arith.constant 0 : index
    %92 = vector.load %arg14[%91, %c0_32, %c0_33] : memref<8x8x128xf32, #tpu.memory_space<vmem>>, vector<1x8x128xf32>
    %93 = vector.shape_cast %92 : vector<1x8x128xf32> to vector<8x128xf32>
    %94 = vector.shape_cast %90 : vector<8x128xf32> to vector<1x8x128xf32>
    tpu.vector_store %arg14[%91, %c0_32, %c0_33], %94 {strides = array<i32>} : memref<8x8x128xf32, #tpu.memory_space<vmem>>, vector<1x8x128xf32>,
    %c2_i32 = arith.constant 2 : i32
    %95 = arith.index_cast %c2_i32 : i32 to index
    %c0_34 = arith.constant 0 : index
    %c0_35 = arith.constant 0 : index
    %96 = vector.load %arg13[%95, %c0_34, %c0_35] : memref<8x8x384xf32, #tpu.memory_space<vmem>>, vector<1x8x384xf32>
    %97 = vector.shape_cast %96 : vector<1x8x384xf32> to vector<8x384xf32>
    %98 = arith.truncf %90 : vector<8x128xf32> to vector<8x128xbf16>
    %cst_36 = arith.constant dense<0.000000e+00> : vector<8x384xf32>
    %99 = tpu.matmul %98, %11, %cst_36 {dimension_numbers = #tpu.dot_dimension_numbers<[1], [0], [0], [1], [0, 0, 1, 1], [], []>} : vector<8x128xbf16>, vector<128x384xbf16>, vector<8x384xf32> -> vector<8x384xf32>
    %100 = vector.extract_strided_slice %97 {offsets = [0, 0], sizes = [8, 128], strides = [1, 1]} : vector<8x384xf32> to vector<8x128xf32>
    %101 = vector.extract_strided_slice %99 {offsets = [0, 0], sizes = [8, 128], strides = [1, 1]} : vector<8x384xf32> to vector<8x128xf32>
    %102 = arith.addf %100, %101 : vector<8x128xf32>
    %103 = arith.negf %102 : vector<8x128xf32>
    %104 = math.exp %103 : vector<8x128xf32>
    %cst_37 = arith.constant 1.000000e+00 : f32
    %105 = vector.broadcast %cst_37 : f32 to vector<8x128xf32>
    %106 = arith.addf %105, %104 : vector<8x128xf32>
    %107 = arith.divf %105, %106 : vector<8x128xf32>
    %108 = vector.extract_strided_slice %97 {offsets = [0, 128], sizes = [8, 128], strides = [1, 1]} : vector<8x384xf32> to vector<8x128xf32>
    %109 = vector.extract_strided_slice %99 {offsets = [0, 128], sizes = [8, 128], strides = [1, 1]} : vector<8x384xf32> to vector<8x128xf32>
    %110 = arith.addf %108, %109 : vector<8x128xf32>
    %111 = arith.negf %110 : vector<8x128xf32>
    %112 = math.exp %111 : vector<8x128xf32>
    %cst_38 = arith.constant 1.000000e+00 : f32
    %113 = vector.broadcast %cst_38 : f32 to vector<8x128xf32>
    %114 = arith.addf %113, %112 : vector<8x128xf32>
    %115 = arith.divf %113, %114 : vector<8x128xf32>
    %116 = vector.extract_strided_slice %97 {offsets = [0, 256], sizes = [8, 128], strides = [1, 1]} : vector<8x384xf32> to vector<8x128xf32>
    %117 = vector.extract_strided_slice %99 {offsets = [0, 256], sizes = [8, 128], strides = [1, 1]} : vector<8x384xf32> to vector<8x128xf32>
    %118 = arith.addf %117, %21 : vector<8x128xf32>
    %119 = arith.mulf %107, %118 : vector<8x128xf32>
    %120 = arith.addf %116, %119 : vector<8x128xf32>
    %121 = math.tanh %120 : vector<8x128xf32>
    %cst_39 = arith.constant 1.000000e+00 : f32
    %122 = vector.broadcast %cst_39 : f32 to vector<8x128xf32>
    %123 = arith.subf %122, %115 : vector<8x128xf32>
    %124 = arith.mulf %123, %121 : vector<8x128xf32>
    %125 = arith.mulf %115, %90 : vector<8x128xf32>
    %126 = arith.addf %124, %125 : vector<8x128xf32>
    %127 = arith.index_cast %c2_i32 : i32 to index
    %c0_40 = arith.constant 0 : index
    %c0_41 = arith.constant 0 : index
    %128 = vector.load %arg14[%127, %c0_40, %c0_41] : memref<8x8x128xf32, #tpu.memory_space<vmem>>, vector<1x8x128xf32>
    %129 = vector.shape_cast %128 : vector<1x8x128xf32> to vector<8x128xf32>
    %130 = vector.shape_cast %126 : vector<8x128xf32> to vector<1x8x128xf32>
    tpu.vector_store %arg14[%127, %c0_40, %c0_41], %130 {strides = array<i32>} : memref<8x8x128xf32, #tpu.memory_space<vmem>>, vector<1x8x128xf32>,
    %c3_i32 = arith.constant 3 : i32
    %131 = arith.index_cast %c3_i32 : i32 to index
    %c0_42 = arith.constant 0 : index
    %c0_43 = arith.constant 0 : index
    %132 = vector.load %arg13[%131, %c0_42, %c0_43] : memref<8x8x384xf32, #tpu.memory_space<vmem>>, vector<1x8x384xf32>
    %133 = vector.shape_cast %132 : vector<1x8x384xf32> to vector<8x384xf32>
    %134 = arith.truncf %126 : vector<8x128xf32> to vector<8x128xbf16>
    %cst_44 = arith.constant dense<0.000000e+00> : vector<8x384xf32>
    %135 = tpu.matmul %134, %11, %cst_44 {dimension_numbers = #tpu.dot_dimension_numbers<[1], [0], [0], [1], [0, 0, 1, 1], [], []>} : vector<8x128xbf16>, vector<128x384xbf16>, vector<8x384xf32> -> vector<8x384xf32>
    %136 = vector.extract_strided_slice %133 {offsets = [0, 0], sizes = [8, 128], strides = [1, 1]} : vector<8x384xf32> to vector<8x128xf32>
    %137 = vector.extract_strided_slice %135 {offsets = [0, 0], sizes = [8, 128], strides = [1, 1]} : vector<8x384xf32> to vector<8x128xf32>
    %138 = arith.addf %136, %137 : vector<8x128xf32>
    %139 = arith.negf %138 : vector<8x128xf32>
    %140 = math.exp %139 : vector<8x128xf32>
    %cst_45 = arith.constant 1.000000e+00 : f32
    %141 = vector.broadcast %cst_45 : f32 to vector<8x128xf32>
    %142 = arith.addf %141, %140 : vector<8x128xf32>
    %143 = arith.divf %141, %142 : vector<8x128xf32>
    %144 = vector.extract_strided_slice %133 {offsets = [0, 128], sizes = [8, 128], strides = [1, 1]} : vector<8x384xf32> to vector<8x128xf32>
    %145 = vector.extract_strided_slice %135 {offsets = [0, 128], sizes = [8, 128], strides = [1, 1]} : vector<8x384xf32> to vector<8x128xf32>
    %146 = arith.addf %144, %145 : vector<8x128xf32>
    %147 = arith.negf %146 : vector<8x128xf32>
    %148 = math.exp %147 : vector<8x128xf32>
    %cst_46 = arith.constant 1.000000e+00 : f32
    %149 = vector.broadcast %cst_46 : f32 to vector<8x128xf32>
    %150 = arith.addf %149, %148 : vector<8x128xf32>
    %151 = arith.divf %149, %150 : vector<8x128xf32>
    %152 = vector.extract_strided_slice %133 {offsets = [0, 256], sizes = [8, 128], strides = [1, 1]} : vector<8x384xf32> to vector<8x128xf32>
    %153 = vector.extract_strided_slice %135 {offsets = [0, 256], sizes = [8, 128], strides = [1, 1]} : vector<8x384xf32> to vector<8x128xf32>
    %154 = arith.addf %153, %21 : vector<8x128xf32>
    %155 = arith.mulf %143, %154 : vector<8x128xf32>
    %156 = arith.addf %152, %155 : vector<8x128xf32>
    %157 = math.tanh %156 : vector<8x128xf32>
    %cst_47 = arith.constant 1.000000e+00 : f32
    %158 = vector.broadcast %cst_47 : f32 to vector<8x128xf32>
    %159 = arith.subf %158, %151 : vector<8x128xf32>
    %160 = arith.mulf %159, %157 : vector<8x128xf32>
    %161 = arith.mulf %151, %126 : vector<8x128xf32>
    %162 = arith.addf %160, %161 : vector<8x128xf32>
    %163 = arith.index_cast %c3_i32 : i32 to index
    %c0_48 = arith.constant 0 : index
    %c0_49 = arith.constant 0 : index
    %164 = vector.load %arg14[%163, %c0_48, %c0_49] : memref<8x8x128xf32, #tpu.memory_space<vmem>>, vector<1x8x128xf32>
    %165 = vector.shape_cast %164 : vector<1x8x128xf32> to vector<8x128xf32>
    %166 = vector.shape_cast %162 : vector<8x128xf32> to vector<1x8x128xf32>
    tpu.vector_store %arg14[%163, %c0_48, %c0_49], %166 {strides = array<i32>} : memref<8x8x128xf32, #tpu.memory_space<vmem>>, vector<1x8x128xf32>,
    %c4_i32 = arith.constant 4 : i32
    %167 = arith.index_cast %c4_i32 : i32 to index
    %c0_50 = arith.constant 0 : index
    %c0_51 = arith.constant 0 : index
    %168 = vector.load %arg13[%167, %c0_50, %c0_51] : memref<8x8x384xf32, #tpu.memory_space<vmem>>, vector<1x8x384xf32>
    %169 = vector.shape_cast %168 : vector<1x8x384xf32> to vector<8x384xf32>
    %170 = arith.truncf %162 : vector<8x128xf32> to vector<8x128xbf16>
    %cst_52 = arith.constant dense<0.000000e+00> : vector<8x384xf32>
    %171 = tpu.matmul %170, %11, %cst_52 {dimension_numbers = #tpu.dot_dimension_numbers<[1], [0], [0], [1], [0, 0, 1, 1], [], []>} : vector<8x128xbf16>, vector<128x384xbf16>, vector<8x384xf32> -> vector<8x384xf32>
    %172 = vector.extract_strided_slice %169 {offsets = [0, 0], sizes = [8, 128], strides = [1, 1]} : vector<8x384xf32> to vector<8x128xf32>
    %173 = vector.extract_strided_slice %171 {offsets = [0, 0], sizes = [8, 128], strides = [1, 1]} : vector<8x384xf32> to vector<8x128xf32>
    %174 = arith.addf %172, %173 : vector<8x128xf32>
    %175 = arith.negf %174 : vector<8x128xf32>
    %176 = math.exp %175 : vector<8x128xf32>
    %cst_53 = arith.constant 1.000000e+00 : f32
    %177 = vector.broadcast %cst_53 : f32 to vector<8x128xf32>
    %178 = arith.addf %177, %176 : vector<8x128xf32>
    %179 = arith.divf %177, %178 : vector<8x128xf32>
    %180 = vector.extract_strided_slice %169 {offsets = [0, 128], sizes = [8, 128], strides = [1, 1]} : vector<8x384xf32> to vector<8x128xf32>
    %181 = vector.extract_strided_slice %171 {offsets = [0, 128], sizes = [8, 128], strides = [1, 1]} : vector<8x384xf32> to vector<8x128xf32>
    %182 = arith.addf %180, %181 : vector<8x128xf32>
    %183 = arith.negf %182 : vector<8x128xf32>
    %184 = math.exp %183 : vector<8x128xf32>
    %cst_54 = arith.constant 1.000000e+00 : f32
    %185 = vector.broadcast %cst_54 : f32 to vector<8x128xf32>
    %186 = arith.addf %185, %184 : vector<8x128xf32>
    %187 = arith.divf %185, %186 : vector<8x128xf32>
    %188 = vector.extract_strided_slice %169 {offsets = [0, 256], sizes = [8, 128], strides = [1, 1]} : vector<8x384xf32> to vector<8x128xf32>
    %189 = vector.extract_strided_slice %171 {offsets = [0, 256], sizes = [8, 128], strides = [1, 1]} : vector<8x384xf32> to vector<8x128xf32>
    %190 = arith.addf %189, %21 : vector<8x128xf32>
    %191 = arith.mulf %179, %190 : vector<8x128xf32>
    %192 = arith.addf %188, %191 : vector<8x128xf32>
    %193 = math.tanh %192 : vector<8x128xf32>
    %cst_55 = arith.constant 1.000000e+00 : f32
    %194 = vector.broadcast %cst_55 : f32 to vector<8x128xf32>
    %195 = arith.subf %194, %187 : vector<8x128xf32>
    %196 = arith.mulf %195, %193 : vector<8x128xf32>
    %197 = arith.mulf %187, %162 : vector<8x128xf32>
    %198 = arith.addf %196, %197 : vector<8x128xf32>
    %199 = arith.index_cast %c4_i32 : i32 to index
    %c0_56 = arith.constant 0 : index
    %c0_57 = arith.constant 0 : index
    %200 = vector.load %arg14[%199, %c0_56, %c0_57] : memref<8x8x128xf32, #tpu.memory_space<vmem>>, vector<1x8x128xf32>
    %201 = vector.shape_cast %200 : vector<1x8x128xf32> to vector<8x128xf32>
    %202 = vector.shape_cast %198 : vector<8x128xf32> to vector<1x8x128xf32>
    tpu.vector_store %arg14[%199, %c0_56, %c0_57], %202 {strides = array<i32>} : memref<8x8x128xf32, #tpu.memory_space<vmem>>, vector<1x8x128xf32>,
    %c5_i32 = arith.constant 5 : i32
    %203 = arith.index_cast %c5_i32 : i32 to index
    %c0_58 = arith.constant 0 : index
    %c0_59 = arith.constant 0 : index
    %204 = vector.load %arg13[%203, %c0_58, %c0_59] : memref<8x8x384xf32, #tpu.memory_space<vmem>>, vector<1x8x384xf32>
    %205 = vector.shape_cast %204 : vector<1x8x384xf32> to vector<8x384xf32>
    %206 = arith.truncf %198 : vector<8x128xf32> to vector<8x128xbf16>
    %cst_60 = arith.constant dense<0.000000e+00> : vector<8x384xf32>
    %207 = tpu.matmul %206, %11, %cst_60 {dimension_numbers = #tpu.dot_dimension_numbers<[1], [0], [0], [1], [0, 0, 1, 1], [], []>} : vector<8x128xbf16>, vector<128x384xbf16>, vector<8x384xf32> -> vector<8x384xf32>
    %208 = vector.extract_strided_slice %205 {offsets = [0, 0], sizes = [8, 128], strides = [1, 1]} : vector<8x384xf32> to vector<8x128xf32>
    %209 = vector.extract_strided_slice %207 {offsets = [0, 0], sizes = [8, 128], strides = [1, 1]} : vector<8x384xf32> to vector<8x128xf32>
    %210 = arith.addf %208, %209 : vector<8x128xf32>
    %211 = arith.negf %210 : vector<8x128xf32>
    %212 = math.exp %211 : vector<8x128xf32>
    %cst_61 = arith.constant 1.000000e+00 : f32
    %213 = vector.broadcast %cst_61 : f32 to vector<8x128xf32>
    %214 = arith.addf %213, %212 : vector<8x128xf32>
    %215 = arith.divf %213, %214 : vector<8x128xf32>
    %216 = vector.extract_strided_slice %205 {offsets = [0, 128], sizes = [8, 128], strides = [1, 1]} : vector<8x384xf32> to vector<8x128xf32>
    %217 = vector.extract_strided_slice %207 {offsets = [0, 128], sizes = [8, 128], strides = [1, 1]} : vector<8x384xf32> to vector<8x128xf32>
    %218 = arith.addf %216, %217 : vector<8x128xf32>
    %219 = arith.negf %218 : vector<8x128xf32>
    %220 = math.exp %219 : vector<8x128xf32>
    %cst_62 = arith.constant 1.000000e+00 : f32
    %221 = vector.broadcast %cst_62 : f32 to vector<8x128xf32>
    %222 = arith.addf %221, %220 : vector<8x128xf32>
    %223 = arith.divf %221, %222 : vector<8x128xf32>
    %224 = vector.extract_strided_slice %205 {offsets = [0, 256], sizes = [8, 128], strides = [1, 1]} : vector<8x384xf32> to vector<8x128xf32>
    %225 = vector.extract_strided_slice %207 {offsets = [0, 256], sizes = [8, 128], strides = [1, 1]} : vector<8x384xf32> to vector<8x128xf32>
    %226 = arith.addf %225, %21 : vector<8x128xf32>
    %227 = arith.mulf %215, %226 : vector<8x128xf32>
    %228 = arith.addf %224, %227 : vector<8x128xf32>
    %229 = math.tanh %228 : vector<8x128xf32>
    %cst_63 = arith.constant 1.000000e+00 : f32
    %230 = vector.broadcast %cst_63 : f32 to vector<8x128xf32>
    %231 = arith.subf %230, %223 : vector<8x128xf32>
    %232 = arith.mulf %231, %229 : vector<8x128xf32>
    %233 = arith.mulf %223, %198 : vector<8x128xf32>
    %234 = arith.addf %232, %233 : vector<8x128xf32>
    %235 = arith.index_cast %c5_i32 : i32 to index
    %c0_64 = arith.constant 0 : index
    %c0_65 = arith.constant 0 : index
    %236 = vector.load %arg14[%235, %c0_64, %c0_65] : memref<8x8x128xf32, #tpu.memory_space<vmem>>, vector<1x8x128xf32>
    %237 = vector.shape_cast %236 : vector<1x8x128xf32> to vector<8x128xf32>
    %238 = vector.shape_cast %234 : vector<8x128xf32> to vector<1x8x128xf32>
    tpu.vector_store %arg14[%235, %c0_64, %c0_65], %238 {strides = array<i32>} : memref<8x8x128xf32, #tpu.memory_space<vmem>>, vector<1x8x128xf32>,
    %c6_i32 = arith.constant 6 : i32
    %239 = arith.index_cast %c6_i32 : i32 to index
    %c0_66 = arith.constant 0 : index
    %c0_67 = arith.constant 0 : index
    %240 = vector.load %arg13[%239, %c0_66, %c0_67] : memref<8x8x384xf32, #tpu.memory_space<vmem>>, vector<1x8x384xf32>
    %241 = vector.shape_cast %240 : vector<1x8x384xf32> to vector<8x384xf32>
    %242 = arith.truncf %234 : vector<8x128xf32> to vector<8x128xbf16>
    %cst_68 = arith.constant dense<0.000000e+00> : vector<8x384xf32>
    %243 = tpu.matmul %242, %11, %cst_68 {dimension_numbers = #tpu.dot_dimension_numbers<[1], [0], [0], [1], [0, 0, 1, 1], [], []>} : vector<8x128xbf16>, vector<128x384xbf16>, vector<8x384xf32> -> vector<8x384xf32>
    %244 = vector.extract_strided_slice %241 {offsets = [0, 0], sizes = [8, 128], strides = [1, 1]} : vector<8x384xf32> to vector<8x128xf32>
    %245 = vector.extract_strided_slice %243 {offsets = [0, 0], sizes = [8, 128], strides = [1, 1]} : vector<8x384xf32> to vector<8x128xf32>
    %246 = arith.addf %244, %245 : vector<8x128xf32>
    %247 = arith.negf %246 : vector<8x128xf32>
    %248 = math.exp %247 : vector<8x128xf32>
    %cst_69 = arith.constant 1.000000e+00 : f32
    %249 = vector.broadcast %cst_69 : f32 to vector<8x128xf32>
    %250 = arith.addf %249, %248 : vector<8x128xf32>
    %251 = arith.divf %249, %250 : vector<8x128xf32>
    %252 = vector.extract_strided_slice %241 {offsets = [0, 128], sizes = [8, 128], strides = [1, 1]} : vector<8x384xf32> to vector<8x128xf32>
    %253 = vector.extract_strided_slice %243 {offsets = [0, 128], sizes = [8, 128], strides = [1, 1]} : vector<8x384xf32> to vector<8x128xf32>
    %254 = arith.addf %252, %253 : vector<8x128xf32>
    %255 = arith.negf %254 : vector<8x128xf32>
    %256 = math.exp %255 : vector<8x128xf32>
    %cst_70 = arith.constant 1.000000e+00 : f32
    %257 = vector.broadcast %cst_70 : f32 to vector<8x128xf32>
    %258 = arith.addf %257, %256 : vector<8x128xf32>
    %259 = arith.divf %257, %258 : vector<8x128xf32>
    %260 = vector.extract_strided_slice %241 {offsets = [0, 256], sizes = [8, 128], strides = [1, 1]} : vector<8x384xf32> to vector<8x128xf32>
    %261 = vector.extract_strided_slice %243 {offsets = [0, 256], sizes = [8, 128], strides = [1, 1]} : vector<8x384xf32> to vector<8x128xf32>
    %262 = arith.addf %261, %21 : vector<8x128xf32>
    %263 = arith.mulf %251, %262 : vector<8x128xf32>
    %264 = arith.addf %260, %263 : vector<8x128xf32>
    %265 = math.tanh %264 : vector<8x128xf32>
    %cst_71 = arith.constant 1.000000e+00 : f32
    %266 = vector.broadcast %cst_71 : f32 to vector<8x128xf32>
    %267 = arith.subf %266, %259 : vector<8x128xf32>
    %268 = arith.mulf %267, %265 : vector<8x128xf32>
    %269 = arith.mulf %259, %234 : vector<8x128xf32>
    %270 = arith.addf %268, %269 : vector<8x128xf32>
    %271 = arith.index_cast %c6_i32 : i32 to index
    %c0_72 = arith.constant 0 : index
    %c0_73 = arith.constant 0 : index
    %272 = vector.load %arg14[%271, %c0_72, %c0_73] : memref<8x8x128xf32, #tpu.memory_space<vmem>>, vector<1x8x128xf32>
    %273 = vector.shape_cast %272 : vector<1x8x128xf32> to vector<8x128xf32>
    %274 = vector.shape_cast %270 : vector<8x128xf32> to vector<1x8x128xf32>
    tpu.vector_store %arg14[%271, %c0_72, %c0_73], %274 {strides = array<i32>} : memref<8x8x128xf32, #tpu.memory_space<vmem>>, vector<1x8x128xf32>,
    %c7_i32 = arith.constant 7 : i32
    %275 = arith.index_cast %c7_i32 : i32 to index
    %c0_74 = arith.constant 0 : index
    %c0_75 = arith.constant 0 : index
    %276 = vector.load %arg13[%275, %c0_74, %c0_75] : memref<8x8x384xf32, #tpu.memory_space<vmem>>, vector<1x8x384xf32>
    %277 = vector.shape_cast %276 : vector<1x8x384xf32> to vector<8x384xf32>
    %278 = arith.truncf %270 : vector<8x128xf32> to vector<8x128xbf16>
    %cst_76 = arith.constant dense<0.000000e+00> : vector<8x384xf32>
    %279 = tpu.matmul %278, %11, %cst_76 {dimension_numbers = #tpu.dot_dimension_numbers<[1], [0], [0], [1], [0, 0, 1, 1], [], []>} : vector<8x128xbf16>, vector<128x384xbf16>, vector<8x384xf32> -> vector<8x384xf32>
    %280 = vector.extract_strided_slice %277 {offsets = [0, 0], sizes = [8, 128], strides = [1, 1]} : vector<8x384xf32> to vector<8x128xf32>
    %281 = vector.extract_strided_slice %279 {offsets = [0, 0], sizes = [8, 128], strides = [1, 1]} : vector<8x384xf32> to vector<8x128xf32>
    %282 = arith.addf %280, %281 : vector<8x128xf32>
    %283 = arith.negf %282 : vector<8x128xf32>
    %284 = math.exp %283 : vector<8x128xf32>
    %cst_77 = arith.constant 1.000000e+00 : f32
    %285 = vector.broadcast %cst_77 : f32 to vector<8x128xf32>
    %286 = arith.addf %285, %284 : vector<8x128xf32>
    %287 = arith.divf %285, %286 : vector<8x128xf32>
    %288 = vector.extract_strided_slice %277 {offsets = [0, 128], sizes = [8, 128], strides = [1, 1]} : vector<8x384xf32> to vector<8x128xf32>
    %289 = vector.extract_strided_slice %279 {offsets = [0, 128], sizes = [8, 128], strides = [1, 1]} : vector<8x384xf32> to vector<8x128xf32>
    %290 = arith.addf %288, %289 : vector<8x128xf32>
    %291 = arith.negf %290 : vector<8x128xf32>
    %292 = math.exp %291 : vector<8x128xf32>
    %cst_78 = arith.constant 1.000000e+00 : f32
    %293 = vector.broadcast %cst_78 : f32 to vector<8x128xf32>
    %294 = arith.addf %293, %292 : vector<8x128xf32>
    %295 = arith.divf %293, %294 : vector<8x128xf32>
    %296 = vector.extract_strided_slice %277 {offsets = [0, 256], sizes = [8, 128], strides = [1, 1]} : vector<8x384xf32> to vector<8x128xf32>
    %297 = vector.extract_strided_slice %279 {offsets = [0, 256], sizes = [8, 128], strides = [1, 1]} : vector<8x384xf32> to vector<8x128xf32>
    %298 = arith.addf %297, %21 : vector<8x128xf32>
    %299 = arith.mulf %287, %298 : vector<8x128xf32>
    %300 = arith.addf %296, %299 : vector<8x128xf32>
    %301 = math.tanh %300 : vector<8x128xf32>
    %cst_79 = arith.constant 1.000000e+00 : f32
    %302 = vector.broadcast %cst_79 : f32 to vector<8x128xf32>
    %303 = arith.subf %302, %295 : vector<8x128xf32>
    %304 = arith.mulf %303, %301 : vector<8x128xf32>
    %305 = arith.mulf %295, %270 : vector<8x128xf32>
    %306 = arith.addf %304, %305 : vector<8x128xf32>
    %307 = arith.index_cast %c7_i32 : i32 to index
    %c0_80 = arith.constant 0 : index
    %c0_81 = arith.constant 0 : index
    %308 = vector.load %arg14[%307, %c0_80, %c0_81] : memref<8x8x128xf32, #tpu.memory_space<vmem>>, vector<1x8x128xf32>
    %309 = vector.shape_cast %308 : vector<1x8x128xf32> to vector<8x128xf32>
    %310 = vector.shape_cast %306 : vector<8x128xf32> to vector<1x8x128xf32>
    tpu.vector_store %arg14[%307, %c0_80, %c0_81], %310 {strides = array<i32>} : memref<8x8x128xf32, #tpu.memory_space<vmem>>, vector<1x8x128xf32>,
    %c8_i32 = arith.constant 8 : i32
    %c0_82 = arith.constant 0 : index
    %c0_83 = arith.constant 0 : index
    %c0_84 = arith.constant 0 : index
    %311 = vector.load %arg14[%c0_82, %c0_83, %c0_84] : memref<8x8x128xf32, #tpu.memory_space<vmem>>, vector<8x8x128xf32>
    %312 = vector.shape_cast %311 : vector<8x8x128xf32> to vector<64x128xf32>
    %c0_85 = arith.constant 0 : index
    %c0_86 = arith.constant 0 : index
    %313 = vector.load %arg6[%c0_85, %c0_86] : memref<128x384xbf16, #tpu.memory_space<vmem>>, vector<128x384xbf16>
    %c0_87 = arith.constant 0 : index
    %c0_88 = arith.constant 0 : index
    %314 = vector.load %arg7[%c0_87, %c0_88] : memref<128x384xbf16, #tpu.memory_space<vmem>>, vector<128x384xbf16>
    %c0_89 = arith.constant 0 : index
    %c0_90 = arith.constant 0 : index
    %315 = vector.load %arg8[%c0_89, %c0_90] : memref<1x384xf32, #tpu.memory_space<vmem>>, vector<1x384xf32>
    %c0_91 = arith.constant 0 : index
    %c0_92 = arith.constant 0 : index
    %316 = vector.load %arg9[%c0_91, %c0_92] : memref<1x128xf32, #tpu.memory_space<vmem>>, vector<1x128xf32>
    %317 = arith.truncf %312 : vector<64x128xf32> to vector<64x128xbf16>
    %cst_93 = arith.constant dense<0.000000e+00> : vector<64x384xf32>
    %318 = tpu.matmul %317, %313, %cst_93 {dimension_numbers = #tpu.dot_dimension_numbers<[1], [0], [0], [1], [0, 0, 1, 1], [], []>} : vector<64x128xbf16>, vector<128x384xbf16>, vector<64x384xf32> -> vector<64x384xf32>
    %319 = vector.broadcast %315 : vector<1x384xf32> to vector<64x384xf32>
    %320 = arith.addf %318, %319 : vector<64x384xf32>
    %321 = vector.shape_cast %320 : vector<64x384xf32> to vector<8x8x384xf32>
    %c0_94 = arith.constant 0 : index
    %c0_95 = arith.constant 0 : index
    %c0_96 = arith.constant 0 : index
    %322 = vector.load %arg13[%c0_94, %c0_95, %c0_96] : memref<8x8x384xf32, #tpu.memory_space<vmem>>, vector<8x8x384xf32>
    tpu.vector_store %arg13[%c0_94, %c0_95, %c0_96], %321 {strides = array<i32>} : memref<8x8x384xf32, #tpu.memory_space<vmem>>, vector<8x8x384xf32>,
    %323 = vector.shape_cast %316 : vector<1x128xf32> to vector<1x128xf32>
    %324 = vector.broadcast %323 : vector<1x128xf32> to vector<8x128xf32>
    %cst_97 = arith.constant 0.000000e+00 : f32
    %325 = vector.broadcast %cst_97 : f32 to vector<8x128xf32>
    %c0_i32_98 = arith.constant 0 : i32
    %326 = arith.index_cast %c0_i32_98 : i32 to index
    %c0_99 = arith.constant 0 : index
    %c0_100 = arith.constant 0 : index
    %327 = vector.load %arg13[%326, %c0_99, %c0_100] : memref<8x8x384xf32, #tpu.memory_space<vmem>>, vector<1x8x384xf32>
    %328 = vector.shape_cast %327 : vector<1x8x384xf32> to vector<8x384xf32>
    %329 = arith.truncf %325 : vector<8x128xf32> to vector<8x128xbf16>
    %cst_101 = arith.constant dense<0.000000e+00> : vector<8x384xf32>
    %330 = tpu.matmul %329, %314, %cst_101 {dimension_numbers = #tpu.dot_dimension_numbers<[1], [0], [0], [1], [0, 0, 1, 1], [], []>} : vector<8x128xbf16>, vector<128x384xbf16>, vector<8x384xf32> -> vector<8x384xf32>
    %331 = vector.extract_strided_slice %328 {offsets = [0, 0], sizes = [8, 128], strides = [1, 1]} : vector<8x384xf32> to vector<8x128xf32>
    %332 = vector.extract_strided_slice %330 {offsets = [0, 0], sizes = [8, 128], strides = [1, 1]} : vector<8x384xf32> to vector<8x128xf32>
    %333 = arith.addf %331, %332 : vector<8x128xf32>
    %334 = arith.negf %333 : vector<8x128xf32>
    %335 = math.exp %334 : vector<8x128xf32>
    %cst_102 = arith.constant 1.000000e+00 : f32
    %336 = vector.broadcast %cst_102 : f32 to vector<8x128xf32>
    %337 = arith.addf %336, %335 : vector<8x128xf32>
    %338 = arith.divf %336, %337 : vector<8x128xf32>
    %339 = vector.extract_strided_slice %328 {offsets = [0, 128], sizes = [8, 128], strides = [1, 1]} : vector<8x384xf32> to vector<8x128xf32>
    %340 = vector.extract_strided_slice %330 {offsets = [0, 128], sizes = [8, 128], strides = [1, 1]} : vector<8x384xf32> to vector<8x128xf32>
    %341 = arith.addf %339, %340 : vector<8x128xf32>
    %342 = arith.negf %341 : vector<8x128xf32>
    %343 = math.exp %342 : vector<8x128xf32>
    %cst_103 = arith.constant 1.000000e+00 : f32
    %344 = vector.broadcast %cst_103 : f32 to vector<8x128xf32>
    %345 = arith.addf %344, %343 : vector<8x128xf32>
    %346 = arith.divf %344, %345 : vector<8x128xf32>
    %347 = vector.extract_strided_slice %328 {offsets = [0, 256], sizes = [8, 128], strides = [1, 1]} : vector<8x384xf32> to vector<8x128xf32>
    %348 = vector.extract_strided_slice %330 {offsets = [0, 256], sizes = [8, 128], strides = [1, 1]} : vector<8x384xf32> to vector<8x128xf32>
    %349 = arith.addf %348, %324 : vector<8x128xf32>
    %350 = arith.mulf %338, %349 : vector<8x128xf32>
    %351 = arith.addf %347, %350 : vector<8x128xf32>
    %352 = math.tanh %351 : vector<8x128xf32>
    %cst_104 = arith.constant 1.000000e+00 : f32
    %353 = vector.broadcast %cst_104 : f32 to vector<8x128xf32>
    %354 = arith.subf %353, %346 : vector<8x128xf32>
    %355 = arith.mulf %354, %352 : vector<8x128xf32>
    %356 = arith.mulf %346, %325 : vector<8x128xf32>
    %357 = arith.addf %355, %356 : vector<8x128xf32>
    %c1_i32_105 = arith.constant 1 : i32
    %358 = arith.index_cast %c1_i32_105 : i32 to index
    %c0_106 = arith.constant 0 : index
    %c0_107 = arith.constant 0 : index
    %359 = vector.load %arg13[%358, %c0_106, %c0_107] : memref<8x8x384xf32, #tpu.memory_space<vmem>>, vector<1x8x384xf32>
    %360 = vector.shape_cast %359 : vector<1x8x384xf32> to vector<8x384xf32>
    %361 = arith.truncf %357 : vector<8x128xf32> to vector<8x128xbf16>
    %cst_108 = arith.constant dense<0.000000e+00> : vector<8x384xf32>
    %362 = tpu.matmul %361, %314, %cst_108 {dimension_numbers = #tpu.dot_dimension_numbers<[1], [0], [0], [1], [0, 0, 1, 1], [], []>} : vector<8x128xbf16>, vector<128x384xbf16>, vector<8x384xf32> -> vector<8x384xf32>
    %363 = vector.extract_strided_slice %360 {offsets = [0, 0], sizes = [8, 128], strides = [1, 1]} : vector<8x384xf32> to vector<8x128xf32>
    %364 = vector.extract_strided_slice %362 {offsets = [0, 0], sizes = [8, 128], strides = [1, 1]} : vector<8x384xf32> to vector<8x128xf32>
    %365 = arith.addf %363, %364 : vector<8x128xf32>
    %366 = arith.negf %365 : vector<8x128xf32>
    %367 = math.exp %366 : vector<8x128xf32>
    %cst_109 = arith.constant 1.000000e+00 : f32
    %368 = vector.broadcast %cst_109 : f32 to vector<8x128xf32>
    %369 = arith.addf %368, %367 : vector<8x128xf32>
    %370 = arith.divf %368, %369 : vector<8x128xf32>
    %371 = vector.extract_strided_slice %360 {offsets = [0, 128], sizes = [8, 128], strides = [1, 1]} : vector<8x384xf32> to vector<8x128xf32>
    %372 = vector.extract_strided_slice %362 {offsets = [0, 128], sizes = [8, 128], strides = [1, 1]} : vector<8x384xf32> to vector<8x128xf32>
    %373 = arith.addf %371, %372 : vector<8x128xf32>
    %374 = arith.negf %373 : vector<8x128xf32>
    %375 = math.exp %374 : vector<8x128xf32>
    %cst_110 = arith.constant 1.000000e+00 : f32
    %376 = vector.broadcast %cst_110 : f32 to vector<8x128xf32>
    %377 = arith.addf %376, %375 : vector<8x128xf32>
    %378 = arith.divf %376, %377 : vector<8x128xf32>
    %379 = vector.extract_strided_slice %360 {offsets = [0, 256], sizes = [8, 128], strides = [1, 1]} : vector<8x384xf32> to vector<8x128xf32>
    %380 = vector.extract_strided_slice %362 {offsets = [0, 256], sizes = [8, 128], strides = [1, 1]} : vector<8x384xf32> to vector<8x128xf32>
    %381 = arith.addf %380, %324 : vector<8x128xf32>
    %382 = arith.mulf %370, %381 : vector<8x128xf32>
    %383 = arith.addf %379, %382 : vector<8x128xf32>
    %384 = math.tanh %383 : vector<8x128xf32>
    %cst_111 = arith.constant 1.000000e+00 : f32
    %385 = vector.broadcast %cst_111 : f32 to vector<8x128xf32>
    %386 = arith.subf %385, %378 : vector<8x128xf32>
    %387 = arith.mulf %386, %384 : vector<8x128xf32>
    %388 = arith.mulf %378, %357 : vector<8x128xf32>
    %389 = arith.addf %387, %388 : vector<8x128xf32>
    %c2_i32_112 = arith.constant 2 : i32
    %390 = arith.index_cast %c2_i32_112 : i32 to index
    %c0_113 = arith.constant 0 : index
    %c0_114 = arith.constant 0 : index
    %391 = vector.load %arg13[%390, %c0_113, %c0_114] : memref<8x8x384xf32, #tpu.memory_space<vmem>>, vector<1x8x384xf32>
    %392 = vector.shape_cast %391 : vector<1x8x384xf32> to vector<8x384xf32>
    %393 = arith.truncf %389 : vector<8x128xf32> to vector<8x128xbf16>
    %cst_115 = arith.constant dense<0.000000e+00> : vector<8x384xf32>
    %394 = tpu.matmul %393, %314, %cst_115 {dimension_numbers = #tpu.dot_dimension_numbers<[1], [0], [0], [1], [0, 0, 1, 1], [], []>} : vector<8x128xbf16>, vector<128x384xbf16>, vector<8x384xf32> -> vector<8x384xf32>
    %395 = vector.extract_strided_slice %392 {offsets = [0, 0], sizes = [8, 128], strides = [1, 1]} : vector<8x384xf32> to vector<8x128xf32>
    %396 = vector.extract_strided_slice %394 {offsets = [0, 0], sizes = [8, 128], strides = [1, 1]} : vector<8x384xf32> to vector<8x128xf32>
    %397 = arith.addf %395, %396 : vector<8x128xf32>
    %398 = arith.negf %397 : vector<8x128xf32>
    %399 = math.exp %398 : vector<8x128xf32>
    %cst_116 = arith.constant 1.000000e+00 : f32
    %400 = vector.broadcast %cst_116 : f32 to vector<8x128xf32>
    %401 = arith.addf %400, %399 : vector<8x128xf32>
    %402 = arith.divf %400, %401 : vector<8x128xf32>
    %403 = vector.extract_strided_slice %392 {offsets = [0, 128], sizes = [8, 128], strides = [1, 1]} : vector<8x384xf32> to vector<8x128xf32>
    %404 = vector.extract_strided_slice %394 {offsets = [0, 128], sizes = [8, 128], strides = [1, 1]} : vector<8x384xf32> to vector<8x128xf32>
    %405 = arith.addf %403, %404 : vector<8x128xf32>
    %406 = arith.negf %405 : vector<8x128xf32>
    %407 = math.exp %406 : vector<8x128xf32>
    %cst_117 = arith.constant 1.000000e+00 : f32
    %408 = vector.broadcast %cst_117 : f32 to vector<8x128xf32>
    %409 = arith.addf %408, %407 : vector<8x128xf32>
    %410 = arith.divf %408, %409 : vector<8x128xf32>
    %411 = vector.extract_strided_slice %392 {offsets = [0, 256], sizes = [8, 128], strides = [1, 1]} : vector<8x384xf32> to vector<8x128xf32>
    %412 = vector.extract_strided_slice %394 {offsets = [0, 256], sizes = [8, 128], strides = [1, 1]} : vector<8x384xf32> to vector<8x128xf32>
    %413 = arith.addf %412, %324 : vector<8x128xf32>
    %414 = arith.mulf %402, %413 : vector<8x128xf32>
    %415 = arith.addf %411, %414 : vector<8x128xf32>
    %416 = math.tanh %415 : vector<8x128xf32>
    %cst_118 = arith.constant 1.000000e+00 : f32
    %417 = vector.broadcast %cst_118 : f32 to vector<8x128xf32>
    %418 = arith.subf %417, %410 : vector<8x128xf32>
    %419 = arith.mulf %418, %416 : vector<8x128xf32>
    %420 = arith.mulf %410, %389 : vector<8x128xf32>
    %421 = arith.addf %419, %420 : vector<8x128xf32>
    %c3_i32_119 = arith.constant 3 : i32
    %422 = arith.index_cast %c3_i32_119 : i32 to index
    %c0_120 = arith.constant 0 : index
    %c0_121 = arith.constant 0 : index
    %423 = vector.load %arg13[%422, %c0_120, %c0_121] : memref<8x8x384xf32, #tpu.memory_space<vmem>>, vector<1x8x384xf32>
    %424 = vector.shape_cast %423 : vector<1x8x384xf32> to vector<8x384xf32>
    %425 = arith.truncf %421 : vector<8x128xf32> to vector<8x128xbf16>
    %cst_122 = arith.constant dense<0.000000e+00> : vector<8x384xf32>
    %426 = tpu.matmul %425, %314, %cst_122 {dimension_numbers = #tpu.dot_dimension_numbers<[1], [0], [0], [1], [0, 0, 1, 1], [], []>} : vector<8x128xbf16>, vector<128x384xbf16>, vector<8x384xf32> -> vector<8x384xf32>
    %427 = vector.extract_strided_slice %424 {offsets = [0, 0], sizes = [8, 128], strides = [1, 1]} : vector<8x384xf32> to vector<8x128xf32>
    %428 = vector.extract_strided_slice %426 {offsets = [0, 0], sizes = [8, 128], strides = [1, 1]} : vector<8x384xf32> to vector<8x128xf32>
    %429 = arith.addf %427, %428 : vector<8x128xf32>
    %430 = arith.negf %429 : vector<8x128xf32>
    %431 = math.exp %430 : vector<8x128xf32>
    %cst_123 = arith.constant 1.000000e+00 : f32
    %432 = vector.broadcast %cst_123 : f32 to vector<8x128xf32>
    %433 = arith.addf %432, %431 : vector<8x128xf32>
    %434 = arith.divf %432, %433 : vector<8x128xf32>
    %435 = vector.extract_strided_slice %424 {offsets = [0, 128], sizes = [8, 128], strides = [1, 1]} : vector<8x384xf32> to vector<8x128xf32>
    %436 = vector.extract_strided_slice %426 {offsets = [0, 128], sizes = [8, 128], strides = [1, 1]} : vector<8x384xf32> to vector<8x128xf32>
    %437 = arith.addf %435, %436 : vector<8x128xf32>
    %438 = arith.negf %437 : vector<8x128xf32>
    %439 = math.exp %438 : vector<8x128xf32>
    %cst_124 = arith.constant 1.000000e+00 : f32
    %440 = vector.broadcast %cst_124 : f32 to vector<8x128xf32>
    %441 = arith.addf %440, %439 : vector<8x128xf32>
    %442 = arith.divf %440, %441 : vector<8x128xf32>
    %443 = vector.extract_strided_slice %424 {offsets = [0, 256], sizes = [8, 128], strides = [1, 1]} : vector<8x384xf32> to vector<8x128xf32>
    %444 = vector.extract_strided_slice %426 {offsets = [0, 256], sizes = [8, 128], strides = [1, 1]} : vector<8x384xf32> to vector<8x128xf32>
    %445 = arith.addf %444, %324 : vector<8x128xf32>
    %446 = arith.mulf %434, %445 : vector<8x128xf32>
    %447 = arith.addf %443, %446 : vector<8x128xf32>
    %448 = math.tanh %447 : vector<8x128xf32>
    %cst_125 = arith.constant 1.000000e+00 : f32
    %449 = vector.broadcast %cst_125 : f32 to vector<8x128xf32>
    %450 = arith.subf %449, %442 : vector<8x128xf32>
    %451 = arith.mulf %450, %448 : vector<8x128xf32>
    %452 = arith.mulf %442, %421 : vector<8x128xf32>
    %453 = arith.addf %451, %452 : vector<8x128xf32>
    %c4_i32_126 = arith.constant 4 : i32
    %454 = arith.index_cast %c4_i32_126 : i32 to index
    %c0_127 = arith.constant 0 : index
    %c0_128 = arith.constant 0 : index
    %455 = vector.load %arg13[%454, %c0_127, %c0_128] : memref<8x8x384xf32, #tpu.memory_space<vmem>>, vector<1x8x384xf32>
    %456 = vector.shape_cast %455 : vector<1x8x384xf32> to vector<8x384xf32>
    %457 = arith.truncf %453 : vector<8x128xf32> to vector<8x128xbf16>
    %cst_129 = arith.constant dense<0.000000e+00> : vector<8x384xf32>
    %458 = tpu.matmul %457, %314, %cst_129 {dimension_numbers = #tpu.dot_dimension_numbers<[1], [0], [0], [1], [0, 0, 1, 1], [], []>} : vector<8x128xbf16>, vector<128x384xbf16>, vector<8x384xf32> -> vector<8x384xf32>
    %459 = vector.extract_strided_slice %456 {offsets = [0, 0], sizes = [8, 128], strides = [1, 1]} : vector<8x384xf32> to vector<8x128xf32>
    %460 = vector.extract_strided_slice %458 {offsets = [0, 0], sizes = [8, 128], strides = [1, 1]} : vector<8x384xf32> to vector<8x128xf32>
    %461 = arith.addf %459, %460 : vector<8x128xf32>
    %462 = arith.negf %461 : vector<8x128xf32>
    %463 = math.exp %462 : vector<8x128xf32>
    %cst_130 = arith.constant 1.000000e+00 : f32
    %464 = vector.broadcast %cst_130 : f32 to vector<8x128xf32>
    %465 = arith.addf %464, %463 : vector<8x128xf32>
    %466 = arith.divf %464, %465 : vector<8x128xf32>
    %467 = vector.extract_strided_slice %456 {offsets = [0, 128], sizes = [8, 128], strides = [1, 1]} : vector<8x384xf32> to vector<8x128xf32>
    %468 = vector.extract_strided_slice %458 {offsets = [0, 128], sizes = [8, 128], strides = [1, 1]} : vector<8x384xf32> to vector<8x128xf32>
    %469 = arith.addf %467, %468 : vector<8x128xf32>
    %470 = arith.negf %469 : vector<8x128xf32>
    %471 = math.exp %470 : vector<8x128xf32>
    %cst_131 = arith.constant 1.000000e+00 : f32
    %472 = vector.broadcast %cst_131 : f32 to vector<8x128xf32>
    %473 = arith.addf %472, %471 : vector<8x128xf32>
    %474 = arith.divf %472, %473 : vector<8x128xf32>
    %475 = vector.extract_strided_slice %456 {offsets = [0, 256], sizes = [8, 128], strides = [1, 1]} : vector<8x384xf32> to vector<8x128xf32>
    %476 = vector.extract_strided_slice %458 {offsets = [0, 256], sizes = [8, 128], strides = [1, 1]} : vector<8x384xf32> to vector<8x128xf32>
    %477 = arith.addf %476, %324 : vector<8x128xf32>
    %478 = arith.mulf %466, %477 : vector<8x128xf32>
    %479 = arith.addf %475, %478 : vector<8x128xf32>
    %480 = math.tanh %479 : vector<8x128xf32>
    %cst_132 = arith.constant 1.000000e+00 : f32
    %481 = vector.broadcast %cst_132 : f32 to vector<8x128xf32>
    %482 = arith.subf %481, %474 : vector<8x128xf32>
    %483 = arith.mulf %482, %480 : vector<8x128xf32>
    %484 = arith.mulf %474, %453 : vector<8x128xf32>
    %485 = arith.addf %483, %484 : vector<8x128xf32>
    %c5_i32_133 = arith.constant 5 : i32
    %486 = arith.index_cast %c5_i32_133 : i32 to index
    %c0_134 = arith.constant 0 : index
    %c0_135 = arith.constant 0 : index
    %487 = vector.load %arg13[%486, %c0_134, %c0_135] : memref<8x8x384xf32, #tpu.memory_space<vmem>>, vector<1x8x384xf32>
    %488 = vector.shape_cast %487 : vector<1x8x384xf32> to vector<8x384xf32>
    %489 = arith.truncf %485 : vector<8x128xf32> to vector<8x128xbf16>
    %cst_136 = arith.constant dense<0.000000e+00> : vector<8x384xf32>
    %490 = tpu.matmul %489, %314, %cst_136 {dimension_numbers = #tpu.dot_dimension_numbers<[1], [0], [0], [1], [0, 0, 1, 1], [], []>} : vector<8x128xbf16>, vector<128x384xbf16>, vector<8x384xf32> -> vector<8x384xf32>
    %491 = vector.extract_strided_slice %488 {offsets = [0, 0], sizes = [8, 128], strides = [1, 1]} : vector<8x384xf32> to vector<8x128xf32>
    %492 = vector.extract_strided_slice %490 {offsets = [0, 0], sizes = [8, 128], strides = [1, 1]} : vector<8x384xf32> to vector<8x128xf32>
    %493 = arith.addf %491, %492 : vector<8x128xf32>
    %494 = arith.negf %493 : vector<8x128xf32>
    %495 = math.exp %494 : vector<8x128xf32>
    %cst_137 = arith.constant 1.000000e+00 : f32
    %496 = vector.broadcast %cst_137 : f32 to vector<8x128xf32>
    %497 = arith.addf %496, %495 : vector<8x128xf32>
    %498 = arith.divf %496, %497 : vector<8x128xf32>
    %499 = vector.extract_strided_slice %488 {offsets = [0, 128], sizes = [8, 128], strides = [1, 1]} : vector<8x384xf32> to vector<8x128xf32>
    %500 = vector.extract_strided_slice %490 {offsets = [0, 128], sizes = [8, 128], strides = [1, 1]} : vector<8x384xf32> to vector<8x128xf32>
    %501 = arith.addf %499, %500 : vector<8x128xf32>
    %502 = arith.negf %501 : vector<8x128xf32>
    %503 = math.exp %502 : vector<8x128xf32>
    %cst_138 = arith.constant 1.000000e+00 : f32
    %504 = vector.broadcast %cst_138 : f32 to vector<8x128xf32>
    %505 = arith.addf %504, %503 : vector<8x128xf32>
    %506 = arith.divf %504, %505 : vector<8x128xf32>
    %507 = vector.extract_strided_slice %488 {offsets = [0, 256], sizes = [8, 128], strides = [1, 1]} : vector<8x384xf32> to vector<8x128xf32>
    %508 = vector.extract_strided_slice %490 {offsets = [0, 256], sizes = [8, 128], strides = [1, 1]} : vector<8x384xf32> to vector<8x128xf32>
    %509 = arith.addf %508, %324 : vector<8x128xf32>
    %510 = arith.mulf %498, %509 : vector<8x128xf32>
    %511 = arith.addf %507, %510 : vector<8x128xf32>
    %512 = math.tanh %511 : vector<8x128xf32>
    %cst_139 = arith.constant 1.000000e+00 : f32
    %513 = vector.broadcast %cst_139 : f32 to vector<8x128xf32>
    %514 = arith.subf %513, %506 : vector<8x128xf32>
    %515 = arith.mulf %514, %512 : vector<8x128xf32>
    %516 = arith.mulf %506, %485 : vector<8x128xf32>
    %517 = arith.addf %515, %516 : vector<8x128xf32>
    %c6_i32_140 = arith.constant 6 : i32
    %518 = arith.index_cast %c6_i32_140 : i32 to index
    %c0_141 = arith.constant 0 : index
    %c0_142 = arith.constant 0 : index
    %519 = vector.load %arg13[%518, %c0_141, %c0_142] : memref<8x8x384xf32, #tpu.memory_space<vmem>>, vector<1x8x384xf32>
    %520 = vector.shape_cast %519 : vector<1x8x384xf32> to vector<8x384xf32>
    %521 = arith.truncf %517 : vector<8x128xf32> to vector<8x128xbf16>
    %cst_143 = arith.constant dense<0.000000e+00> : vector<8x384xf32>
    %522 = tpu.matmul %521, %314, %cst_143 {dimension_numbers = #tpu.dot_dimension_numbers<[1], [0], [0], [1], [0, 0, 1, 1], [], []>} : vector<8x128xbf16>, vector<128x384xbf16>, vector<8x384xf32> -> vector<8x384xf32>
    %523 = vector.extract_strided_slice %520 {offsets = [0, 0], sizes = [8, 128], strides = [1, 1]} : vector<8x384xf32> to vector<8x128xf32>
    %524 = vector.extract_strided_slice %522 {offsets = [0, 0], sizes = [8, 128], strides = [1, 1]} : vector<8x384xf32> to vector<8x128xf32>
    %525 = arith.addf %523, %524 : vector<8x128xf32>
    %526 = arith.negf %525 : vector<8x128xf32>
    %527 = math.exp %526 : vector<8x128xf32>
    %cst_144 = arith.constant 1.000000e+00 : f32
    %528 = vector.broadcast %cst_144 : f32 to vector<8x128xf32>
    %529 = arith.addf %528, %527 : vector<8x128xf32>
    %530 = arith.divf %528, %529 : vector<8x128xf32>
    %531 = vector.extract_strided_slice %520 {offsets = [0, 128], sizes = [8, 128], strides = [1, 1]} : vector<8x384xf32> to vector<8x128xf32>
    %532 = vector.extract_strided_slice %522 {offsets = [0, 128], sizes = [8, 128], strides = [1, 1]} : vector<8x384xf32> to vector<8x128xf32>
    %533 = arith.addf %531, %532 : vector<8x128xf32>
    %534 = arith.negf %533 : vector<8x128xf32>
    %535 = math.exp %534 : vector<8x128xf32>
    %cst_145 = arith.constant 1.000000e+00 : f32
    %536 = vector.broadcast %cst_145 : f32 to vector<8x128xf32>
    %537 = arith.addf %536, %535 : vector<8x128xf32>
    %538 = arith.divf %536, %537 : vector<8x128xf32>
    %539 = vector.extract_strided_slice %520 {offsets = [0, 256], sizes = [8, 128], strides = [1, 1]} : vector<8x384xf32> to vector<8x128xf32>
    %540 = vector.extract_strided_slice %522 {offsets = [0, 256], sizes = [8, 128], strides = [1, 1]} : vector<8x384xf32> to vector<8x128xf32>
    %541 = arith.addf %540, %324 : vector<8x128xf32>
    %542 = arith.mulf %530, %541 : vector<8x128xf32>
    %543 = arith.addf %539, %542 : vector<8x128xf32>
    %544 = math.tanh %543 : vector<8x128xf32>
    %cst_146 = arith.constant 1.000000e+00 : f32
    %545 = vector.broadcast %cst_146 : f32 to vector<8x128xf32>
    %546 = arith.subf %545, %538 : vector<8x128xf32>
    %547 = arith.mulf %546, %544 : vector<8x128xf32>
    %548 = arith.mulf %538, %517 : vector<8x128xf32>
    %549 = arith.addf %547, %548 : vector<8x128xf32>
    %c7_i32_147 = arith.constant 7 : i32
    %550 = arith.index_cast %c7_i32_147 : i32 to index
    %c0_148 = arith.constant 0 : index
    %c0_149 = arith.constant 0 : index
    %551 = vector.load %arg13[%550, %c0_148, %c0_149] : memref<8x8x384xf32, #tpu.memory_space<vmem>>, vector<1x8x384xf32>
    %552 = vector.shape_cast %551 : vector<1x8x384xf32> to vector<8x384xf32>
    %553 = arith.truncf %549 : vector<8x128xf32> to vector<8x128xbf16>
    %cst_150 = arith.constant dense<0.000000e+00> : vector<8x384xf32>
    %554 = tpu.matmul %553, %314, %cst_150 {dimension_numbers = #tpu.dot_dimension_numbers<[1], [0], [0], [1], [0, 0, 1, 1], [], []>} : vector<8x128xbf16>, vector<128x384xbf16>, vector<8x384xf32> -> vector<8x384xf32>
    %555 = vector.extract_strided_slice %552 {offsets = [0, 0], sizes = [8, 128], strides = [1, 1]} : vector<8x384xf32> to vector<8x128xf32>
    %556 = vector.extract_strided_slice %554 {offsets = [0, 0], sizes = [8, 128], strides = [1, 1]} : vector<8x384xf32> to vector<8x128xf32>
    %557 = arith.addf %555, %556 : vector<8x128xf32>
    %558 = arith.negf %557 : vector<8x128xf32>
    %559 = math.exp %558 : vector<8x128xf32>
    %cst_151 = arith.constant 1.000000e+00 : f32
    %560 = vector.broadcast %cst_151 : f32 to vector<8x128xf32>
    %561 = arith.addf %560, %559 : vector<8x128xf32>
    %562 = arith.divf %560, %561 : vector<8x128xf32>
    %563 = vector.extract_strided_slice %552 {offsets = [0, 128], sizes = [8, 128], strides = [1, 1]} : vector<8x384xf32> to vector<8x128xf32>
    %564 = vector.extract_strided_slice %554 {offsets = [0, 128], sizes = [8, 128], strides = [1, 1]} : vector<8x384xf32> to vector<8x128xf32>
    %565 = arith.addf %563, %564 : vector<8x128xf32>
    %566 = arith.negf %565 : vector<8x128xf32>
    %567 = math.exp %566 : vector<8x128xf32>
    %cst_152 = arith.constant 1.000000e+00 : f32
    %568 = vector.broadcast %cst_152 : f32 to vector<8x128xf32>
    %569 = arith.addf %568, %567 : vector<8x128xf32>
    %570 = arith.divf %568, %569 : vector<8x128xf32>
    %571 = vector.extract_strided_slice %552 {offsets = [0, 256], sizes = [8, 128], strides = [1, 1]} : vector<8x384xf32> to vector<8x128xf32>
    %572 = vector.extract_strided_slice %554 {offsets = [0, 256], sizes = [8, 128], strides = [1, 1]} : vector<8x384xf32> to vector<8x128xf32>
    %573 = arith.addf %572, %324 : vector<8x128xf32>
    %574 = arith.mulf %562, %573 : vector<8x128xf32>
    %575 = arith.addf %571, %574 : vector<8x128xf32>
    %576 = math.tanh %575 : vector<8x128xf32>
    %cst_153 = arith.constant 1.000000e+00 : f32
    %577 = vector.broadcast %cst_153 : f32 to vector<8x128xf32>
    %578 = arith.subf %577, %570 : vector<8x128xf32>
    %579 = arith.mulf %578, %576 : vector<8x128xf32>
    %580 = arith.mulf %570, %549 : vector<8x128xf32>
    %581 = arith.addf %579, %580 : vector<8x128xf32>
    %c8_i32_154 = arith.constant 8 : i32
    %c0_155 = arith.constant 0 : index
    %c0_156 = arith.constant 0 : index
    %582 = vector.load %arg10[%c0_155, %c0_156] : memref<128x128xbf16, #tpu.memory_space<vmem>>, vector<128x128xbf16>
    %583 = arith.truncf %581 : vector<8x128xf32> to vector<8x128xbf16>
    %cst_157 = arith.constant dense<0.000000e+00> : vector<8x128xf32>
    %584 = tpu.matmul %583, %582, %cst_157 {dimension_numbers = #tpu.dot_dimension_numbers<[1], [0], [0], [1], [0, 0, 1, 1], [], []>} : vector<8x128xbf16>, vector<128x128xbf16>, vector<8x128xf32> -> vector<8x128xf32>
    %c0_158 = arith.constant 0 : index
    %c0_159 = arith.constant 0 : index
    %585 = vector.load %arg11[%c0_158, %c0_159] : memref<1x128xf32, #tpu.memory_space<vmem>>, vector<1x128xf32>
    %586 = vector.broadcast %585 : vector<1x128xf32> to vector<8x128xf32>
    %587 = arith.addf %584, %586 : vector<8x128xf32>
    %588 = arith.negf %587 : vector<8x128xf32>
    %589 = math.exp %588 : vector<8x128xf32>
    %cst_160 = arith.constant 1.000000e+00 : f32
    %590 = vector.broadcast %cst_160 : f32 to vector<8x128xf32>
    %591 = arith.addf %590, %589 : vector<8x128xf32>
    %592 = arith.divf %590, %591 : vector<8x128xf32>
    %c0_161 = arith.constant 0 : index
    %c0_162 = arith.constant 0 : index
    %593 = vector.load %arg12[%c0_161, %c0_162] : memref<8x128xf32, #tpu.memory_space<vmem>>, vector<8x128xf32>
    tpu.vector_store %arg12[%c0_161, %c0_162], %592 {strides = array<i32>} : memref<8x128xf32, #tpu.memory_space<vmem>>, vector<8x128xf32>,
    return
  }
}

</mosaic_0001>

<llo_original>
// kernel: gru_forward.1
$region0: #{gru_forward.1}
  #allocation0 [shape = 'u32[]', space=smem, size = 0x4, offset = 0x4, fixed_abs, tag = 'smem constant byte address 0x4 - core index']
  #allocation1 [shape = 'u32[144,128]{1,0:T(1,128)}', space=vmem, size = 0x12000, scoped, tag = 'internal scratch']
  #allocation2 [shape = 'f32[8,8,384]{2,1,0:T(8,128)}', space=vmem, size = 0x18000, scoped, tag = 'scratch operand']
  #allocation3 [shape = 'f32[8,8,128]{2,1,0:T(8,128)}', space=vmem, size = 0x8000, scoped, tag = 'scratch operand']
  %s0 = inlined_call_operand.vmem [shape: s32[64,1], index: 0, kind: input, shape index: {}]
  %s1 = inlined_call_operand.vmem [shape: bf16[32,128], index: 1, kind: input, shape index: {}]
  %s2 = inlined_call_operand.hbm [shape: bf16[128,384], index: 2, kind: input, shape index: {}]
  %s3 = inlined_call_operand.hbm [shape: bf16[128,384], index: 3, kind: input, shape index: {}]
  %s4 = inlined_call_operand.vmem [shape: f32[1,384], index: 4, kind: input, shape index: {}]
  %s5 = inlined_call_operand.vmem [shape: f32[1,128], index: 5, kind: input, shape index: {}]
  %s6 = inlined_call_operand.hbm [shape: bf16[128,384], index: 6, kind: input, shape index: {}]
  %s7 = inlined_call_operand.hbm [shape: bf16[128,384], index: 7, kind: input, shape index: {}]
  %s8 = inlined_call_operand.vmem [shape: f32[1,384], index: 8, kind: input, shape index: {}]
  %s9 = inlined_call_operand.vmem [shape: f32[1,128], index: 9, kind: input, shape index: {}]
  %s10 = inlined_call_operand.vmem [shape: bf16[128,128], index: 10, kind: input, shape index: {}]
  %s11 = inlined_call_operand.vmem [shape: f32[1,128], index: 11, kind: input, shape index: {}]
  %s12 = inlined_call_operand.vmem [shape: f32[8,128], index: 12, kind: output, shape index: {}]
  %s13 = sld [smem:[#allocation0]]
  $region74: #{gru_forward.1} parent=0
    _
  %s15 = ssub.s32 1, %s13
  %s16 = scalar_select 0, %s15, %s13
  $region1: #{gru_forward.1} parent=0
    #allocation4 [shape = 'u8[98304]{0}', space=vmem, size = 0x18000, scoped, tag = 'input window, operand 2, single buffered']
    #allocation5 [shape = 's32[1]{0}', space=sflag, size = 0x4, scoped, tag = 'scoped memory for gru_forward.1']
    #allocation6 [shape = 'u8[98304]{0}', space=vmem, size = 0x18000, scoped, tag = 'input window, operand 3, single buffered']
    #allocation7 [shape = 's32[1]{0}', space=sflag, size = 0x4, scoped, tag = 'scoped memory for gru_forward.1']
    #allocation8 [shape = 'u8[98304]{0}', space=vmem, size = 0x18000, scoped, tag = 'input window, operand 6, single buffered']
    #allocation9 [shape = 'u8[98304]{0}', space=vmem, size = 0x18000, scoped, tag = 'input window, operand 7, single buffered']
    #allocation10 [shape = 's32[1]{0}', space=sflag, size = 0x4, scoped, tag = 'scoped memory for gru_forward.1']
    %17 = vsyncpa [#allocation5], 0
    %18 = vsyncpa [#allocation7], 0
    %19 = vsyncpa [#allocation10], 0
    // Predicated region
    $region2: #{gru_forward.1} parent=1 // pred_check
      _
    $region3: #{gru_forward.1} parent=1 // pred_check_branch
      %21 = sbr.rel (0) target = $region5
    $region4: #{gru_forward.1} parent=1 // pred_region
      _
    $region5: #{gru_forward.1} parent=1 // pred_fallthru
      _
    // Predicated region
    $region6: #{gru_forward.1} parent=1 // pred_check
      _
    $region7: #{gru_forward.1} parent=1 // pred_check_branch
      %23 = sbr.rel (0) target = $region9
    $region8: #{gru_forward.1} parent=1 // pred_region
      _
    $region9: #{gru_forward.1} parent=1 // pred_fallthru
      _
    // Predicated region
    $region10: #{gru_forward.1} parent=1 // pred_check
      _
    $region11: #{gru_forward.1} parent=1 // pred_check_branch
      %25 = sbr.rel (0) target = $region13
    $region12: #{gru_forward.1} parent=1 // pred_region
      %s27 = ssub.s32 3072, 3072
      %28 = vsyncadd [#allocation5], %s27
      %s29 = sshll.u32 [#allocation4], 4
      %s30 = int_to_ptr.vmem [resolvable:$true] %s29
      %35 = dma.hbm_to_vmem [thread:$0]  %s2, 3072, %s30, [#allocation5], 192, 192, 12
    $region13: #{gru_forward.1} parent=1 // pred_fallthru
      _
    // Predicated region
    $region14: #{gru_forward.1} parent=1 // pred_check
      _
    $region15: #{gru_forward.1} parent=1 // pred_check_branch
      %37 = sbr.rel (0) target = $region17
    $region16: #{gru_forward.1} parent=1 // pred_region
      %s39 = ssub.s32 3072, 3072
      %40 = vsyncadd [#allocation7], %s39
      %s41 = sshll.u32 [#allocation6], 4
      %s42 = int_to_ptr.vmem [resolvable:$true] %s41
      %47 = dma.hbm_to_vmem [thread:$0]  %s3, 3072, %s42, [#allocation7], 192, 192, 12
    $region17: #{gru_forward.1} parent=1 // pred_fallthru
      _
    // Predicated region
    $region18: #{gru_forward.1} parent=1 // pred_check
      _
    $region19: #{gru_forward.1} parent=1 // pred_check_branch
      %49 = sbr.rel (0) target = $region21
    $region20: #{gru_forward.1} parent=1 // pred_region
      _
    $region21: #{gru_forward.1} parent=1 // pred_fallthru
      _
    // Predicated region
    $region22: #{gru_forward.1} parent=1 // pred_check
      _
    $region23: #{gru_forward.1} parent=1 // pred_check_branch
      %51 = sbr.rel (0) target = $region25
    $region24: #{gru_forward.1} parent=1 // pred_region
      _
    $region25: #{gru_forward.1} parent=1 // pred_fallthru
      _
    // Predicated region
    $region26: #{gru_forward.1} parent=1 // pred_check
      _
    $region27: #{gru_forward.1} parent=1 // pred_check_branch
      %53 = sbr.rel (0) target = $region29
    $region28: #{gru_forward.1} parent=1 // pred_region
      %s55 = ssub.s32 3072, 3072
      %56 = vsyncadd [#allocation7], %s55
      %s57 = sshll.u32 [#allocation8], 4
      %s58 = int_to_ptr.vmem [resolvable:$true] %s57
      %63 = dma.hbm_to_vmem [thread:$0]  %s6, 3072, %s58, [#allocation7], 192, 192, 12
    $region29: #{gru_forward.1} parent=1 // pred_fallthru
      _
    // Predicated region
    $region30: #{gru_forward.1} parent=1 // pred_check
      _
    $region31: #{gru_forward.1} parent=1 // pred_check_branch
      %65 = sbr.rel (0) target = $region33
    $region32: #{gru_forward.1} parent=1 // pred_region
      %s67 = ssub.s32 3072, 3072
      %68 = vsyncadd [#allocation10], %s67
      %s69 = sshll.u32 [#allocation9], 4
      %s70 = int_to_ptr.vmem [resolvable:$true] %s69
      %75 = dma.hbm_to_vmem [thread:$0]  %s7, 3072, %s70, [#allocation10], 192, 192, 12
    $region33: #{gru_forward.1} parent=1 // pred_fallthru
      _
    // Predicated region
    $region34: #{gru_forward.1} parent=1 // pred_check
      _
    $region35: #{gru_forward.1} parent=1 // pred_check_branch
      %77 = sbr.rel (0) target = $region37
    $region36: #{gru_forward.1} parent=1 // pred_region
      _
    $region37: #{gru_forward.1} parent=1 // pred_fallthru
      _
    // Predicated region
    $region38: #{gru_forward.1} parent=1 // pred_check
      _
    $region39: #{gru_forward.1} parent=1 // pred_check_branch
      %79 = sbr.rel (0) target = $region41
    $region40: #{gru_forward.1} parent=1 // pred_region
      _
    $region41: #{gru_forward.1} parent=1 // pred_fallthru
      _
    // Predicated region
    $region42: #{gru_forward.1} parent=1 // pred_check
      _
    $region43: #{gru_forward.1} parent=1 // pred_check_branch
      %81 = sbr.rel (0) target = $region45
    $region44: #{gru_forward.1} parent=1 // pred_region
      _
    $region45: #{gru_forward.1} parent=1 // pred_fallthru
      _
    // Predicated region
    $region46: #{gru_forward.1} parent=1 // pred_check
      _
    $region47: #{gru_forward.1} parent=1 // pred_check_branch
      %83 = sbr.rel (0) target = $region49
    $region48: #{gru_forward.1} parent=1 // pred_region
      _
    $region49: #{gru_forward.1} parent=1 // pred_fallthru
      _
    // Predicated region
    $region50: #{gru_forward.1} parent=1 // pred_check
      _
    $region51: #{gru_forward.1} parent=1 // pred_check_branch
      %85 = sbr.rel (0) target = $region53
    $region52: #{gru_forward.1} parent=1 // pred_region
      %86 = dma.done [#allocation5], 3072
    $region53: #{gru_forward.1} parent=1 // pred_fallthru
      _
    // Predicated region
    $region54: #{gru_forward.1} parent=1 // pred_check
      _
    $region55: #{gru_forward.1} parent=1 // pred_check_branch
      %88 = sbr.rel (0) target = $region57
    $region56: #{gru_forward.1} parent=1 // pred_region
      %89 = dma.done [#allocation7], 3072
    $region57: #{gru_forward.1} parent=1 // pred_fallthru
      _
    // Predicated region
    $region58: #{gru_forward.1} parent=1 // pred_check
      _
    $region59: #{gru_forward.1} parent=1 // pred_check_branch
      %91 = sbr.rel (0) target = $region61
    $region60: #{gru_forward.1} parent=1 // pred_region
      %92 = dma.done [#allocation7], 3072
    $region61: #{gru_forward.1} parent=1 // pred_fallthru
      _
    // Predicated region
    $region62: #{gru_forward.1} parent=1 // pred_check
      _
    $region63: #{gru_forward.1} parent=1 // pred_check_branch
      %94 = sbr.rel (0) target = $region65
    $region64: #{gru_forward.1} parent=1 // pred_region
      %95 = dma.done [#allocation10], 3072
    $region65: #{gru_forward.1} parent=1 // pred_fallthru
      _
    %v97 = vld [vmem:[%s0] sm:$0xff]
    %v98 = vld [vmem:[%s0 + $0x8] sm:$0xff]
    %v99 = vld [vmem:[%s0 + $0x10] sm:$0xff]
    %v100 = vld [vmem:[%s0 + $0x18] sm:$0xff]
    %v101 = vld [vmem:[%s0 + $0x20] sm:$0xff]
    %v102 = vld [vmem:[%s0 + $0x28] sm:$0xff]
    %v103 = vld [vmem:[%s0 + $0x30] sm:$0xff]
    %v104 = vld [vmem:[%s0 + $0x38] sm:$0xff]
    %v105 = vlaneseq
    %v106 = vand.u32 %v105, 127
    %107 = vset.pattern.permute.xlu0 0
    %108 = vperm.xlu0 %107, %v97
    %v109 = vpop.permute.xlu0 %108
    %110 = vset.pattern.permute.xlu0 0
    %111 = vperm.xlu0 %110, %v98
    %v112 = vpop.permute.xlu0 %111
    %113 = vset.pattern.permute.xlu0 0
    %114 = vperm.xlu0 %113, %v99
    %v115 = vpop.permute.xlu0 %114
    %116 = vset.pattern.permute.xlu0 0
    %117 = vperm.xlu0 %116, %v100
    %v118 = vpop.permute.xlu0 %117
    %119 = vset.pattern.permute.xlu0 0
    %120 = vperm.xlu0 %119, %v101
    %v121 = vpop.permute.xlu0 %120
    %122 = vset.pattern.permute.xlu0 0
    %123 = vperm.xlu0 %122, %v102
    %v124 = vpop.permute.xlu0 %123
    %125 = vset.pattern.permute.xlu0 0
    %126 = vperm.xlu0 %125, %v103
    %v127 = vpop.permute.xlu0 %126
    %128 = vset.pattern.permute.xlu0 0
    %129 = vperm.xlu0 %128, %v104
    %v130 = vpop.permute.xlu0 %129
    %vm131 = vcmp.eq.s32.totalorder %v109, %v106
    %vm132 = vcmp.eq.s32.totalorder %v112, %v106
    %vm133 = vcmp.eq.s32.totalorder %v115, %v106
    %vm134 = vcmp.eq.s32.totalorder %v118, %v106
    %vm135 = vcmp.eq.s32.totalorder %v121, %v106
    %vm136 = vcmp.eq.s32.totalorder %v124, %v106
    %vm137 = vcmp.eq.s32.totalorder %v127, %v106
    %vm138 = vcmp.eq.s32.totalorder %v130, %v106
    %v139 = vsel %vm131, 1.0, 0.0
    %v140 = vsel %vm132, 1.0, 0.0
    %v141 = vsel %vm133, 1.0, 0.0
    %v142 = vsel %vm134, 1.0, 0.0
    %v143 = vsel %vm135, 1.0, 0.0
    %v144 = vsel %vm136, 1.0, 0.0
    %v145 = vsel %vm137, 1.0, 0.0
    %v146 = vsel %vm138, 1.0, 0.0
    %v147 = vpack.c.bf16 %v140, %v139
    %v148 = vpack.c.bf16 %v142, %v141
    %v149 = vpack.c.bf16 %v144, %v143
    %v150 = vpack.c.bf16 %v146, %v145
    %v151 = vld [vmem:[%s1] sm:$0xf]
    %v152 = vld [vmem:[%s1 + $0x4] sm:$0xf]
    %v153 = vld [vmem:[%s1 + $0x8] sm:$0xf]
    %v154 = vld [vmem:[%s1 + $0xc] sm:$0xf]
    %v159 = vunpack.c.l.b16 %v151
    %v160 = vunpack.c.l.b16 %v152
    %v161 = vunpack.c.l.b16 %v153
    %v162 = vunpack.c.l.b16 %v154
    %v163 = vpack.c.b16 %v160, %v159
    %v164 = vpack.c.b16 %v162, %v161
    %vm167 = vcmask 261120
    %v169 = vsel %vm167, %v147, 0
    %v172 = vsel %vm167, %v148, 0
    %v175 = vsel %vm167, %v149, 0
    %v178 = vsel %vm167, %v150, 0
    %180 = vmatprep.subr.bf16.mxu0 0
    %181 = vmatpush1.bf16.msra.mxu0 0
    %182 = vmatprep.subr.bf16.mxu0 0
    %183 = vmatpush1.bf16.msra.mxu0 0
    %184 = vmatprep.subr.bf16.mxu0 0
    %185 = vmatpush1.bf16.msra.mxu0 0
    %186 = vmatprep.subr.bf16.mxu0 0
    %187 = vmatpush1.bf16.msra.mxu0 0
    %188 = vmatprep.subr.bf16.mxu0 0
    %189 = vmatpush1.bf16.msra.mxu0 0
    %190 = vmatprep.subr.bf16.mxu0 0
    %191 = vmatpush1.bf16.msra.mxu0 0
    %192 = vmatprep.subr.bf16.mxu0 0
    %193 = vmatpush1.bf16.msra.mxu0 %v164
    %194 = vmatprep.subr.bf16.mxu0 0
    %195 = vmatpush1.bf16.msra.mxu0 %v163
    %196 = vmatprep.subr.bf16.mxu0 0
    %197 = vmatpush2.bf16.msra.mxu0 0
    %198 = vmatprep.subr.bf16.mxu0 0
    %199 = vmatpush2.bf16.msra.mxu0 0
    %200 = vmatprep.subr.bf16.mxu0 0
    %201 = vmatpush2.bf16.msra.mxu0 0
    %202 = vmatprep.subr.bf16.mxu0 0
    %203 = vmatpush2.bf16.msra.mxu0 0
    %204 = vmatprep.subr.bf16.mxu0 0
    %205 = vmatpush2.bf16.msra.mxu0 0
    %206 = vmatprep.subr.bf16.mxu0 0
    %207 = vmatpush2.bf16.msra.mxu0 0
    %208 = vmatprep.subr.bf16.mxu0 0
    %209 = vmatpush2.bf16.msra.mxu0 0
    %210 = vmatprep.subr.bf16.mxu0 0
    %211 = vmatpush2.bf16.msra.mxu0 0
    %212 = vmatprep.mubr.bf16.mxu0 0
    %213 = vmatmul.mubr.bf16.gmra.mxu0 %v169
    %v214 = vpop.f32.mrf.mxu0
    %v215 = vadd.f32 0.0, %v214
    %v216 = vpop.f32.mrf.mxu0
    %v217 = vpop.f32.mrf.mxu0
    %v218 = vadd.f32 0.0, %v217
    %v219 = vpop.f32.mrf.mxu0
    %220 = vmatprep.mubr.bf16.mxu0 0
    %221 = vmatmul.mubr.bf16.gmra.mxu0 %v172
    %v222 = vpop.f32.mrf.mxu0
    %v223 = vadd.f32 0.0, %v222
    %v224 = vpop.f32.mrf.mxu0
    %v225 = vpop.f32.mrf.mxu0
    %v226 = vadd.f32 0.0, %v225
    %v227 = vpop.f32.mrf.mxu0
    %228 = vmatprep.mubr.bf16.mxu0 0
    %229 = vmatmul.mubr.bf16.gmra.mxu0 %v175
    %v230 = vpop.f32.mrf.mxu0
    %v231 = vadd.f32 0.0, %v230
    %v232 = vpop.f32.mrf.mxu0
    %v233 = vpop.f32.mrf.mxu0
    %v234 = vadd.f32 0.0, %v233
    %v235 = vpop.f32.mrf.mxu0
    %236 = vmatprep.mubr.bf16.mxu0 0
    %237 = vmatmul.mubr.bf16.gmra.mxu0 %v178
    %v238 = vpop.f32.mrf.mxu0
    %v239 = vadd.f32 0.0, %v238
    %v240 = vpop.f32.mrf.mxu0
    %v241 = vpop.f32.mrf.mxu0
    %v242 = vadd.f32 0.0, %v241
    %v243 = vpop.f32.mrf.mxu0
    %244 = vdwg.mxu0
    %v245 = vld [vmem:[#allocation4] sm:$0xff]
    %v246 = vld [vmem:[#allocation4 + $0x8] sm:$0xf]
    %v247 = vld [vmem:[#allocation4 + $0xc] sm:$0xff]
    %v248 = vld [vmem:[#allocation4 + $0x14] sm:$0xf]
    %v249 = vld [vmem:[#allocation4 + $0x18] sm:$0xff]
    %v250 = vld [vmem:[#allocation4 + $0x20] sm:$0xf]
    %v251 = vld [vmem:[#allocation4 + $0x24] sm:$0xff]
    %v252 = vld [vmem:[#allocation4 + $0x2c] sm:$0xf]
    %v253 = vld [vmem:[#allocation4 + $0x30] sm:$0xff]
    %v254 = vld [vmem:[#allocation4 + $0x38] sm:$0xf]
    %v255 = vld [vmem:[#allocation4 + $0x3c] sm:$0xff]
    %v256 = vld [vmem:[#allocation4 + $0x44] sm:$0xf]
    %v257 = vld [vmem:[#allocation4 + $0x48] sm:$0xff]
    %v258 = vld [vmem:[#allocation4 + $0x50] sm:$0xf]
    %v259 = vld [vmem:[#allocation4 + $0x54] sm:$0xff]
    %v260 = vld [vmem:[#allocation4 + $0x5c] sm:$0xf]
    %v261 = vld [vmem:[#allocation4 + $0x60] sm:$0xff]
    %v262 = vld [vmem:[#allocation4 + $0x68] sm:$0xf]
    %v263 = vld [vmem:[#allocation4 + $0x6c] sm:$0xff]
    %v264 = vld [vmem:[#allocation4 + $0x74] sm:$0xf]
    %v265 = vld [vmem:[#allocation4 + $0x78] sm:$0xff]
    %v266 = vld [vmem:[#allocation4 + $0x80] sm:$0xf]
    %v267 = vld [vmem:[#allocation4 + $0x84] sm:$0xff]
    %v268 = vld [vmem:[#allocation4 + $0x8c] sm:$0xf]
    %v269 = vld [vmem:[#allocation4 + $0x90] sm:$0xff]
    %v270 = vld [vmem:[#allocation4 + $0x98] sm:$0xf]
    %v271 = vld [vmem:[#allocation4 + $0x9c] sm:$0xff]
    %v272 = vld [vmem:[#allocation4 + $0xa4] sm:$0xf]
    %v273 = vld [vmem:[#allocation4 + $0xa8] sm:$0xff]
    %v274 = vld [vmem:[#allocation4 + $0xb0] sm:$0xf]
    %v275 = vld [vmem:[#allocation4 + $0xb4] sm:$0xff]
    %v276 = vld [vmem:[#allocation4 + $0xbc] sm:$0xf]
    %v277 = vld [vmem:[#allocation6] sm:$0xff]
    %v278 = vld [vmem:[#allocation6 + $0x8] sm:$0xf]
    %v279 = vld [vmem:[#allocation6 + $0xc] sm:$0xff]
    %v280 = vld [vmem:[#allocation6 + $0x14] sm:$0xf]
    %v281 = vld [vmem:[#allocation6 + $0x18] sm:$0xff]
    %v282 = vld [vmem:[#allocation6 + $0x20] sm:$0xf]
    %v283 = vld [vmem:[#allocation6 + $0x24] sm:$0xff]
    %v284 = vld [vmem:[#allocation6 + $0x2c] sm:$0xf]
    %v285 = vld [vmem:[#allocation6 + $0x30] sm:$0xff]
    %v286 = vld [vmem:[#allocation6 + $0x38] sm:$0xf]
    %v287 = vld [vmem:[#allocation6 + $0x3c] sm:$0xff]
    %v288 = vld [vmem:[#allocation6 + $0x44] sm:$0xf]
    %v289 = vld [vmem:[#allocation6 + $0x48] sm:$0xff]
    %v290 = vld [vmem:[#allocation6 + $0x50] sm:$0xf]
    %v291 = vld [vmem:[#allocation6 + $0x54] sm:$0xff]
    %v292 = vld [vmem:[#allocation6 + $0x5c] sm:$0xf]
    %v293 = vld [vmem:[#allocation6 + $0x60] sm:$0xff]
    %v294 = vld [vmem:[#allocation6 + $0x68] sm:$0xf]
    %v295 = vld [vmem:[#allocation6 + $0x6c] sm:$0xff]
    %v296 = vld [vmem:[#allocation6 + $0x74] sm:$0xf]
    %v297 = vld [vmem:[#allocation6 + $0x78] sm:$0xff]
    %v298 = vld [vmem:[#allocation6 + $0x80] sm:$0xf]
    %v299 = vld [vmem:[#allocation6 + $0x84] sm:$0xff]
    %v300 = vld [vmem:[#allocation6 + $0x8c] sm:$0xf]
    %v301 = vld [vmem:[#allocation6 + $0x90] sm:$0xff]
    %v302 = vld [vmem:[#allocation6 + $0x98] sm:$0xf]
    %v303 = vld [vmem:[#allocation6 + $0x9c] sm:$0xff]
    %v304 = vld [vmem:[#allocation6 + $0xa4] sm:$0xf]
    %v305 = vld [vmem:[#allocation6 + $0xa8] sm:$0xff]
    %v306 = vld [vmem:[#allocation6 + $0xb0] sm:$0xf]
    %v307 = vld [vmem:[#allocation6 + $0xb4] sm:$0xff]
    %v308 = vld [vmem:[#allocation6 + $0xbc] sm:$0xf]
    %v309 = vld [vmem:[%s4] sm:$0x7]
    %v310 = vld [vmem:[%s5] sm:$0x1]
    %v311 = vpack.c.bf16 %v218, %v215
    %v312 = vpack.c.bf16 %v226, %v223
    %v313 = vpack.c.bf16 %v234, %v231
    %v314 = vpack.c.bf16 %v242, %v239
    %v316 = vlaneseq
    %v317 = vshrl.u32 %v316, 7
    %v318 = vsub.s32 0, %v317
    %v319 = vrot.slane %v309, %v318
    %v320 = vlaneseq
    %v321 = vshrl.u32 %v320, 7
    %v322 = vsub.s32 1, %v321
    %v323 = vrot.slane %v309, %v322
    %v324 = vlaneseq
    %v325 = vshrl.u32 %v324, 7
    %v326 = vsub.s32 2, %v325
    %v327 = vrot.slane %v309, %v326
    %v363 = vunpack.c.l.b16 %v245
    %v364 = vunpack.c.h.b16 %v245
    %v365 = vunpack.c.l.b16 %v246
    %v366 = vunpack.c.l.b16 %v247
    %v367 = vunpack.c.h.b16 %v247
    %v368 = vunpack.c.l.b16 %v248
    %v369 = vunpack.c.l.b16 %v249
    %v370 = vunpack.c.h.b16 %v249
    %v371 = vunpack.c.l.b16 %v250
    %v372 = vunpack.c.l.b16 %v251
    %v373 = vunpack.c.h.b16 %v251
    %v374 = vunpack.c.l.b16 %v252
    %v375 = vunpack.c.l.b16 %v253
    %v376 = vunpack.c.h.b16 %v253
    %v377 = vunpack.c.l.b16 %v254
    %v378 = vunpack.c.l.b16 %v255
    %v379 = vunpack.c.h.b16 %v255
    %v380 = vunpack.c.l.b16 %v256
    %v381 = vunpack.c.l.b16 %v257
    %v382 = vunpack.c.h.b16 %v257
    %v383 = vunpack.c.l.b16 %v258
    %v384 = vunpack.c.l.b16 %v259
    %v385 = vunpack.c.h.b16 %v259
    %v386 = vunpack.c.l.b16 %v260
    %v387 = vunpack.c.l.b16 %v261
    %v388 = vunpack.c.h.b16 %v261
    %v389 = vunpack.c.l.b16 %v262
    %v390 = vunpack.c.l.b16 %v263
    %v391 = vunpack.c.h.b16 %v263
    %v392 = vunpack.c.l.b16 %v264
    %v393 = vunpack.c.l.b16 %v265
    %v394 = vunpack.c.h.b16 %v265
    %v395 = vunpack.c.l.b16 %v266
    %v396 = vunpack.c.l.b16 %v267
    %v397 = vunpack.c.h.b16 %v267
    %v398 = vunpack.c.l.b16 %v268
    %v399 = vunpack.c.l.b16 %v269
    %v400 = vunpack.c.h.b16 %v269
    %v401 = vunpack.c.l.b16 %v270
    %v402 = vunpack.c.l.b16 %v271
    %v403 = vunpack.c.h.b16 %v271
    %v404 = vunpack.c.l.b16 %v272
    %v405 = vunpack.c.l.b16 %v273
    %v406 = vunpack.c.h.b16 %v273
    %v407 = vunpack.c.l.b16 %v274
    %v408 = vunpack.c.l.b16 %v275
    %v409 = vunpack.c.h.b16 %v275
    %v410 = vunpack.c.l.b16 %v276
    %v411 = vpack.c.b16 %v366, %v363
    %v412 = vpack.c.b16 %v367, %v364
    %v413 = vpack.c.b16 %v368, %v365
    %v414 = vpack.c.b16 %v372, %v369
    %v415 = vpack.c.b16 %v373, %v370
    %v416 = vpack.c.b16 %v374, %v371
    %v417 = vpack.c.b16 %v378, %v375
    %v418 = vpack.c.b16 %v379, %v376
    %v419 = vpack.c.b16 %v380, %v377
    %v420 = vpack.c.b16 %v384, %v381
    %v421 = vpack.c.b16 %v385, %v382
    %v422 = vpack.c.b16 %v386, %v383
    %v423 = vpack.c.b16 %v390, %v387
    %v424 = vpack.c.b16 %v391, %v388
    %v425 = vpack.c.b16 %v392, %v389
    %v426 = vpack.c.b16 %v396, %v393
    %v427 = vpack.c.b16 %v397, %v394
    %v428 = vpack.c.b16 %v398, %v395
    %v429 = vpack.c.b16 %v402, %v399
    %v430 = vpack.c.b16 %v403, %v400
    %v431 = vpack.c.b16 %v404, %v401
    %v432 = vpack.c.b16 %v408, %v405
    %v433 = vpack.c.b16 %v409, %v406
    %v434 = vpack.c.b16 %v410, %v407
    %459 = vmatprep.subr.bf16.mxu0 %v433
    %460 = vmatpush1.bf16.msra.mxu0 %v432
    %461 = vmatprep.subr.bf16.mxu0 %v430
    %462 = vmatpush1.bf16.msra.mxu0 %v429
    %463 = vmatprep.subr.bf16.mxu0 %v427
    %464 = vmatpush1.bf16.msra.mxu0 %v426
    %465 = vmatprep.subr.bf16.mxu0 %v424
    %466 = vmatpush1.bf16.msra.mxu0 %v423
    %467 = vmatprep.subr.bf16.mxu0 %v421
    %468 = vmatpush1.bf16.msra.mxu0 %v420
    %469 = vmatprep.subr.bf16.mxu0 %v418
    %470 = vmatpush1.bf16.msra.mxu0 %v417
    %471 = vmatprep.subr.bf16.mxu0 %v415
    %472 = vmatpush1.bf16.msra.mxu0 %v414
    %473 = vmatprep.subr.bf16.mxu0 %v412
    %474 = vmatpush1.bf16.msra.mxu0 %v411
    %475 = vmatprep.subr.bf16.mxu0 0
    %476 = vmatpush2.bf16.msra.mxu0 0
    %477 = vmatprep.subr.bf16.mxu0 0
    %478 = vmatpush2.bf16.msra.mxu0 0
    %479 = vmatprep.subr.bf16.mxu0 0
    %480 = vmatpush2.bf16.msra.mxu0 0
    %481 = vmatprep.subr.bf16.mxu0 0
    %482 = vmatpush2.bf16.msra.mxu0 0
    %483 = vmatprep.subr.bf16.mxu0 0
    %484 = vmatpush2.bf16.msra.mxu0 0
    %485 = vmatprep.subr.bf16.mxu0 0
    %486 = vmatpush2.bf16.msra.mxu0 0
    %487 = vmatprep.subr.bf16.mxu0 0
    %488 = vmatpush2.bf16.msra.mxu0 0
    %489 = vmatprep.subr.bf16.mxu0 0
    %490 = vmatpush2.bf16.msra.mxu0 0
    %491 = vmatprep.mubr.bf16.mxu0 0
    %492 = vmatmul.mubr.bf16.gmra.mxu0 %v311
    %v493 = vpop.f32.mrf.mxu0
    %v494 = vadd.f32 %v319, %v493
    %v495 = vpop.f32.mrf.mxu0
    %v496 = vadd.f32 %v323, %v495
    %v497 = vpop.f32.mrf.mxu0
    %v498 = vadd.f32 %v319, %v497
    %v499 = vpop.f32.mrf.mxu0
    %v500 = vadd.f32 %v323, %v499
    %501 = vmatprep.mubr.bf16.mxu0 0
    %502 = vmatmul.mubr.bf16.gmra.mxu0 %v312
    %v503 = vpop.f32.mrf.mxu0
    %v504 = vadd.f32 %v319, %v503
    %v505 = vpop.f32.mrf.mxu0
    %v506 = vadd.f32 %v323, %v505
    %v507 = vpop.f32.mrf.mxu0
    %v508 = vadd.f32 %v319, %v507
    %v509 = vpop.f32.mrf.mxu0
    %v510 = vadd.f32 %v323, %v509
    %511 = vmatprep.mubr.bf16.mxu0 0
    %512 = vmatmul.mubr.bf16.gmra.mxu0 %v313
    %v513 = vpop.f32.mrf.mxu0
    %v514 = vadd.f32 %v319, %v513
    %v515 = vpop.f32.mrf.mxu0
    %v516 = vadd.f32 %v323, %v515
    %v517 = vpop.f32.mrf.mxu0
    %v518 = vadd.f32 %v319, %v517
    %v519 = vpop.f32.mrf.mxu0
    %v520 = vadd.f32 %v323, %v519
    %521 = vmatprep.mubr.bf16.mxu0 0
    %522 = vmatmul.mubr.bf16.gmra.mxu0 %v314
    %v523 = vpop.f32.mrf.mxu0
    %v524 = vadd.f32 %v319, %v523
    %v525 = vpop.f32.mrf.mxu0
    %v526 = vadd.f32 %v323, %v525
    %v527 = vpop.f32.mrf.mxu0
    %v528 = vadd.f32 %v319, %v527
    %v529 = vpop.f32.mrf.mxu0
    %v530 = vadd.f32 %v323, %v529
    %531 = vdwg.mxu0
    %532 = vmatprep.subr.bf16.mxu0 0
    %533 = vmatpush1.bf16.msra.mxu0 %v434
    %534 = vmatprep.subr.bf16.mxu0 0
    %535 = vmatpush1.bf16.msra.mxu0 %v431
    %536 = vmatprep.subr.bf16.mxu0 0
    %537 = vmatpush1.bf16.msra.mxu0 %v428
    %538 = vmatprep.subr.bf16.mxu0 0
    %539 = vmatpush1.bf16.msra.mxu0 %v425
    %540 = vmatprep.subr.bf16.mxu0 0
    %541 = vmatpush1.bf16.msra.mxu0 %v422
    %542 = vmatprep.subr.bf16.mxu0 0
    %543 = vmatpush1.bf16.msra.mxu0 %v419
    %544 = vmatprep.subr.bf16.mxu0 0
    %545 = vmatpush1.bf16.msra.mxu0 %v416
    %546 = vmatprep.subr.bf16.mxu0 0
    %547 = vmatpush1.bf16.msra.mxu0 %v413
    %548 = vmatprep.subr.bf16.mxu0 0
    %549 = vmatpush2.bf16.msra.mxu0 0
    %550 = vmatprep.subr.bf16.mxu0 0
    %551 = vmatpush2.bf16.msra.mxu0 0
    %552 = vmatprep.subr.bf16.mxu0 0
    %553 = vmatpush2.bf16.msra.mxu0 0
    %554 = vmatprep.subr.bf16.mxu0 0
    %555 = vmatpush2.bf16.msra.mxu0 0
    %556 = vmatprep.subr.bf16.mxu0 0
    %557 = vmatpush2.bf16.msra.mxu0 0
    %558 = vmatprep.subr.bf16.mxu0 0
    %559 = vmatpush2.bf16.msra.mxu0 0
    %560 = vmatprep.subr.bf16.mxu0 0
    %561 = vmatpush2.bf16.msra.mxu0 0
    %562 = vmatprep.subr.bf16.mxu0 0
    %563 = vmatpush2.bf16.msra.mxu0 0
    %564 = vmatprep.mubr.bf16.mxu0 0
    %565 = vmatmul.mubr.bf16.gmra.mxu0 %v311
    %v566 = vpop.f32.mrf.mxu0
    %v567 = vadd.f32 %v327, %v566
    %v568 = vpop.f32.mrf.mxu0
    %v569 = vpop.f32.mrf.mxu0
    %v570 = vadd.f32 %v327, %v569
    %v571 = vpop.f32.mrf.mxu0
    %572 = vmatprep.mubr.bf16.mxu0 0
    %573 = vmatmul.mubr.bf16.gmra.mxu0 %v312
    %v574 = vpop.f32.mrf.mxu0
    %v575 = vadd.f32 %v327, %v574
    %v576 = vpop.f32.mrf.mxu0
    %v577 = vpop.f32.mrf.mxu0
    %v578 = vadd.f32 %v327, %v577
    %v579 = vpop.f32.mrf.mxu0
    %580 = vmatprep.mubr.bf16.mxu0 0
    %581 = vmatmul.mubr.bf16.gmra.mxu0 %v313
    %v582 = vpop.f32.mrf.mxu0
    %v583 = vadd.f32 %v327, %v582
    %v584 = vpop.f32.mrf.mxu0
    %v585 = vpop.f32.mrf.mxu0
    %v586 = vadd.f32 %v327, %v585
    %v587 = vpop.f32.mrf.mxu0
    %588 = vmatprep.mubr.bf16.mxu0 0
    %589 = vmatmul.mubr.bf16.gmra.mxu0 %v314
    %v590 = vpop.f32.mrf.mxu0
    %v591 = vadd.f32 %v327, %v590
    %v592 = vpop.f32.mrf.mxu0
    %v593 = vpop.f32.mrf.mxu0
    %v594 = vadd.f32 %v327, %v593
    %v595 = vpop.f32.mrf.mxu0
    %596 = vdwg.mxu0
    %597 = vst [vmem:[#allocation2] sm:$0xff] %v494
    %598 = vst [vmem:[#allocation2 + $0x8] sm:$0xff] %v496
    %599 = vst [vmem:[#allocation2 + $0x10] sm:$0xff] %v567
    %600 = vst [vmem:[#allocation2 + $0x18] sm:$0xff] %v498
    %601 = vst [vmem:[#allocation2 + $0x20] sm:$0xff] %v500
    %602 = vst [vmem:[#allocation2 + $0x28] sm:$0xff] %v570
    %603 = vst [vmem:[#allocation2 + $0x30] sm:$0xff] %v504
    %604 = vst [vmem:[#allocation2 + $0x38] sm:$0xff] %v506
    %605 = vst [vmem:[#allocation2 + $0x40] sm:$0xff] %v575
    %606 = vst [vmem:[#allocation2 + $0x48] sm:$0xff] %v508
    %607 = vst [vmem:[#allocation2 + $0x50] sm:$0xff] %v510
    %608 = vst [vmem:[#allocation2 + $0x58] sm:$0xff] %v578
    %609 = vst [vmem:[#allocation2 + $0x60] sm:$0xff] %v514
    %610 = vst [vmem:[#allocation2 + $0x68] sm:$0xff] %v516
    %611 = vst [vmem:[#allocation2 + $0x70] sm:$0xff] %v583
    %612 = vst [vmem:[#allocation2 + $0x78] sm:$0xff] %v518
    %613 = vst [vmem:[#allocation2 + $0x80] sm:$0xff] %v520
    %614 = vst [vmem:[#allocation2 + $0x88] sm:$0xff] %v586
    %615 = vst [vmem:[#allocation2 + $0x90] sm:$0xff] %v524
    %616 = vst [vmem:[#allocation2 + $0x98] sm:$0xff] %v526
    %617 = vst [vmem:[#allocation2 + $0xa0] sm:$0xff] %v591
    %618 = vst [vmem:[#allocation2 + $0xa8] sm:$0xff] %v528
    %619 = vst [vmem:[#allocation2 + $0xb0] sm:$0xff] %v530
    %620 = vst [vmem:[#allocation2 + $0xb8] sm:$0xff] %v594
    %v622 = vlaneseq
    %v623 = vshrl.u32 %v622, 7
    %v624 = vsub.s32 0, %v623
    %v625 = vrot.slane %v310, %v624
    %v627 = vld [vmem:[#allocation2] sm:$0xff]
    %v628 = vld [vmem:[#allocation2 + $0x8] sm:$0xff]
    %v629 = vld [vmem:[#allocation2 + $0x10] sm:$0xff]
    %v662 = vunpack.c.l.b16 %v277
    %v663 = vunpack.c.h.b16 %v277
    %v664 = vunpack.c.l.b16 %v278
    %v665 = vunpack.c.l.b16 %v279
    %v666 = vunpack.c.h.b16 %v279
    %v667 = vunpack.c.l.b16 %v280
    %v668 = vunpack.c.l.b16 %v281
    %v669 = vunpack.c.h.b16 %v281
    %v670 = vunpack.c.l.b16 %v282
    %v671 = vunpack.c.l.b16 %v283
    %v672 = vunpack.c.h.b16 %v283
    %v673 = vunpack.c.l.b16 %v284
    %v674 = vunpack.c.l.b16 %v285
    %v675 = vunpack.c.h.b16 %v285
    %v676 = vunpack.c.l.b16 %v286
    %v677 = vunpack.c.l.b16 %v287
    %v678 = vunpack.c.h.b16 %v287
    %v679 = vunpack.c.l.b16 %v288
    %v680 = vunpack.c.l.b16 %v289
    %v681 = vunpack.c.h.b16 %v289
    %v682 = vunpack.c.l.b16 %v290
    %v683 = vunpack.c.l.b16 %v291
    %v684 = vunpack.c.h.b16 %v291
    %v685 = vunpack.c.l.b16 %v292
    %v686 = vunpack.c.l.b16 %v293
    %v687 = vunpack.c.h.b16 %v293
    %v688 = vunpack.c.l.b16 %v294
    %v689 = vunpack.c.l.b16 %v295
    %v690 = vunpack.c.h.b16 %v295
    %v691 = vunpack.c.l.b16 %v296
    %v692 = vunpack.c.l.b16 %v297
    %v693 = vunpack.c.h.b16 %v297
    %v694 = vunpack.c.l.b16 %v298
    %v695 = vunpack.c.l.b16 %v299
    %v696 = vunpack.c.h.b16 %v299
    %v697 = vunpack.c.l.b16 %v300
    %v698 = vunpack.c.l.b16 %v301
    %v699 = vunpack.c.h.b16 %v301
    %v700 = vunpack.c.l.b16 %v302
    %v701 = vunpack.c.l.b16 %v303
    %v702 = vunpack.c.h.b16 %v303
    %v703 = vunpack.c.l.b16 %v304
    %v704 = vunpack.c.l.b16 %v305
    %v705 = vunpack.c.h.b16 %v305
    %v706 = vunpack.c.l.b16 %v306
    %v707 = vunpack.c.l.b16 %v307
    %v708 = vunpack.c.h.b16 %v307
    %v709 = vunpack.c.l.b16 %v308
    %v710 = vpack.c.b16 %v665, %v662
    %v711 = vpack.c.b16 %v666, %v663
    %v712 = vpack.c.b16 %v667, %v664
    %v713 = vpack.c.b16 %v671, %v668
    %v714 = vpack.c.b16 %v672, %v669
    %v715 = vpack.c.b16 %v673, %v670
    %v716 = vpack.c.b16 %v677, %v674
    %v717 = vpack.c.b16 %v678, %v675
    %v718 = vpack.c.b16 %v679, %v676
    %v719 = vpack.c.b16 %v683, %v680
    %v720 = vpack.c.b16 %v684, %v681
    %v721 = vpack.c.b16 %v685, %v682
    %v722 = vpack.c.b16 %v689, %v686
    %v723 = vpack.c.b16 %v690, %v687
    %v724 = vpack.c.b16 %v691, %v688
    %v725 = vpack.c.b16 %v695, %v692
    %v726 = vpack.c.b16 %v696, %v693
    %v727 = vpack.c.b16 %v697, %v694
    %v728 = vpack.c.b16 %v701, %v698
    %v729 = vpack.c.b16 %v702, %v699
    %v730 = vpack.c.b16 %v703, %v700
    %v731 = vpack.c.b16 %v707, %v704
    %v732 = vpack.c.b16 %v708, %v705
    %v733 = vpack.c.b16 %v709, %v706
    %758 = vmatprep.subr.bf16.mxu0 %v732
    %759 = vmatpush1.bf16.msra.mxu0 %v731
    %760 = vmatprep.subr.bf16.mxu0 %v729
    %761 = vmatpush1.bf16.msra.mxu0 %v728
    %762 = vmatprep.subr.bf16.mxu0 %v726
    %763 = vmatpush1.bf16.msra.mxu0 %v725
    %764 = vmatprep.subr.bf16.mxu0 %v723
    %765 = vmatpush1.bf16.msra.mxu0 %v722
    %766 = vmatprep.subr.bf16.mxu0 %v720
    %767 = vmatpush1.bf16.msra.mxu0 %v719
    %768 = vmatprep.subr.bf16.mxu0 %v717
    %769 = vmatpush1.bf16.msra.mxu0 %v716
    %770 = vmatprep.subr.bf16.mxu0 %v714
    %771 = vmatpush1.bf16.msra.mxu0 %v713
    %772 = vmatprep.subr.bf16.mxu0 %v711
    %773 = vmatpush1.bf16.msra.mxu0 %v710
    %774 = vmatprep.subr.bf16.mxu0 0
    %775 = vmatpush2.bf16.msra.mxu0 0
    %776 = vmatprep.subr.bf16.mxu0 0
    %777 = vmatpush2.bf16.msra.mxu0 0
    %778 = vmatprep.subr.bf16.mxu0 0
    %779 = vmatpush2.bf16.msra.mxu0 0
    %780 = vmatprep.subr.bf16.mxu0 0
    %781 = vmatpush2.bf16.msra.mxu0 0
    %782 = vmatprep.subr.bf16.mxu0 0
    %783 = vmatpush2.bf16.msra.mxu0 0
    %784 = vmatprep.subr.bf16.mxu0 0
    %785 = vmatpush2.bf16.msra.mxu0 0
    %786 = vmatprep.subr.bf16.mxu0 0
    %787 = vmatpush2.bf16.msra.mxu0 0
    %788 = vmatprep.subr.bf16.mxu0 0
    %789 = vmatpush2.bf16.msra.mxu0 0
    %790 = vmatprep.mubr.bf16.mxu0 0
    %791 = vmatmul.mubr.bf16.gmra.mxu0 0
    %v792 = vpop.f32.mrf.mxu0
    %v793 = vadd.f32 0.0, %v792
    %v794 = vpop.f32.mrf.mxu0
    %v795 = vadd.f32 0.0, %v794
    %v796 = vpop.f32.mrf.mxu0
    %v797 = vpop.f32.mrf.mxu0
    %798 = vdwg.mxu0
    %799 = vmatprep.subr.bf16.mxu0 0
    %800 = vmatpush1.bf16.msra.mxu0 %v733
    %801 = vmatprep.subr.bf16.mxu0 0
    %802 = vmatpush1.bf16.msra.mxu0 %v730
    %803 = vmatprep.subr.bf16.mxu0 0
    %804 = vmatpush1.bf16.msra.mxu0 %v727
    %805 = vmatprep.subr.bf16.mxu0 0
    %806 = vmatpush1.bf16.msra.mxu0 %v724
    %807 = vmatprep.subr.bf16.mxu0 0
    %808 = vmatpush1.bf16.msra.mxu0 %v721
    %809 = vmatprep.subr.bf16.mxu0 0
    %810 = vmatpush1.bf16.msra.mxu0 %v718
    %811 = vmatprep.subr.bf16.mxu0 0
    %812 = vmatpush1.bf16.msra.mxu0 %v715
    %813 = vmatprep.subr.bf16.mxu0 0
    %814 = vmatpush1.bf16.msra.mxu0 %v712
    %815 = vmatprep.subr.bf16.mxu0 0
    %816 = vmatpush2.bf16.msra.mxu0 0
    %817 = vmatprep.subr.bf16.mxu0 0
    %818 = vmatpush2.bf16.msra.mxu0 0
    %819 = vmatprep.subr.bf16.mxu0 0
    %820 = vmatpush2.bf16.msra.mxu0 0
    %821 = vmatprep.subr.bf16.mxu0 0
    %822 = vmatpush2.bf16.msra.mxu0 0
    %823 = vmatprep.subr.bf16.mxu0 0
    %824 = vmatpush2.bf16.msra.mxu0 0
    %825 = vmatprep.subr.bf16.mxu0 0
    %826 = vmatpush2.bf16.msra.mxu0 0
    %827 = vmatprep.subr.bf16.mxu0 0
    %828 = vmatpush2.bf16.msra.mxu0 0
    %829 = vmatprep.subr.bf16.mxu0 0
    %830 = vmatpush2.bf16.msra.mxu0 0
    %831 = vmatprep.mubr.bf16.mxu0 0
    %832 = vmatmul.mubr.bf16.gmra.mxu0 0
    %v833 = vpop.f32.mrf.mxu0
    %v834 = vadd.f32 0.0, %v833
    %v835 = vpop.f32.mrf.mxu0
    %v836 = vpop.f32.mrf.mxu0
    %v837 = vpop.f32.mrf.mxu0
    %838 = vdwg.mxu0
    %v839 = vadd.f32 %v627, %v793
    %v840 = vxor.u32 %v839, 2147483648
    %v841 = vmul.f32 %v840, 1.442695
    %v842 = vpow.pop %v841
    %v843 = vadd.f32 %v842, 1.0
    %v844 = vrcp.pop %v843
    %v845 = vmul.f32 1.0, %v844
    %v846 = vadd.f32 %v628, %v795
    %v847 = vxor.u32 %v846, 2147483648
    %v848 = vmul.f32 %v847, 1.442695
    %v849 = vpow.pop %v848
    %v850 = vadd.f32 %v849, 1.0
    %v851 = vrcp.pop %v850
    %v852 = vmul.f32 1.0, %v851
    %v853 = vadd.f32 %v834, %v625
    %v854 = vmul.f32 %v845, %v853
    %v855 = vadd.f32 %v629, %v854
    %v856 = vtanh.pop %v855
    %v857 = vsub.f32 1.0, %v852
    %v858 = vmul.f32 %v857, %v856
    %v859 = vmul.f32 %v852, 0.0
    %v860 = vadd.f32 %v858, %v859
    %861 = vst [vmem:[#allocation3] sm:$0xff] %v860
    %s862 = scalar_lea.vmem [#allocation2], 24
    %v863 = vld [vmem:[%s862] sm:$0xff]
    %v864 = vld [vmem:[%s862 + $0x8] sm:$0xff]
    %v865 = vld [vmem:[%s862 + $0x10] sm:$0xff]
    %v866 = vpack.c.bf16 %v860, %v860
    %867 = vmatprep.subr.bf16.mxu0 %v732
    %868 = vmatpush1.bf16.msra.mxu0 %v731
    %869 = vmatprep.subr.bf16.mxu0 %v729
    %870 = vmatpush1.bf16.msra.mxu0 %v728
    %871 = vmatprep.subr.bf16.mxu0 %v726
    %872 = vmatpush1.bf16.msra.mxu0 %v725
    %873 = vmatprep.subr.bf16.mxu0 %v723
    %874 = vmatpush1.bf16.msra.mxu0 %v722
    %875 = vmatprep.subr.bf16.mxu0 %v720
    %876 = vmatpush1.bf16.msra.mxu0 %v719
    %877 = vmatprep.subr.bf16.mxu0 %v717
    %878 = vmatpush1.bf16.msra.mxu0 %v716
    %879 = vmatprep.subr.bf16.mxu0 %v714
    %880 = vmatpush1.bf16.msra.mxu0 %v713
    %881 = vmatprep.subr.bf16.mxu0 %v711
    %882 = vmatpush1.bf16.msra.mxu0 %v710
    %883 = vmatprep.subr.bf16.mxu0 0
    %884 = vmatpush2.bf16.msra.mxu0 0
    %885 = vmatprep.subr.bf16.mxu0 0
    %886 = vmatpush2.bf16.msra.mxu0 0
    %887 = vmatprep.subr.bf16.mxu0 0
    %888 = vmatpush2.bf16.msra.mxu0 0
    %889 = vmatprep.subr.bf16.mxu0 0
    %890 = vmatpush2.bf16.msra.mxu0 0
    %891 = vmatprep.subr.bf16.mxu0 0
    %892 = vmatpush2.bf16.msra.mxu0 0
    %893 = vmatprep.subr.bf16.mxu0 0
    %894 = vmatpush2.bf16.msra.mxu0 0
    %895 = vmatprep.subr.bf16.mxu0 0
    %896 = vmatpush2.bf16.msra.mxu0 0
    %897 = vmatprep.subr.bf16.mxu0 0
    %898 = vmatpush2.bf16.msra.mxu0 0
    %899 = vmatprep.mubr.bf16.mxu0 0
    %900 = vmatmul.mubr.bf16.gmra.mxu0 %v866
    %v901 = vpop.f32.mrf.mxu0
    %v902 = vadd.f32 0.0, %v901
    %v903 = vpop.f32.mrf.mxu0
    %v904 = vadd.f32 0.0, %v903
    %v905 = vpop.f32.mrf.mxu0
    %v906 = vpop.f32.mrf.mxu0
    %907 = vdwg.mxu0
    %908 = vmatprep.subr.bf16.mxu0 0
    %909 = vmatpush1.bf16.msra.mxu0 %v733
    %910 = vmatprep.subr.bf16.mxu0 0
    %911 = vmatpush1.bf16.msra.mxu0 %v730
    %912 = vmatprep.subr.bf16.mxu0 0
    %913 = vmatpush1.bf16.msra.mxu0 %v727
    %914 = vmatprep.subr.bf16.mxu0 0
    %915 = vmatpush1.bf16.msra.mxu0 %v724
    %916 = vmatprep.subr.bf16.mxu0 0
    %917 = vmatpush1.bf16.msra.mxu0 %v721
    %918 = vmatprep.subr.bf16.mxu0 0
    %919 = vmatpush1.bf16.msra.mxu0 %v718
    %920 = vmatprep.subr.bf16.mxu0 0
    %921 = vmatpush1.bf16.msra.mxu0 %v715
    %922 = vmatprep.subr.bf16.mxu0 0
    %923 = vmatpush1.bf16.msra.mxu0 %v712
    %924 = vmatprep.subr.bf16.mxu0 0
    %925 = vmatpush2.bf16.msra.mxu0 0
    %926 = vmatprep.subr.bf16.mxu0 0
    %927 = vmatpush2.bf16.msra.mxu0 0
    %928 = vmatprep.subr.bf16.mxu0 0
    %929 = vmatpush2.bf16.msra.mxu0 0
    %930 = vmatprep.subr.bf16.mxu0 0
    %931 = vmatpush2.bf16.msra.mxu0 0
    %932 = vmatprep.subr.bf16.mxu0 0
    %933 = vmatpush2.bf16.msra.mxu0 0
    %934 = vmatprep.subr.bf16.mxu0 0
    %935 = vmatpush2.bf16.msra.mxu0 0
    %936 = vmatprep.subr.bf16.mxu0 0
    %937 = vmatpush2.bf16.msra.mxu0 0
    %938 = vmatprep.subr.bf16.mxu0 0
    %939 = vmatpush2.bf16.msra.mxu0 0
    %940 = vmatprep.mubr.bf16.mxu0 0
    %941 = vmatmul.mubr.bf16.gmra.mxu0 %v866
    %v942 = vpop.f32.mrf.mxu0
    %v943 = vadd.f32 0.0, %v942
    %v944 = vpop.f32.mrf.mxu0
    %v945 = vpop.f32.mrf.mxu0
    %v946 = vpop.f32.mrf.mxu0
    %947 = vdwg.mxu0
    %v948 = vadd.f32 %v863, %v902
    %v949 = vxor.u32 %v948, 2147483648
    %v950 = vmul.f32 %v949, 1.442695
    %v951 = vpow.pop %v950
    %v952 = vadd.f32 %v951, 1.0
    %v953 = vrcp.pop %v952
    %v954 = vmul.f32 1.0, %v953
    %v955 = vadd.f32 %v864, %v904
    %v956 = vxor.u32 %v955, 2147483648
    %v957 = vmul.f32 %v956, 1.442695
    %v958 = vpow.pop %v957
    %v959 = vadd.f32 %v958, 1.0
    %v960 = vrcp.pop %v959
    %v961 = vmul.f32 1.0, %v960
    %v962 = vadd.f32 %v943, %v625
    %v963 = vmul.f32 %v954, %v962
    %v964 = vadd.f32 %v865, %v963
    %v965 = vtanh.pop %v964
    %v966 = vsub.f32 1.0, %v961
    %v967 = vmul.f32 %v966, %v965
    %v968 = vmul.f32 %v961, %v860
    %v969 = vadd.f32 %v967, %v968
    %s970 = scalar_lea.vmem [#allocation3], 8
    %971 = vst [vmem:[%s970] sm:$0xff] %v969
    %s972 = scalar_lea.vmem [#allocation2], 48
    %v973 = vld [vmem:[%s972] sm:$0xff]
    %v974 = vld [vmem:[%s972 + $0x8] sm:$0xff]
    %v975 = vld [vmem:[%s972 + $0x10] sm:$0xff]
    %v976 = vpack.c.bf16 %v969, %v969
    %977 = vmatprep.subr.bf16.mxu0 %v732
    %978 = vmatpush1.bf16.msra.mxu0 %v731
    %979 = vmatprep.subr.bf16.mxu0 %v729
    %980 = vmatpush1.bf16.msra.mxu0 %v728
    %981 = vmatprep.subr.bf16.mxu0 %v726
    %982 = vmatpush1.bf16.msra.mxu0 %v725
    %983 = vmatprep.subr.bf16.mxu0 %v723
    %984 = vmatpush1.bf16.msra.mxu0 %v722
    %985 = vmatprep.subr.bf16.mxu0 %v720
    %986 = vmatpush1.bf16.msra.mxu0 %v719
    %987 = vmatprep.subr.bf16.mxu0 %v717
    %988 = vmatpush1.bf16.msra.mxu0 %v716
    %989 = vmatprep.subr.bf16.mxu0 %v714
    %990 = vmatpush1.bf16.msra.mxu0 %v713
    %991 = vmatprep.subr.bf16.mxu0 %v711
    %992 = vmatpush1.bf16.msra.mxu0 %v710
    %993 = vmatprep.subr.bf16.mxu0 0
    %994 = vmatpush2.bf16.msra.mxu0 0
    %995 = vmatprep.subr.bf16.mxu0 0
    %996 = vmatpush2.bf16.msra.mxu0 0
    %997 = vmatprep.subr.bf16.mxu0 0
    %998 = vmatpush2.bf16.msra.mxu0 0
    %999 = vmatprep.subr.bf16.mxu0 0
    %1000 = vmatpush2.bf16.msra.mxu0 0
    %1001 = vmatprep.subr.bf16.mxu0 0
    %1002 = vmatpush2.bf16.msra.mxu0 0
    %1003 = vmatprep.subr.bf16.mxu0 0
    %1004 = vmatpush2.bf16.msra.mxu0 0
    %1005 = vmatprep.subr.bf16.mxu0 0
    %1006 = vmatpush2.bf16.msra.mxu0 0
    %1007 = vmatprep.subr.bf16.mxu0 0
    %1008 = vmatpush2.bf16.msra.mxu0 0
    %1009 = vmatprep.mubr.bf16.mxu0 0
    %1010 = vmatmul.mubr.bf16.gmra.mxu0 %v976
    %v1011 = vpop.f32.mrf.mxu0
    %v1012 = vadd.f32 0.0, %v1011
    %v1013 = vpop.f32.mrf.mxu0
    %v1014 = vadd.f32 0.0, %v1013
    %v1015 = vpop.f32.mrf.mxu0
    %v1016 = vpop.f32.mrf.mxu0
    %1017 = vdwg.mxu0
    %1018 = vmatprep.subr.bf16.mxu0 0
    %1019 = vmatpush1.bf16.msra.mxu0 %v733
    %1020 = vmatprep.subr.bf16.mxu0 0
    %1021 = vmatpush1.bf16.msra.mxu0 %v730
    %1022 = vmatprep.subr.bf16.mxu0 0
    %1023 = vmatpush1.bf16.msra.mxu0 %v727
    %1024 = vmatprep.subr.bf16.mxu0 0
    %1025 = vmatpush1.bf16.msra.mxu0 %v724
    %1026 = vmatprep.subr.bf16.mxu0 0
    %1027 = vmatpush1.bf16.msra.mxu0 %v721
    %1028 = vmatprep.subr.bf16.mxu0 0
    %1029 = vmatpush1.bf16.msra.mxu0 %v718
    %1030 = vmatprep.subr.bf16.mxu0 0
    %1031 = vmatpush1.bf16.msra.mxu0 %v715
    %1032 = vmatprep.subr.bf16.mxu0 0
    %1033 = vmatpush1.bf16.msra.mxu0 %v712
    %1034 = vmatprep.subr.bf16.mxu0 0
    %1035 = vmatpush2.bf16.msra.mxu0 0
    %1036 = vmatprep.subr.bf16.mxu0 0
    %1037 = vmatpush2.bf16.msra.mxu0 0
    %1038 = vmatprep.subr.bf16.mxu0 0
    %1039 = vmatpush2.bf16.msra.mxu0 0
    %1040 = vmatprep.subr.bf16.mxu0 0
    %1041 = vmatpush2.bf16.msra.mxu0 0
    %1042 = vmatprep.subr.bf16.mxu0 0
    %1043 = vmatpush2.bf16.msra.mxu0 0
    %1044 = vmatprep.subr.bf16.mxu0 0
    %1045 = vmatpush2.bf16.msra.mxu0 0
    %1046 = vmatprep.subr.bf16.mxu0 0
    %1047 = vmatpush2.bf16.msra.mxu0 0
    %1048 = vmatprep.subr.bf16.mxu0 0
    %1049 = vmatpush2.bf16.msra.mxu0 0
    %1050 = vmatprep.mubr.bf16.mxu0 0
    %1051 = vmatmul.mubr.bf16.gmra.mxu0 %v976
    %v1052 = vpop.f32.mrf.mxu0
    %v1053 = vadd.f32 0.0, %v1052
    %v1054 = vpop.f32.mrf.mxu0
    %v1055 = vpop.f32.mrf.mxu0
    %v1056 = vpop.f32.mrf.mxu0
    %1057 = vdwg.mxu0
    %v1058 = vadd.f32 %v973, %v1012
    %v1059 = vxor.u32 %v1058, 2147483648
    %v1060 = vmul.f32 %v1059, 1.442695
    %v1061 = vpow.pop %v1060
    %v1062 = vadd.f32 %v1061, 1.0
    %v1063 = vrcp.pop %v1062
    %v1064 = vmul.f32 1.0, %v1063
    %v1065 = vadd.f32 %v974, %v1014
    %v1066 = vxor.u32 %v1065, 2147483648
    %v1067 = vmul.f32 %v1066, 1.442695
    %v1068 = vpow.pop %v1067
    %v1069 = vadd.f32 %v1068, 1.0
    %v1070 = vrcp.pop %v1069
    %v1071 = vmul.f32 1.0, %v1070
    %v1072 = vadd.f32 %v1053, %v625
    %v1073 = vmul.f32 %v1064, %v1072
    %v1074 = vadd.f32 %v975, %v1073
    %v1075 = vtanh.pop %v1074
    %v1076 = vsub.f32 1.0, %v1071
    %v1077 = vmul.f32 %v1076, %v1075
    %v1078 = vmul.f32 %v1071, %v969
    %v1079 = vadd.f32 %v1077, %v1078
    %s1080 = scalar_lea.vmem [#allocation3], 16
    %1081 = vst [vmem:[%s1080] sm:$0xff] %v1079
    %s1082 = scalar_lea.vmem [#allocation2], 72
    %v1083 = vld [vmem:[%s1082] sm:$0xff]
    %v1084 = vld [vmem:[%s1082 + $0x8] sm:$0xff]
    %v1085 = vld [vmem:[%s1082 + $0x10] sm:$0xff]
    %v1086 = vpack.c.bf16 %v1079, %v1079
    %1087 = vmatprep.subr.bf16.mxu0 %v732
    %1088 = vmatpush1.bf16.msra.mxu0 %v731
    %1089 = vmatprep.subr.bf16.mxu0 %v729
    %1090 = vmatpush1.bf16.msra.mxu0 %v728
    %1091 = vmatprep.subr.bf16.mxu0 %v726
    %1092 = vmatpush1.bf16.msra.mxu0 %v725
    %1093 = vmatprep.subr.bf16.mxu0 %v723
    %1094 = vmatpush1.bf16.msra.mxu0 %v722
    %1095 = vmatprep.subr.bf16.mxu0 %v720
    %1096 = vmatpush1.bf16.msra.mxu0 %v719
    %1097 = vmatprep.subr.bf16.mxu0 %v717
    %1098 = vmatpush1.bf16.msra.mxu0 %v716
    %1099 = vmatprep.subr.bf16.mxu0 %v714
    %1100 = vmatpush1.bf16.msra.mxu0 %v713
    %1101 = vmatprep.subr.bf16.mxu0 %v711
    %1102 = vmatpush1.bf16.msra.mxu0 %v710
    %1103 = vmatprep.subr.bf16.mxu0 0
    %1104 = vmatpush2.bf16.msra.mxu0 0
    %1105 = vmatprep.subr.bf16.mxu0 0
    %1106 = vmatpush2.bf16.msra.mxu0 0
    %1107 = vmatprep.subr.bf16.mxu0 0
    %1108 = vmatpush2.bf16.msra.mxu0 0
    %1109 = vmatprep.subr.bf16.mxu0 0
    %1110 = vmatpush2.bf16.msra.mxu0 0
    %1111 = vmatprep.subr.bf16.mxu0 0
    %1112 = vmatpush2.bf16.msra.mxu0 0
    %1113 = vmatprep.subr.bf16.mxu0 0
    %1114 = vmatpush2.bf16.msra.mxu0 0
    %1115 = vmatprep.subr.bf16.mxu0 0
    %1116 = vmatpush2.bf16.msra.mxu0 0
    %1117 = vmatprep.subr.bf16.mxu0 0
    %1118 = vmatpush2.bf16.msra.mxu0 0
    %1119 = vmatprep.mubr.bf16.mxu0 0
    %1120 = vmatmul.mubr.bf16.gmra.mxu0 %v1086
    %v1121 = vpop.f32.mrf.mxu0
    %v1122 = vadd.f32 0.0, %v1121
    %v1123 = vpop.f32.mrf.mxu0
    %v1124 = vadd.f32 0.0, %v1123
    %v1125 = vpop.f32.mrf.mxu0
    %v1126 = vpop.f32.mrf.mxu0
    %1127 = vdwg.mxu0
    %1128 = vmatprep.subr.bf16.mxu0 0
    %1129 = vmatpush1.bf16.msra.mxu0 %v733
    %1130 = vmatprep.subr.bf16.mxu0 0
    %1131 = vmatpush1.bf16.msra.mxu0 %v730
    %1132 = vmatprep.subr.bf16.mxu0 0
    %1133 = vmatpush1.bf16.msra.mxu0 %v727
    %1134 = vmatprep.subr.bf16.mxu0 0
    %1135 = vmatpush1.bf16.msra.mxu0 %v724
    %1136 = vmatprep.subr.bf16.mxu0 0
    %1137 = vmatpush1.bf16.msra.mxu0 %v721
    %1138 = vmatprep.subr.bf16.mxu0 0
    %1139 = vmatpush1.bf16.msra.mxu0 %v718
    %1140 = vmatprep.subr.bf16.mxu0 0
    %1141 = vmatpush1.bf16.msra.mxu0 %v715
    %1142 = vmatprep.subr.bf16.mxu0 0
    %1143 = vmatpush1.bf16.msra.mxu0 %v712
    %1144 = vmatprep.subr.bf16.mxu0 0
    %1145 = vmatpush2.bf16.msra.mxu0 0
    %1146 = vmatprep.subr.bf16.mxu0 0
    %1147 = vmatpush2.bf16.msra.mxu0 0
    %1148 = vmatprep.subr.bf16.mxu0 0
    %1149 = vmatpush2.bf16.msra.mxu0 0
    %1150 = vmatprep.subr.bf16.mxu0 0
    %1151 = vmatpush2.bf16.msra.mxu0 0
    %1152 = vmatprep.subr.bf16.mxu0 0
    %1153 = vmatpush2.bf16.msra.mxu0 0
    %1154 = vmatprep.subr.bf16.mxu0 0
    %1155 = vmatpush2.bf16.msra.mxu0 0
    %1156 = vmatprep.subr.bf16.mxu0 0
    %1157 = vmatpush2.bf16.msra.mxu0 0
    %1158 = vmatprep.subr.bf16.mxu0 0
    %1159 = vmatpush2.bf16.msra.mxu0 0
    %1160 = vmatprep.mubr.bf16.mxu0 0
    %1161 = vmatmul.mubr.bf16.gmra.mxu0 %v1086
    %v1162 = vpop.f32.mrf.mxu0
    %v1163 = vadd.f32 0.0, %v1162
    %v1164 = vpop.f32.mrf.mxu0
    %v1165 = vpop.f32.mrf.mxu0
    %v1166 = vpop.f32.mrf.mxu0
    %1167 = vdwg.mxu0
    %v1168 = vadd.f32 %v1083, %v1122
    %v1169 = vxor.u32 %v1168, 2147483648
    %v1170 = vmul.f32 %v1169, 1.442695
    %v1171 = vpow.pop %v1170
    %v1172 = vadd.f32 %v1171, 1.0
    %v1173 = vrcp.pop %v1172
    %v1174 = vmul.f32 1.0, %v1173
    %v1175 = vadd.f32 %v1084, %v1124
    %v1176 = vxor.u32 %v1175, 2147483648
    %v1177 = vmul.f32 %v1176, 1.442695
    %v1178 = vpow.pop %v1177
    %v1179 = vadd.f32 %v1178, 1.0
    %v1180 = vrcp.pop %v1179
    %v1181 = vmul.f32 1.0, %v1180
    %v1182 = vadd.f32 %v1163, %v625
    %v1183 = vmul.f32 %v1174, %v1182
    %v1184 = vadd.f32 %v1085, %v1183
    %v1185 = vtanh.pop %v1184
    %v1186 = vsub.f32 1.0, %v1181
    %v1187 = vmul.f32 %v1186, %v1185
    %v1188 = vmul.f32 %v1181, %v1079
    %v1189 = vadd.f32 %v1187, %v1188
    %s1190 = scalar_lea.vmem [#allocation3], 24
    %1191 = vst [vmem:[%s1190] sm:$0xff] %v1189
    %s1192 = scalar_lea.vmem [#allocation2], 96
    %v1193 = vld [vmem:[%s1192] sm:$0xff]
    %v1194 = vld [vmem:[%s1192 + $0x8] sm:$0xff]
    %v1195 = vld [vmem:[%s1192 + $0x10] sm:$0xff]
    %v1196 = vpack.c.bf16 %v1189, %v1189
    %1197 = vmatprep.subr.bf16.mxu0 %v732
    %1198 = vmatpush1.bf16.msra.mxu0 %v731
    %1199 = vmatprep.subr.bf16.mxu0 %v729
    %1200 = vmatpush1.bf16.msra.mxu0 %v728
    %1201 = vmatprep.subr.bf16.mxu0 %v726
    %1202 = vmatpush1.bf16.msra.mxu0 %v725
    %1203 = vmatprep.subr.bf16.mxu0 %v723
    %1204 = vmatpush1.bf16.msra.mxu0 %v722
    %1205 = vmatprep.subr.bf16.mxu0 %v720
    %1206 = vmatpush1.bf16.msra.mxu0 %v719
    %1207 = vmatprep.subr.bf16.mxu0 %v717
    %1208 = vmatpush1.bf16.msra.mxu0 %v716
    %1209 = vmatprep.subr.bf16.mxu0 %v714
    %1210 = vmatpush1.bf16.msra.mxu0 %v713
    %1211 = vmatprep.subr.bf16.mxu0 %v711
    %1212 = vmatpush1.bf16.msra.mxu0 %v710
    %1213 = vmatprep.subr.bf16.mxu0 0
    %1214 = vmatpush2.bf16.msra.mxu0 0
    %1215 = vmatprep.subr.bf16.mxu0 0
    %1216 = vmatpush2.bf16.msra.mxu0 0
    %1217 = vmatprep.subr.bf16.mxu0 0
    %1218 = vmatpush2.bf16.msra.mxu0 0
    %1219 = vmatprep.subr.bf16.mxu0 0
    %1220 = vmatpush2.bf16.msra.mxu0 0
    %1221 = vmatprep.subr.bf16.mxu0 0
    %1222 = vmatpush2.bf16.msra.mxu0 0
    %1223 = vmatprep.subr.bf16.mxu0 0
    %1224 = vmatpush2.bf16.msra.mxu0 0
    %1225 = vmatprep.subr.bf16.mxu0 0
    %1226 = vmatpush2.bf16.msra.mxu0 0
    %1227 = vmatprep.subr.bf16.mxu0 0
    %1228 = vmatpush2.bf16.msra.mxu0 0
    %1229 = vmatprep.mubr.bf16.mxu0 0
    %1230 = vmatmul.mubr.bf16.gmra.mxu0 %v1196
    %v1231 = vpop.f32.mrf.mxu0
    %v1232 = vadd.f32 0.0, %v1231
    %v1233 = vpop.f32.mrf.mxu0
    %v1234 = vadd.f32 0.0, %v1233
    %v1235 = vpop.f32.mrf.mxu0
    %v1236 = vpop.f32.mrf.mxu0
    %1237 = vdwg.mxu0
    %1238 = vmatprep.subr.bf16.mxu0 0
    %1239 = vmatpush1.bf16.msra.mxu0 %v733
    %1240 = vmatprep.subr.bf16.mxu0 0
    %1241 = vmatpush1.bf16.msra.mxu0 %v730
    %1242 = vmatprep.subr.bf16.mxu0 0
    %1243 = vmatpush1.bf16.msra.mxu0 %v727
    %1244 = vmatprep.subr.bf16.mxu0 0
    %1245 = vmatpush1.bf16.msra.mxu0 %v724
    %1246 = vmatprep.subr.bf16.mxu0 0
    %1247 = vmatpush1.bf16.msra.mxu0 %v721
    %1248 = vmatprep.subr.bf16.mxu0 0
    %1249 = vmatpush1.bf16.msra.mxu0 %v718
    %1250 = vmatprep.subr.bf16.mxu0 0
    %1251 = vmatpush1.bf16.msra.mxu0 %v715
    %1252 = vmatprep.subr.bf16.mxu0 0
    %1253 = vmatpush1.bf16.msra.mxu0 %v712
    %1254 = vmatprep.subr.bf16.mxu0 0
    %1255 = vmatpush2.bf16.msra.mxu0 0
    %1256 = vmatprep.subr.bf16.mxu0 0
    %1257 = vmatpush2.bf16.msra.mxu0 0
    %1258 = vmatprep.subr.bf16.mxu0 0
    %1259 = vmatpush2.bf16.msra.mxu0 0
    %1260 = vmatprep.subr.bf16.mxu0 0
    %1261 = vmatpush2.bf16.msra.mxu0 0
    %1262 = vmatprep.subr.bf16.mxu0 0
    %1263 = vmatpush2.bf16.msra.mxu0 0
    %1264 = vmatprep.subr.bf16.mxu0 0
    %1265 = vmatpush2.bf16.msra.mxu0 0
    %1266 = vmatprep.subr.bf16.mxu0 0
    %1267 = vmatpush2.bf16.msra.mxu0 0
    %1268 = vmatprep.subr.bf16.mxu0 0
    %1269 = vmatpush2.bf16.msra.mxu0 0
    %1270 = vmatprep.mubr.bf16.mxu0 0
    %1271 = vmatmul.mubr.bf16.gmra.mxu0 %v1196
    %v1272 = vpop.f32.mrf.mxu0
    %v1273 = vadd.f32 0.0, %v1272
    %v1274 = vpop.f32.mrf.mxu0
    %v1275 = vpop.f32.mrf.mxu0
    %v1276 = vpop.f32.mrf.mxu0
    %1277 = vdwg.mxu0
    %v1278 = vadd.f32 %v1193, %v1232
    %v1279 = vxor.u32 %v1278, 2147483648
    %v1280 = vmul.f32 %v1279, 1.442695
    %v1281 = vpow.pop %v1280
    %v1282 = vadd.f32 %v1281, 1.0
    %v1283 = vrcp.pop %v1282
    %v1284 = vmul.f32 1.0, %v1283
    %v1285 = vadd.f32 %v1194, %v1234
    %v1286 = vxor.u32 %v1285, 2147483648
    %v1287 = vmul.f32 %v1286, 1.442695
    %v1288 = vpow.pop %v1287
    %v1289 = vadd.f32 %v1288, 1.0
    %v1290 = vrcp.pop %v1289
    %v1291 = vmul.f32 1.0, %v1290
    %v1292 = vadd.f32 %v1273, %v625
    %v1293 = vmul.f32 %v1284, %v1292
    %v1294 = vadd.f32 %v1195, %v1293
    %v1295 = vtanh.pop %v1294
    %v1296 = vsub.f32 1.0, %v1291
    %v1297 = vmul.f32 %v1296, %v1295
    %v1298 = vmul.f32 %v1291, %v1189
    %v1299 = vadd.f32 %v1297, %v1298
    %s1300 = scalar_lea.vmem [#allocation3], 32
    %1301 = vst [vmem:[%s1300] sm:$0xff] %v1299
    %s1302 = scalar_lea.vmem [#allocation2], 120
    %v1303 = vld [vmem:[%s1302] sm:$0xff]
    %v1304 = vld [vmem:[%s1302 + $0x8] sm:$0xff]
    %v1305 = vld [vmem:[%s1302 + $0x10] sm:$0xff]
    %v1306 = vpack.c.bf16 %v1299, %v1299
    %1307 = vmatprep.subr.bf16.mxu0 %v732
    %1308 = vmatpush1.bf16.msra.mxu0 %v731
    %1309 = vmatprep.subr.bf16.mxu0 %v729
    %1310 = vmatpush1.bf16.msra.mxu0 %v728
    %1311 = vmatprep.subr.bf16.mxu0 %v726
    %1312 = vmatpush1.bf16.msra.mxu0 %v725
    %1313 = vmatprep.subr.bf16.mxu0 %v723
    %1314 = vmatpush1.bf16.msra.mxu0 %v722
    %1315 = vmatprep.subr.bf16.mxu0 %v720
    %1316 = vmatpush1.bf16.msra.mxu0 %v719
    %1317 = vmatprep.subr.bf16.mxu0 %v717
    %1318 = vmatpush1.bf16.msra.mxu0 %v716
    %1319 = vmatprep.subr.bf16.mxu0 %v714
    %1320 = vmatpush1.bf16.msra.mxu0 %v713
    %1321 = vmatprep.subr.bf16.mxu0 %v711
    %1322 = vmatpush1.bf16.msra.mxu0 %v710
    %1323 = vmatprep.subr.bf16.mxu0 0
    %1324 = vmatpush2.bf16.msra.mxu0 0
    %1325 = vmatprep.subr.bf16.mxu0 0
    %1326 = vmatpush2.bf16.msra.mxu0 0
    %1327 = vmatprep.subr.bf16.mxu0 0
    %1328 = vmatpush2.bf16.msra.mxu0 0
    %1329 = vmatprep.subr.bf16.mxu0 0
    %1330 = vmatpush2.bf16.msra.mxu0 0
    %1331 = vmatprep.subr.bf16.mxu0 0
    %1332 = vmatpush2.bf16.msra.mxu0 0
    %1333 = vmatprep.subr.bf16.mxu0 0
    %1334 = vmatpush2.bf16.msra.mxu0 0
    %1335 = vmatprep.subr.bf16.mxu0 0
    %1336 = vmatpush2.bf16.msra.mxu0 0
    %1337 = vmatprep.subr.bf16.mxu0 0
    %1338 = vmatpush2.bf16.msra.mxu0 0
    %1339 = vmatprep.mubr.bf16.mxu0 0
    %1340 = vmatmul.mubr.bf16.gmra.mxu0 %v1306
    %v1341 = vpop.f32.mrf.mxu0
    %v1342 = vadd.f32 0.0, %v1341
    %v1343 = vpop.f32.mrf.mxu0
    %v1344 = vadd.f32 0.0, %v1343
    %v1345 = vpop.f32.mrf.mxu0
    %v1346 = vpop.f32.mrf.mxu0
    %1347 = vdwg.mxu0
    %1348 = vmatprep.subr.bf16.mxu0 0
    %1349 = vmatpush1.bf16.msra.mxu0 %v733
    %1350 = vmatprep.subr.bf16.mxu0 0
    %1351 = vmatpush1.bf16.msra.mxu0 %v730
    %1352 = vmatprep.subr.bf16.mxu0 0
    %1353 = vmatpush1.bf16.msra.mxu0 %v727
    %1354 = vmatprep.subr.bf16.mxu0 0
    %1355 = vmatpush1.bf16.msra.mxu0 %v724
    %1356 = vmatprep.subr.bf16.mxu0 0
    %1357 = vmatpush1.bf16.msra.mxu0 %v721
    %1358 = vmatprep.subr.bf16.mxu0 0
    %1359 = vmatpush1.bf16.msra.mxu0 %v718
    %1360 = vmatprep.subr.bf16.mxu0 0
    %1361 = vmatpush1.bf16.msra.mxu0 %v715
    %1362 = vmatprep.subr.bf16.mxu0 0
    %1363 = vmatpush1.bf16.msra.mxu0 %v712
    %1364 = vmatprep.subr.bf16.mxu0 0
    %1365 = vmatpush2.bf16.msra.mxu0 0
    %1366 = vmatprep.subr.bf16.mxu0 0
    %1367 = vmatpush2.bf16.msra.mxu0 0
    %1368 = vmatprep.subr.bf16.mxu0 0
    %1369 = vmatpush2.bf16.msra.mxu0 0
    %1370 = vmatprep.subr.bf16.mxu0 0
    %1371 = vmatpush2.bf16.msra.mxu0 0
    %1372 = vmatprep.subr.bf16.mxu0 0
    %1373 = vmatpush2.bf16.msra.mxu0 0
    %1374 = vmatprep.subr.bf16.mxu0 0
    %1375 = vmatpush2.bf16.msra.mxu0 0
    %1376 = vmatprep.subr.bf16.mxu0 0
    %1377 = vmatpush2.bf16.msra.mxu0 0
    %1378 = vmatprep.subr.bf16.mxu0 0
    %1379 = vmatpush2.bf16.msra.mxu0 0
    %1380 = vmatprep.mubr.bf16.mxu0 0
    %1381 = vmatmul.mubr.bf16.gmra.mxu0 %v1306
    %v1382 = vpop.f32.mrf.mxu0
    %v1383 = vadd.f32 0.0, %v1382
    %v1384 = vpop.f32.mrf.mxu0
    %v1385 = vpop.f32.mrf.mxu0
    %v1386 = vpop.f32.mrf.mxu0
    %1387 = vdwg.mxu0
    %v1388 = vadd.f32 %v1303, %v1342
    %v1389 = vxor.u32 %v1388, 2147483648
    %v1390 = vmul.f32 %v1389, 1.442695
    %v1391 = vpow.pop %v1390
    %v1392 = vadd.f32 %v1391, 1.0
    %v1393 = vrcp.pop %v1392
    %v1394 = vmul.f32 1.0, %v1393
    %v1395 = vadd.f32 %v1304, %v1344
    %v1396 = vxor.u32 %v1395, 2147483648
    %v1397 = vmul.f32 %v1396, 1.442695
    %v1398 = vpow.pop %v1397
    %v1399 = vadd.f32 %v1398, 1.0
    %v1400 = vrcp.pop %v1399
    %v1401 = vmul.f32 1.0, %v1400
    %v1402 = vadd.f32 %v1383, %v625
    %v1403 = vmul.f32 %v1394, %v1402
    %v1404 = vadd.f32 %v1305, %v1403
    %v1405 = vtanh.pop %v1404
    %v1406 = vsub.f32 1.0, %v1401
    %v1407 = vmul.f32 %v1406, %v1405
    %v1408 = vmul.f32 %v1401, %v1299
    %v1409 = vadd.f32 %v1407, %v1408
    %s1410 = scalar_lea.vmem [#allocation3], 40
    %1411 = vst [vmem:[%s1410] sm:$0xff] %v1409
    %s1412 = scalar_lea.vmem [#allocation2], 144
    %v1413 = vld [vmem:[%s1412] sm:$0xff]
    %v1414 = vld [vmem:[%s1412 + $0x8] sm:$0xff]
    %v1415 = vld [vmem:[%s1412 + $0x10] sm:$0xff]
    %v1416 = vpack.c.bf16 %v1409, %v1409
    %1417 = vmatprep.subr.bf16.mxu0 %v732
    %1418 = vmatpush1.bf16.msra.mxu0 %v731
    %1419 = vmatprep.subr.bf16.mxu0 %v729
    %1420 = vmatpush1.bf16.msra.mxu0 %v728
    %1421 = vmatprep.subr.bf16.mxu0 %v726
    %1422 = vmatpush1.bf16.msra.mxu0 %v725
    %1423 = vmatprep.subr.bf16.mxu0 %v723
    %1424 = vmatpush1.bf16.msra.mxu0 %v722
    %1425 = vmatprep.subr.bf16.mxu0 %v720
    %1426 = vmatpush1.bf16.msra.mxu0 %v719
    %1427 = vmatprep.subr.bf16.mxu0 %v717
    %1428 = vmatpush1.bf16.msra.mxu0 %v716
    %1429 = vmatprep.subr.bf16.mxu0 %v714
    %1430 = vmatpush1.bf16.msra.mxu0 %v713
    %1431 = vmatprep.subr.bf16.mxu0 %v711
    %1432 = vmatpush1.bf16.msra.mxu0 %v710
    %1433 = vmatprep.subr.bf16.mxu0 0
    %1434 = vmatpush2.bf16.msra.mxu0 0
    %1435 = vmatprep.subr.bf16.mxu0 0
    %1436 = vmatpush2.bf16.msra.mxu0 0
    %1437 = vmatprep.subr.bf16.mxu0 0
    %1438 = vmatpush2.bf16.msra.mxu0 0
    %1439 = vmatprep.subr.bf16.mxu0 0
    %1440 = vmatpush2.bf16.msra.mxu0 0
    %1441 = vmatprep.subr.bf16.mxu0 0
    %1442 = vmatpush2.bf16.msra.mxu0 0
    %1443 = vmatprep.subr.bf16.mxu0 0
    %1444 = vmatpush2.bf16.msra.mxu0 0
    %1445 = vmatprep.subr.bf16.mxu0 0
    %1446 = vmatpush2.bf16.msra.mxu0 0
    %1447 = vmatprep.subr.bf16.mxu0 0
    %1448 = vmatpush2.bf16.msra.mxu0 0
    %1449 = vmatprep.mubr.bf16.mxu0 0
    %1450 = vmatmul.mubr.bf16.gmra.mxu0 %v1416
    %v1451 = vpop.f32.mrf.mxu0
    %v1452 = vadd.f32 0.0, %v1451
    %v1453 = vpop.f32.mrf.mxu0
    %v1454 = vadd.f32 0.0, %v1453
    %v1455 = vpop.f32.mrf.mxu0
    %v1456 = vpop.f32.mrf.mxu0
    %1457 = vdwg.mxu0
    %1458 = vmatprep.subr.bf16.mxu0 0
    %1459 = vmatpush1.bf16.msra.mxu0 %v733
    %1460 = vmatprep.subr.bf16.mxu0 0
    %1461 = vmatpush1.bf16.msra.mxu0 %v730
    %1462 = vmatprep.subr.bf16.mxu0 0
    %1463 = vmatpush1.bf16.msra.mxu0 %v727
    %1464 = vmatprep.subr.bf16.mxu0 0
    %1465 = vmatpush1.bf16.msra.mxu0 %v724
    %1466 = vmatprep.subr.bf16.mxu0 0
    %1467 = vmatpush1.bf16.msra.mxu0 %v721
    %1468 = vmatprep.subr.bf16.mxu0 0
    %1469 = vmatpush1.bf16.msra.mxu0 %v718
    %1470 = vmatprep.subr.bf16.mxu0 0
    %1471 = vmatpush1.bf16.msra.mxu0 %v715
    %1472 = vmatprep.subr.bf16.mxu0 0
    %1473 = vmatpush1.bf16.msra.mxu0 %v712
    %1474 = vmatprep.subr.bf16.mxu0 0
    %1475 = vmatpush2.bf16.msra.mxu0 0
    %1476 = vmatprep.subr.bf16.mxu0 0
    %1477 = vmatpush2.bf16.msra.mxu0 0
    %1478 = vmatprep.subr.bf16.mxu0 0
    %1479 = vmatpush2.bf16.msra.mxu0 0
    %1480 = vmatprep.subr.bf16.mxu0 0
    %1481 = vmatpush2.bf16.msra.mxu0 0
    %1482 = vmatprep.subr.bf16.mxu0 0
    %1483 = vmatpush2.bf16.msra.mxu0 0
    %1484 = vmatprep.subr.bf16.mxu0 0
    %1485 = vmatpush2.bf16.msra.mxu0 0
    %1486 = vmatprep.subr.bf16.mxu0 0
    %1487 = vmatpush2.bf16.msra.mxu0 0
    %1488 = vmatprep.subr.bf16.mxu0 0
    %1489 = vmatpush2.bf16.msra.mxu0 0
    %1490 = vmatprep.mubr.bf16.mxu0 0
    %1491 = vmatmul.mubr.bf16.gmra.mxu0 %v1416
    %v1492 = vpop.f32.mrf.mxu0
    %v1493 = vadd.f32 0.0, %v1492
    %v1494 = vpop.f32.mrf.mxu0
    %v1495 = vpop.f32.mrf.mxu0
    %v1496 = vpop.f32.mrf.mxu0
    %1497 = vdwg.mxu0
    %v1498 = vadd.f32 %v1413, %v1452
    %v1499 = vxor.u32 %v1498, 2147483648
    %v1500 = vmul.f32 %v1499, 1.442695
    %v1501 = vpow.pop %v1500
    %v1502 = vadd.f32 %v1501, 1.0
    %v1503 = vrcp.pop %v1502
    %v1504 = vmul.f32 1.0, %v1503
    %v1505 = vadd.f32 %v1414, %v1454
    %v1506 = vxor.u32 %v1505, 2147483648
    %v1507 = vmul.f32 %v1506, 1.442695
    %v1508 = vpow.pop %v1507
    %v1509 = vadd.f32 %v1508, 1.0
    %v1510 = vrcp.pop %v1509
    %v1511 = vmul.f32 1.0, %v1510
    %v1512 = vadd.f32 %v1493, %v625
    %v1513 = vmul.f32 %v1504, %v1512
    %v1514 = vadd.f32 %v1415, %v1513
    %v1515 = vtanh.pop %v1514
    %v1516 = vsub.f32 1.0, %v1511
    %v1517 = vmul.f32 %v1516, %v1515
    %v1518 = vmul.f32 %v1511, %v1409
    %v1519 = vadd.f32 %v1517, %v1518
    %s1520 = scalar_lea.vmem [#allocation3], 48
    %1521 = vst [vmem:[%s1520] sm:$0xff] %v1519
    %s1522 = scalar_lea.vmem [#allocation2], 168
    %v1523 = vld [vmem:[%s1522] sm:$0xff]
    %v1524 = vld [vmem:[%s1522 + $0x8] sm:$0xff]
    %v1525 = vld [vmem:[%s1522 + $0x10] sm:$0xff]
    %v1526 = vpack.c.bf16 %v1519, %v1519
    %1527 = vmatprep.subr.bf16.mxu0 %v732
    %1528 = vmatpush1.bf16.msra.mxu0 %v731
    %1529 = vmatprep.subr.bf16.mxu0 %v729
    %1530 = vmatpush1.bf16.msra.mxu0 %v728
    %1531 = vmatprep.subr.bf16.mxu0 %v726
    %1532 = vmatpush1.bf16.msra.mxu0 %v725
    %1533 = vmatprep.subr.bf16.mxu0 %v723
    %1534 = vmatpush1.bf16.msra.mxu0 %v722
    %1535 = vmatprep.subr.bf16.mxu0 %v720
    %1536 = vmatpush1.bf16.msra.mxu0 %v719
    %1537 = vmatprep.subr.bf16.mxu0 %v717
    %1538 = vmatpush1.bf16.msra.mxu0 %v716
    %1539 = vmatprep.subr.bf16.mxu0 %v714
    %1540 = vmatpush1.bf16.msra.mxu0 %v713
    %1541 = vmatprep.subr.bf16.mxu0 %v711
    %1542 = vmatpush1.bf16.msra.mxu0 %v710
    %1543 = vmatprep.subr.bf16.mxu0 0
    %1544 = vmatpush2.bf16.msra.mxu0 0
    %1545 = vmatprep.subr.bf16.mxu0 0
    %1546 = vmatpush2.bf16.msra.mxu0 0
    %1547 = vmatprep.subr.bf16.mxu0 0
    %1548 = vmatpush2.bf16.msra.mxu0 0
    %1549 = vmatprep.subr.bf16.mxu0 0
    %1550 = vmatpush2.bf16.msra.mxu0 0
    %1551 = vmatprep.subr.bf16.mxu0 0
    %1552 = vmatpush2.bf16.msra.mxu0 0
    %1553 = vmatprep.subr.bf16.mxu0 0
    %1554 = vmatpush2.bf16.msra.mxu0 0
    %1555 = vmatprep.subr.bf16.mxu0 0
    %1556 = vmatpush2.bf16.msra.mxu0 0
    %1557 = vmatprep.subr.bf16.mxu0 0
    %1558 = vmatpush2.bf16.msra.mxu0 0
    %1559 = vmatprep.mubr.bf16.mxu0 0
    %1560 = vmatmul.mubr.bf16.gmra.mxu0 %v1526
    %v1561 = vpop.f32.mrf.mxu0
    %v1562 = vadd.f32 0.0, %v1561
    %v1563 = vpop.f32.mrf.mxu0
    %v1564 = vadd.f32 0.0, %v1563
    %v1565 = vpop.f32.mrf.mxu0
    %v1566 = vpop.f32.mrf.mxu0
    %1567 = vdwg.mxu0
    %1568 = vmatprep.subr.bf16.mxu0 0
    %1569 = vmatpush1.bf16.msra.mxu0 %v733
    %1570 = vmatprep.subr.bf16.mxu0 0
    %1571 = vmatpush1.bf16.msra.mxu0 %v730
    %1572 = vmatprep.subr.bf16.mxu0 0
    %1573 = vmatpush1.bf16.msra.mxu0 %v727
    %1574 = vmatprep.subr.bf16.mxu0 0
    %1575 = vmatpush1.bf16.msra.mxu0 %v724
    %1576 = vmatprep.subr.bf16.mxu0 0
    %1577 = vmatpush1.bf16.msra.mxu0 %v721
    %1578 = vmatprep.subr.bf16.mxu0 0
    %1579 = vmatpush1.bf16.msra.mxu0 %v718
    %1580 = vmatprep.subr.bf16.mxu0 0
    %1581 = vmatpush1.bf16.msra.mxu0 %v715
    %1582 = vmatprep.subr.bf16.mxu0 0
    %1583 = vmatpush1.bf16.msra.mxu0 %v712
    %1584 = vmatprep.subr.bf16.mxu0 0
    %1585 = vmatpush2.bf16.msra.mxu0 0
    %1586 = vmatprep.subr.bf16.mxu0 0
    %1587 = vmatpush2.bf16.msra.mxu0 0
    %1588 = vmatprep.subr.bf16.mxu0 0
    %1589 = vmatpush2.bf16.msra.mxu0 0
    %1590 = vmatprep.subr.bf16.mxu0 0
    %1591 = vmatpush2.bf16.msra.mxu0 0
    %1592 = vmatprep.subr.bf16.mxu0 0
    %1593 = vmatpush2.bf16.msra.mxu0 0
    %1594 = vmatprep.subr.bf16.mxu0 0
    %1595 = vmatpush2.bf16.msra.mxu0 0
    %1596 = vmatprep.subr.bf16.mxu0 0
    %1597 = vmatpush2.bf16.msra.mxu0 0
    %1598 = vmatprep.subr.bf16.mxu0 0
    %1599 = vmatpush2.bf16.msra.mxu0 0
    %1600 = vmatprep.mubr.bf16.mxu0 0
    %1601 = vmatmul.mubr.bf16.gmra.mxu0 %v1526
    %v1602 = vpop.f32.mrf.mxu0
    %v1603 = vadd.f32 0.0, %v1602
    %v1604 = vpop.f32.mrf.mxu0
    %v1605 = vpop.f32.mrf.mxu0
    %v1606 = vpop.f32.mrf.mxu0
    %1607 = vdwg.mxu0
    %v1608 = vadd.f32 %v1523, %v1562
    %v1609 = vxor.u32 %v1608, 2147483648
    %v1610 = vmul.f32 %v1609, 1.442695
    %v1611 = vpow.pop %v1610
    %v1612 = vadd.f32 %v1611, 1.0
    %v1613 = vrcp.pop %v1612
    %v1614 = vmul.f32 1.0, %v1613
    %v1615 = vadd.f32 %v1524, %v1564
    %v1616 = vxor.u32 %v1615, 2147483648
    %v1617 = vmul.f32 %v1616, 1.442695
    %v1618 = vpow.pop %v1617
    %v1619 = vadd.f32 %v1618, 1.0
    %v1620 = vrcp.pop %v1619
    %v1621 = vmul.f32 1.0, %v1620
    %v1622 = vadd.f32 %v1603, %v625
    %v1623 = vmul.f32 %v1614, %v1622
    %v1624 = vadd.f32 %v1525, %v1623
    %v1625 = vtanh.pop %v1624
    %v1626 = vsub.f32 1.0, %v1621
    %v1627 = vmul.f32 %v1626, %v1625
    %v1628 = vmul.f32 %v1621, %v1519
    %v1629 = vadd.f32 %v1627, %v1628
    %s1630 = scalar_lea.vmem [#allocation3], 56
    %1631 = vst [vmem:[%s1630] sm:$0xff] %v1629
    %v1632 = vld [vmem:[#allocation3] sm:$0xff]
    %v1633 = vld [vmem:[#allocation3 + $0x8] sm:$0xff]
    %v1634 = vld [vmem:[#allocation3 + $0x10] sm:$0xff]
    %v1635 = vld [vmem:[#allocation3 + $0x18] sm:$0xff]
    %v1636 = vld [vmem:[#allocation3 + $0x20] sm:$0xff]
    %v1637 = vld [vmem:[#allocation3 + $0x28] sm:$0xff]
    %v1638 = vld [vmem:[#allocation3 + $0x30] sm:$0xff]
    %v1639 = vld [vmem:[#allocation3 + $0x38] sm:$0xff]
    %v1640 = vld [vmem:[#allocation8] sm:$0xff]
    %v1641 = vld [vmem:[#allocation8 + $0x8] sm:$0xf]
    %v1642 = vld [vmem:[#allocation8 + $0xc] sm:$0xff]
    %v1643 = vld [vmem:[#allocation8 + $0x14] sm:$0xf]
    %v1644 = vld [vmem:[#allocation8 + $0x18] sm:$0xff]
    %v1645 = vld [vmem:[#allocation8 + $0x20] sm:$0xf]
    %v1646 = vld [vmem:[#allocation8 + $0x24] sm:$0xff]
    %v1647 = vld [vmem:[#allocation8 + $0x2c] sm:$0xf]
    %v1648 = vld [vmem:[#allocation8 + $0x30] sm:$0xff]
    %v1649 = vld [vmem:[#allocation8 + $0x38] sm:$0xf]
    %v1650 = vld [vmem:[#allocation8 + $0x3c] sm:$0xff]
    %v1651 = vld [vmem:[#allocation8 + $0x44] sm:$0xf]
    %v1652 = vld [vmem:[#allocation8 + $0x48] sm:$0xff]
    %v1653 = vld [vmem:[#allocation8 + $0x50] sm:$0xf]
    %v1654 = vld [vmem:[#allocation8 + $0x54] sm:$0xff]
    %v1655 = vld [vmem:[#allocation8 + $0x5c] sm:$0xf]
    %v1656 = vld [vmem:[#allocation8 + $0x60] sm:$0xff]
    %v1657 = vld [vmem:[#allocation8 + $0x68] sm:$0xf]
    %v1658 = vld [vmem:[#allocation8 + $0x6c] sm:$0xff]
    %v1659 = vld [vmem:[#allocation8 + $0x74] sm:$0xf]
    %v1660 = vld [vmem:[#allocation8 + $0x78] sm:$0xff]
    %v1661 = vld [vmem:[#allocation8 + $0x80] sm:$0xf]
    %v1662 = vld [vmem:[#allocation8 + $0x84] sm:$0xff]
    %v1663 = vld [vmem:[#allocation8 + $0x8c] sm:$0xf]
    %v1664 = vld [vmem:[#allocation8 + $0x90] sm:$0xff]
    %v1665 = vld [vmem:[#allocation8 + $0x98] sm:$0xf]
    %v1666 = vld [vmem:[#allocation8 + $0x9c] sm:$0xff]
    %v1667 = vld [vmem:[#allocation8 + $0xa4] sm:$0xf]
    %v1668 = vld [vmem:[#allocation8 + $0xa8] sm:$0xff]
    %v1669 = vld [vmem:[#allocation8 + $0xb0] sm:$0xf]
    %v1670 = vld [vmem:[#allocation8 + $0xb4] sm:$0xff]
    %v1671 = vld [vmem:[#allocation8 + $0xbc] sm:$0xf]
    %v1672 = vld [vmem:[#allocation9] sm:$0xff]
    %v1673 = vld [vmem:[#allocation9 + $0x8] sm:$0xf]
    %v1674 = vld [vmem:[#allocation9 + $0xc] sm:$0xff]
    %v1675 = vld [vmem:[#allocation9 + $0x14] sm:$0xf]
    %v1676 = vld [vmem:[#allocation9 + $0x18] sm:$0xff]
    %v1677 = vld [vmem:[#allocation9 + $0x20] sm:$0xf]
    %v1678 = vld [vmem:[#allocation9 + $0x24] sm:$0xff]
    %v1679 = vld [vmem:[#allocation9 + $0x2c] sm:$0xf]
    %v1680 = vld [vmem:[#allocation9 + $0x30] sm:$0xff]
    %v1681 = vld [vmem:[#allocation9 + $0x38] sm:$0xf]
    %v1682 = vld [vmem:[#allocation9 + $0x3c] sm:$0xff]
    %v1683 = vld [vmem:[#allocation9 + $0x44] sm:$0xf]
    %v1684 = vld [vmem:[#allocation9 + $0x48] sm:$0xff]
    %v1685 = vld [vmem:[#allocation9 + $0x50] sm:$0xf]
    %v1686 = vld [vmem:[#allocation9 + $0x54] sm:$0xff]
    %v1687 = vld [vmem:[#allocation9 + $0x5c] sm:$0xf]
    %v1688 = vld [vmem:[#allocation9 + $0x60] sm:$0xff]
    %v1689 = vld [vmem:[#allocation9 + $0x68] sm:$0xf]
    %v1690 = vld [vmem:[#allocation9 + $0x6c] sm:$0xff]
    %v1691 = vld [vmem:[#allocation9 + $0x74] sm:$0xf]
    %v1692 = vld [vmem:[#allocation9 + $0x78] sm:$0xff]
    %v1693 = vld [vmem:[#allocation9 + $0x80] sm:$0xf]
    %v1694 = vld [vmem:[#allocation9 + $0x84] sm:$0xff]
    %v1695 = vld [vmem:[#allocation9 + $0x8c] sm:$0xf]
    %v1696 = vld [vmem:[#allocation9 + $0x90] sm:$0xff]
    %v1697 = vld [vmem:[#allocation9 + $0x98] sm:$0xf]
    %v1698 = vld [vmem:[#allocation9 + $0x9c] sm:$0xff]
    %v1699 = vld [vmem:[#allocation9 + $0xa4] sm:$0xf]
    %v1700 = vld [vmem:[#allocation9 + $0xa8] sm:$0xff]
    %v1701 = vld [vmem:[#allocation9 + $0xb0] sm:$0xf]
    %v1702 = vld [vmem:[#allocation9 + $0xb4] sm:$0xff]
    %v1703 = vld [vmem:[#allocation9 + $0xbc] sm:$0xf]
    %v1704 = vld [vmem:[%s8] sm:$0x7]
    %v1705 = vld [vmem:[%s9] sm:$0x1]
    %v1706 = vpack.c.bf16 %v1633, %v1632
    %v1707 = vpack.c.bf16 %v1635, %v1634
    %v1708 = vpack.c.bf16 %v1637, %v1636
    %v1709 = vpack.c.bf16 %v1639, %v1638
    %v1711 = vlaneseq
    %v1712 = vshrl.u32 %v1711, 7
    %v1713 = vsub.s32 0, %v1712
    %v1714 = vrot.slane %v1704, %v1713
    %v1715 = vlaneseq
    %v1716 = vshrl.u32 %v1715, 7
    %v1717 = vsub.s32 1, %v1716
    %v1718 = vrot.slane %v1704, %v1717
    %v1719 = vlaneseq
    %v1720 = vshrl.u32 %v1719, 7
    %v1721 = vsub.s32 2, %v1720
    %v1722 = vrot.slane %v1704, %v1721
    %v1758 = vunpack.c.l.b16 %v1640
    %v1759 = vunpack.c.h.b16 %v1640
    %v1760 = vunpack.c.l.b16 %v1641
    %v1761 = vunpack.c.l.b16 %v1642
    %v1762 = vunpack.c.h.b16 %v1642
    %v1763 = vunpack.c.l.b16 %v1643
    %v1764 = vunpack.c.l.b16 %v1644
    %v1765 = vunpack.c.h.b16 %v1644
    %v1766 = vunpack.c.l.b16 %v1645
    %v1767 = vunpack.c.l.b16 %v1646
    %v1768 = vunpack.c.h.b16 %v1646
    %v1769 = vunpack.c.l.b16 %v1647
    %v1770 = vunpack.c.l.b16 %v1648
    %v1771 = vunpack.c.h.b16 %v1648
    %v1772 = vunpack.c.l.b16 %v1649
    %v1773 = vunpack.c.l.b16 %v1650
    %v1774 = vunpack.c.h.b16 %v1650
    %v1775 = vunpack.c.l.b16 %v1651
    %v1776 = vunpack.c.l.b16 %v1652
    %v1777 = vunpack.c.h.b16 %v1652
    %v1778 = vunpack.c.l.b16 %v1653
    %v1779 = vunpack.c.l.b16 %v1654
    %v1780 = vunpack.c.h.b16 %v1654
    %v1781 = vunpack.c.l.b16 %v1655
    %v1782 = vunpack.c.l.b16 %v1656
    %v1783 = vunpack.c.h.b16 %v1656
    %v1784 = vunpack.c.l.b16 %v1657
    %v1785 = vunpack.c.l.b16 %v1658
    %v1786 = vunpack.c.h.b16 %v1658
    %v1787 = vunpack.c.l.b16 %v1659
    %v1788 = vunpack.c.l.b16 %v1660
    %v1789 = vunpack.c.h.b16 %v1660
    %v1790 = vunpack.c.l.b16 %v1661
    %v1791 = vunpack.c.l.b16 %v1662
    %v1792 = vunpack.c.h.b16 %v1662
    %v1793 = vunpack.c.l.b16 %v1663
    %v1794 = vunpack.c.l.b16 %v1664
    %v1795 = vunpack.c.h.b16 %v1664
    %v1796 = vunpack.c.l.b16 %v1665
    %v1797 = vunpack.c.l.b16 %v1666
    %v1798 = vunpack.c.h.b16 %v1666
    %v1799 = vunpack.c.l.b16 %v1667
    %v1800 = vunpack.c.l.b16 %v1668
    %v1801 = vunpack.c.h.b16 %v1668
    %v1802 = vunpack.c.l.b16 %v1669
    %v1803 = vunpack.c.l.b16 %v1670
    %v1804 = vunpack.c.h.b16 %v1670
    %v1805 = vunpack.c.l.b16 %v1671
    %v1806 = vpack.c.b16 %v1761, %v1758
    %v1807 = vpack.c.b16 %v1762, %v1759
    %v1808 = vpack.c.b16 %v1763, %v1760
    %v1809 = vpack.c.b16 %v1767, %v1764
    %v1810 = vpack.c.b16 %v1768, %v1765
    %v1811 = vpack.c.b16 %v1769, %v1766
    %v1812 = vpack.c.b16 %v1773, %v1770
    %v1813 = vpack.c.b16 %v1774, %v1771
    %v1814 = vpack.c.b16 %v1775, %v1772
    %v1815 = vpack.c.b16 %v1779, %v1776
    %v1816 = vpack.c.b16 %v1780, %v1777
    %v1817 = vpack.c.b16 %v1781, %v1778
    %v1818 = vpack.c.b16 %v1785, %v1782
    %v1819 = vpack.c.b16 %v1786, %v1783
    %v1820 = vpack.c.b16 %v1787, %v1784
    %v1821 = vpack.c.b16 %v1791, %v1788
    %v1822 = vpack.c.b16 %v1792, %v1789
    %v1823 = vpack.c.b16 %v1793, %v1790
    %v1824 = vpack.c.b16 %v1797, %v1794
    %v1825 = vpack.c.b16 %v1798, %v1795
    %v1826 = vpack.c.b16 %v1799, %v1796
    %v1827 = vpack.c.b16 %v1803, %v1800
    %v1828 = vpack.c.b16 %v1804, %v1801
    %v1829 = vpack.c.b16 %v1805, %v1802
    %1854 = vmatprep.subr.bf16.mxu0 %v1828
    %1855 = vmatpush1.bf16.msra.mxu0 %v1827
    %1856 = vmatprep.subr.bf16.mxu0 %v1825
    %1857 = vmatpush1.bf16.msra.mxu0 %v1824
    %1858 = vmatprep.subr.bf16.mxu0 %v1822
    %1859 = vmatpush1.bf16.msra.mxu0 %v1821
    %1860 = vmatprep.subr.bf16.mxu0 %v1819
    %1861 = vmatpush1.bf16.msra.mxu0 %v1818
    %1862 = vmatprep.subr.bf16.mxu0 %v1816
    %1863 = vmatpush1.bf16.msra.mxu0 %v1815
    %1864 = vmatprep.subr.bf16.mxu0 %v1813
    %1865 = vmatpush1.bf16.msra.mxu0 %v1812
    %1866 = vmatprep.subr.bf16.mxu0 %v1810
    %1867 = vmatpush1.bf16.msra.mxu0 %v1809
    %1868 = vmatprep.subr.bf16.mxu0 %v1807
    %1869 = vmatpush1.bf16.msra.mxu0 %v1806
    %1870 = vmatprep.subr.bf16.mxu0 0
    %1871 = vmatpush2.bf16.msra.mxu0 0
    %1872 = vmatprep.subr.bf16.mxu0 0
    %1873 = vmatpush2.bf16.msra.mxu0 0
    %1874 = vmatprep.subr.bf16.mxu0 0
    %1875 = vmatpush2.bf16.msra.mxu0 0
    %1876 = vmatprep.subr.bf16.mxu0 0
    %1877 = vmatpush2.bf16.msra.mxu0 0
    %1878 = vmatprep.subr.bf16.mxu0 0
    %1879 = vmatpush2.bf16.msra.mxu0 0
    %1880 = vmatprep.subr.bf16.mxu0 0
    %1881 = vmatpush2.bf16.msra.mxu0 0
    %1882 = vmatprep.subr.bf16.mxu0 0
    %1883 = vmatpush2.bf16.msra.mxu0 0
    %1884 = vmatprep.subr.bf16.mxu0 0
    %1885 = vmatpush2.bf16.msra.mxu0 0
    %1886 = vmatprep.mubr.bf16.mxu0 0
    %1887 = vmatmul.mubr.bf16.gmra.mxu0 %v1706
    %v1888 = vpop.f32.mrf.mxu0
    %v1889 = vadd.f32 %v1714, %v1888
    %v1890 = vpop.f32.mrf.mxu0
    %v1891 = vadd.f32 %v1718, %v1890
    %v1892 = vpop.f32.mrf.mxu0
    %v1893 = vadd.f32 %v1714, %v1892
    %v1894 = vpop.f32.mrf.mxu0
    %v1895 = vadd.f32 %v1718, %v1894
    %1896 = vmatprep.mubr.bf16.mxu0 0
    %1897 = vmatmul.mubr.bf16.gmra.mxu0 %v1707
    %v1898 = vpop.f32.mrf.mxu0
    %v1899 = vadd.f32 %v1714, %v1898
    %v1900 = vpop.f32.mrf.mxu0
    %v1901 = vadd.f32 %v1718, %v1900
    %v1902 = vpop.f32.mrf.mxu0
    %v1903 = vadd.f32 %v1714, %v1902
    %v1904 = vpop.f32.mrf.mxu0
    %v1905 = vadd.f32 %v1718, %v1904
    %1906 = vmatprep.mubr.bf16.mxu0 0
    %1907 = vmatmul.mubr.bf16.gmra.mxu0 %v1708
    %v1908 = vpop.f32.mrf.mxu0
    %v1909 = vadd.f32 %v1714, %v1908
    %v1910 = vpop.f32.mrf.mxu0
    %v1911 = vadd.f32 %v1718, %v1910
    %v1912 = vpop.f32.mrf.mxu0
    %v1913 = vadd.f32 %v1714, %v1912
    %v1914 = vpop.f32.mrf.mxu0
    %v1915 = vadd.f32 %v1718, %v1914
    %1916 = vmatprep.mubr.bf16.mxu0 0
    %1917 = vmatmul.mubr.bf16.gmra.mxu0 %v1709
    %v1918 = vpop.f32.mrf.mxu0
    %v1919 = vadd.f32 %v1714, %v1918
    %v1920 = vpop.f32.mrf.mxu0
    %v1921 = vadd.f32 %v1718, %v1920
    %v1922 = vpop.f32.mrf.mxu0
    %v1923 = vadd.f32 %v1714, %v1922
    %v1924 = vpop.f32.mrf.mxu0
    %v1925 = vadd.f32 %v1718, %v1924
    %1926 = vdwg.mxu0
    %1927 = vmatprep.subr.bf16.mxu0 0
    %1928 = vmatpush1.bf16.msra.mxu0 %v1829
    %1929 = vmatprep.subr.bf16.mxu0 0
    %1930 = vmatpush1.bf16.msra.mxu0 %v1826
    %1931 = vmatprep.subr.bf16.mxu0 0
    %1932 = vmatpush1.bf16.msra.mxu0 %v1823
    %1933 = vmatprep.subr.bf16.mxu0 0
    %1934 = vmatpush1.bf16.msra.mxu0 %v1820
    %1935 = vmatprep.subr.bf16.mxu0 0
    %1936 = vmatpush1.bf16.msra.mxu0 %v1817
    %1937 = vmatprep.subr.bf16.mxu0 0
    %1938 = vmatpush1.bf16.msra.mxu0 %v1814
    %1939 = vmatprep.subr.bf16.mxu0 0
    %1940 = vmatpush1.bf16.msra.mxu0 %v1811
    %1941 = vmatprep.subr.bf16.mxu0 0
    %1942 = vmatpush1.bf16.msra.mxu0 %v1808
    %1943 = vmatprep.subr.bf16.mxu0 0
    %1944 = vmatpush2.bf16.msra.mxu0 0
    %1945 = vmatprep.subr.bf16.mxu0 0
    %1946 = vmatpush2.bf16.msra.mxu0 0
    %1947 = vmatprep.subr.bf16.mxu0 0
    %1948 = vmatpush2.bf16.msra.mxu0 0
    %1949 = vmatprep.subr.bf16.mxu0 0
    %1950 = vmatpush2.bf16.msra.mxu0 0
    %1951 = vmatprep.subr.bf16.mxu0 0
    %1952 = vmatpush2.bf16.msra.mxu0 0
    %1953 = vmatprep.subr.bf16.mxu0 0
    %1954 = vmatpush2.bf16.msra.mxu0 0
    %1955 = vmatprep.subr.bf16.mxu0 0
    %1956 = vmatpush2.bf16.msra.mxu0 0
    %1957 = vmatprep.subr.bf16.mxu0 0
    %1958 = vmatpush2.bf16.msra.mxu0 0
    %1959 = vmatprep.mubr.bf16.mxu0 0
    %1960 = vmatmul.mubr.bf16.gmra.mxu0 %v1706
    %v1961 = vpop.f32.mrf.mxu0
    %v1962 = vadd.f32 %v1722, %v1961
    %v1963 = vpop.f32.mrf.mxu0
    %v1964 = vpop.f32.mrf.mxu0
    %v1965 = vadd.f32 %v1722, %v1964
    %v1966 = vpop.f32.mrf.mxu0
    %1967 = vmatprep.mubr.bf16.mxu0 0
    %1968 = vmatmul.mubr.bf16.gmra.mxu0 %v1707
    %v1969 = vpop.f32.mrf.mxu0
    %v1970 = vadd.f32 %v1722, %v1969
    %v1971 = vpop.f32.mrf.mxu0
    %v1972 = vpop.f32.mrf.mxu0
    %v1973 = vadd.f32 %v1722, %v1972
    %v1974 = vpop.f32.mrf.mxu0
    %1975 = vmatprep.mubr.bf16.mxu0 0
    %1976 = vmatmul.mubr.bf16.gmra.mxu0 %v1708
    %v1977 = vpop.f32.mrf.mxu0
    %v1978 = vadd.f32 %v1722, %v1977
    %v1979 = vpop.f32.mrf.mxu0
    %v1980 = vpop.f32.mrf.mxu0
    %v1981 = vadd.f32 %v1722, %v1980
    %v1982 = vpop.f32.mrf.mxu0
    %1983 = vmatprep.mubr.bf16.mxu0 0
    %1984 = vmatmul.mubr.bf16.gmra.mxu0 %v1709
    %v1985 = vpop.f32.mrf.mxu0
    %v1986 = vadd.f32 %v1722, %v1985
    %v1987 = vpop.f32.mrf.mxu0
    %v1988 = vpop.f32.mrf.mxu0
    %v1989 = vadd.f32 %v1722, %v1988
    %v1990 = vpop.f32.mrf.mxu0
    %1991 = vdwg.mxu0
    %1992 = vst [vmem:[#allocation2] sm:$0xff] %v1889
    %1993 = vst [vmem:[#allocation2 + $0x8] sm:$0xff] %v1891
    %1994 = vst [vmem:[#allocation2 + $0x10] sm:$0xff] %v1962
    %1995 = vst [vmem:[#allocation2 + $0x18] sm:$0xff] %v1893
    %1996 = vst [vmem:[#allocation2 + $0x20] sm:$0xff] %v1895
    %1997 = vst [vmem:[#allocation2 + $0x28] sm:$0xff] %v1965
    %1998 = vst [vmem:[#allocation2 + $0x30] sm:$0xff] %v1899
    %1999 = vst [vmem:[#allocation2 + $0x38] sm:$0xff] %v1901
    %2000 = vst [vmem:[#allocation2 + $0x40] sm:$0xff] %v1970
    %2001 = vst [vmem:[#allocation2 + $0x48] sm:$0xff] %v1903
    %2002 = vst [vmem:[#allocation2 + $0x50] sm:$0xff] %v1905
    %2003 = vst [vmem:[#allocation2 + $0x58] sm:$0xff] %v1973
    %2004 = vst [vmem:[#allocation2 + $0x60] sm:$0xff] %v1909
    %2005 = vst [vmem:[#allocation2 + $0x68] sm:$0xff] %v1911
    %2006 = vst [vmem:[#allocation2 + $0x70] sm:$0xff] %v1978
    %2007 = vst [vmem:[#allocation2 + $0x78] sm:$0xff] %v1913
    %2008 = vst [vmem:[#allocation2 + $0x80] sm:$0xff] %v1915
    %2009 = vst [vmem:[#allocation2 + $0x88] sm:$0xff] %v1981
    %2010 = vst [vmem:[#allocation2 + $0x90] sm:$0xff] %v1919
    %2011 = vst [vmem:[#allocation2 + $0x98] sm:$0xff] %v1921
    %2012 = vst [vmem:[#allocation2 + $0xa0] sm:$0xff] %v1986
    %2013 = vst [vmem:[#allocation2 + $0xa8] sm:$0xff] %v1923
    %2014 = vst [vmem:[#allocation2 + $0xb0] sm:$0xff] %v1925
    %2015 = vst [vmem:[#allocation2 + $0xb8] sm:$0xff] %v1989
    %v2017 = vlaneseq
    %v2018 = vshrl.u32 %v2017, 7
    %v2019 = vsub.s32 0, %v2018
    %v2020 = vrot.slane %v1705, %v2019
    %v2022 = vld [vmem:[#allocation2] sm:$0xff]
    %v2023 = vld [vmem:[#allocation2 + $0x8] sm:$0xff]
    %v2024 = vld [vmem:[#allocation2 + $0x10] sm:$0xff]
    %v2057 = vunpack.c.l.b16 %v1672
    %v2058 = vunpack.c.h.b16 %v1672
    %v2059 = vunpack.c.l.b16 %v1673
    %v2060 = vunpack.c.l.b16 %v1674
    %v2061 = vunpack.c.h.b16 %v1674
    %v2062 = vunpack.c.l.b16 %v1675
    %v2063 = vunpack.c.l.b16 %v1676
    %v2064 = vunpack.c.h.b16 %v1676
    %v2065 = vunpack.c.l.b16 %v1677
    %v2066 = vunpack.c.l.b16 %v1678
    %v2067 = vunpack.c.h.b16 %v1678
    %v2068 = vunpack.c.l.b16 %v1679
    %v2069 = vunpack.c.l.b16 %v1680
    %v2070 = vunpack.c.h.b16 %v1680
    %v2071 = vunpack.c.l.b16 %v1681
    %v2072 = vunpack.c.l.b16 %v1682
    %v2073 = vunpack.c.h.b16 %v1682
    %v2074 = vunpack.c.l.b16 %v1683
    %v2075 = vunpack.c.l.b16 %v1684
    %v2076 = vunpack.c.h.b16 %v1684
    %v2077 = vunpack.c.l.b16 %v1685
    %v2078 = vunpack.c.l.b16 %v1686
    %v2079 = vunpack.c.h.b16 %v1686
    %v2080 = vunpack.c.l.b16 %v1687
    %v2081 = vunpack.c.l.b16 %v1688
    %v2082 = vunpack.c.h.b16 %v1688
    %v2083 = vunpack.c.l.b16 %v1689
    %v2084 = vunpack.c.l.b16 %v1690
    %v2085 = vunpack.c.h.b16 %v1690
    %v2086 = vunpack.c.l.b16 %v1691
    %v2087 = vunpack.c.l.b16 %v1692
    %v2088 = vunpack.c.h.b16 %v1692
    %v2089 = vunpack.c.l.b16 %v1693
    %v2090 = vunpack.c.l.b16 %v1694
    %v2091 = vunpack.c.h.b16 %v1694
    %v2092 = vunpack.c.l.b16 %v1695
    %v2093 = vunpack.c.l.b16 %v1696
    %v2094 = vunpack.c.h.b16 %v1696
    %v2095 = vunpack.c.l.b16 %v1697
    %v2096 = vunpack.c.l.b16 %v1698
    %v2097 = vunpack.c.h.b16 %v1698
    %v2098 = vunpack.c.l.b16 %v1699
    %v2099 = vunpack.c.l.b16 %v1700
    %v2100 = vunpack.c.h.b16 %v1700
    %v2101 = vunpack.c.l.b16 %v1701
    %v2102 = vunpack.c.l.b16 %v1702
    %v2103 = vunpack.c.h.b16 %v1702
    %v2104 = vunpack.c.l.b16 %v1703
    %v2105 = vpack.c.b16 %v2060, %v2057
    %v2106 = vpack.c.b16 %v2061, %v2058
    %v2107 = vpack.c.b16 %v2062, %v2059
    %v2108 = vpack.c.b16 %v2066, %v2063
    %v2109 = vpack.c.b16 %v2067, %v2064
    %v2110 = vpack.c.b16 %v2068, %v2065
    %v2111 = vpack.c.b16 %v2072, %v2069
    %v2112 = vpack.c.b16 %v2073, %v2070
    %v2113 = vpack.c.b16 %v2074, %v2071
    %v2114 = vpack.c.b16 %v2078, %v2075
    %v2115 = vpack.c.b16 %v2079, %v2076
    %v2116 = vpack.c.b16 %v2080, %v2077
    %v2117 = vpack.c.b16 %v2084, %v2081
    %v2118 = vpack.c.b16 %v2085, %v2082
    %v2119 = vpack.c.b16 %v2086, %v2083
    %v2120 = vpack.c.b16 %v2090, %v2087
    %v2121 = vpack.c.b16 %v2091, %v2088
    %v2122 = vpack.c.b16 %v2092, %v2089
    %v2123 = vpack.c.b16 %v2096, %v2093
    %v2124 = vpack.c.b16 %v2097, %v2094
    %v2125 = vpack.c.b16 %v2098, %v2095
    %v2126 = vpack.c.b16 %v2102, %v2099
    %v2127 = vpack.c.b16 %v2103, %v2100
    %v2128 = vpack.c.b16 %v2104, %v2101
    %2153 = vmatprep.subr.bf16.mxu0 %v2127
    %2154 = vmatpush1.bf16.msra.mxu0 %v2126
    %2155 = vmatprep.subr.bf16.mxu0 %v2124
    %2156 = vmatpush1.bf16.msra.mxu0 %v2123
    %2157 = vmatprep.subr.bf16.mxu0 %v2121
    %2158 = vmatpush1.bf16.msra.mxu0 %v2120
    %2159 = vmatprep.subr.bf16.mxu0 %v2118
    %2160 = vmatpush1.bf16.msra.mxu0 %v2117
    %2161 = vmatprep.subr.bf16.mxu0 %v2115
    %2162 = vmatpush1.bf16.msra.mxu0 %v2114
    %2163 = vmatprep.subr.bf16.mxu0 %v2112
    %2164 = vmatpush1.bf16.msra.mxu0 %v2111
    %2165 = vmatprep.subr.bf16.mxu0 %v2109
    %2166 = vmatpush1.bf16.msra.mxu0 %v2108
    %2167 = vmatprep.subr.bf16.mxu0 %v2106
    %2168 = vmatpush1.bf16.msra.mxu0 %v2105
    %2169 = vmatprep.subr.bf16.mxu0 0
    %2170 = vmatpush2.bf16.msra.mxu0 0
    %2171 = vmatprep.subr.bf16.mxu0 0
    %2172 = vmatpush2.bf16.msra.mxu0 0
    %2173 = vmatprep.subr.bf16.mxu0 0
    %2174 = vmatpush2.bf16.msra.mxu0 0
    %2175 = vmatprep.subr.bf16.mxu0 0
    %2176 = vmatpush2.bf16.msra.mxu0 0
    %2177 = vmatprep.subr.bf16.mxu0 0
    %2178 = vmatpush2.bf16.msra.mxu0 0
    %2179 = vmatprep.subr.bf16.mxu0 0
    %2180 = vmatpush2.bf16.msra.mxu0 0
    %2181 = vmatprep.subr.bf16.mxu0 0
    %2182 = vmatpush2.bf16.msra.mxu0 0
    %2183 = vmatprep.subr.bf16.mxu0 0
    %2184 = vmatpush2.bf16.msra.mxu0 0
    %2185 = vmatprep.mubr.bf16.mxu0 0
    %2186 = vmatmul.mubr.bf16.gmra.mxu0 0
    %v2187 = vpop.f32.mrf.mxu0
    %v2188 = vadd.f32 0.0, %v2187
    %v2189 = vpop.f32.mrf.mxu0
    %v2190 = vadd.f32 0.0, %v2189
    %v2191 = vpop.f32.mrf.mxu0
    %v2192 = vpop.f32.mrf.mxu0
    %2193 = vdwg.mxu0
    %2194 = vmatprep.subr.bf16.mxu0 0
    %2195 = vmatpush1.bf16.msra.mxu0 %v2128
    %2196 = vmatprep.subr.bf16.mxu0 0
    %2197 = vmatpush1.bf16.msra.mxu0 %v2125
    %2198 = vmatprep.subr.bf16.mxu0 0
    %2199 = vmatpush1.bf16.msra.mxu0 %v2122
    %2200 = vmatprep.subr.bf16.mxu0 0
    %2201 = vmatpush1.bf16.msra.mxu0 %v2119
    %2202 = vmatprep.subr.bf16.mxu0 0
    %2203 = vmatpush1.bf16.msra.mxu0 %v2116
    %2204 = vmatprep.subr.bf16.mxu0 0
    %2205 = vmatpush1.bf16.msra.mxu0 %v2113
    %2206 = vmatprep.subr.bf16.mxu0 0
    %2207 = vmatpush1.bf16.msra.mxu0 %v2110
    %2208 = vmatprep.subr.bf16.mxu0 0
    %2209 = vmatpush1.bf16.msra.mxu0 %v2107
    %2210 = vmatprep.subr.bf16.mxu0 0
    %2211 = vmatpush2.bf16.msra.mxu0 0
    %2212 = vmatprep.subr.bf16.mxu0 0
    %2213 = vmatpush2.bf16.msra.mxu0 0
    %2214 = vmatprep.subr.bf16.mxu0 0
    %2215 = vmatpush2.bf16.msra.mxu0 0
    %2216 = vmatprep.subr.bf16.mxu0 0
    %2217 = vmatpush2.bf16.msra.mxu0 0
    %2218 = vmatprep.subr.bf16.mxu0 0
    %2219 = vmatpush2.bf16.msra.mxu0 0
    %2220 = vmatprep.subr.bf16.mxu0 0
    %2221 = vmatpush2.bf16.msra.mxu0 0
    %2222 = vmatprep.subr.bf16.mxu0 0
    %2223 = vmatpush2.bf16.msra.mxu0 0
    %2224 = vmatprep.subr.bf16.mxu0 0
    %2225 = vmatpush2.bf16.msra.mxu0 0
    %2226 = vmatprep.mubr.bf16.mxu0 0
    %2227 = vmatmul.mubr.bf16.gmra.mxu0 0
    %v2228 = vpop.f32.mrf.mxu0
    %v2229 = vadd.f32 0.0, %v2228
    %v2230 = vpop.f32.mrf.mxu0
    %v2231 = vpop.f32.mrf.mxu0
    %v2232 = vpop.f32.mrf.mxu0
    %2233 = vdwg.mxu0
    %v2234 = vadd.f32 %v2022, %v2188
    %v2235 = vxor.u32 %v2234, 2147483648
    %v2236 = vmul.f32 %v2235, 1.442695
    %v2237 = vpow.pop %v2236
    %v2238 = vadd.f32 %v2237, 1.0
    %v2239 = vrcp.pop %v2238
    %v2240 = vmul.f32 1.0, %v2239
    %v2241 = vadd.f32 %v2023, %v2190
    %v2242 = vxor.u32 %v2241, 2147483648
    %v2243 = vmul.f32 %v2242, 1.442695
    %v2244 = vpow.pop %v2243
    %v2245 = vadd.f32 %v2244, 1.0
    %v2246 = vrcp.pop %v2245
    %v2247 = vmul.f32 1.0, %v2246
    %v2248 = vadd.f32 %v2229, %v2020
    %v2249 = vmul.f32 %v2240, %v2248
    %v2250 = vadd.f32 %v2024, %v2249
    %v2251 = vtanh.pop %v2250
    %v2252 = vsub.f32 1.0, %v2247
    %v2253 = vmul.f32 %v2252, %v2251
    %v2254 = vmul.f32 %v2247, 0.0
    %v2255 = vadd.f32 %v2253, %v2254
    %v2256 = vld [vmem:[%s862] sm:$0xff]
    %v2257 = vld [vmem:[%s862 + $0x8] sm:$0xff]
    %v2258 = vld [vmem:[%s862 + $0x10] sm:$0xff]
    %v2259 = vpack.c.bf16 %v2255, %v2255
    %2260 = vmatprep.subr.bf16.mxu0 %v2127
    %2261 = vmatpush1.bf16.msra.mxu0 %v2126
    %2262 = vmatprep.subr.bf16.mxu0 %v2124
    %2263 = vmatpush1.bf16.msra.mxu0 %v2123
    %2264 = vmatprep.subr.bf16.mxu0 %v2121
    %2265 = vmatpush1.bf16.msra.mxu0 %v2120
    %2266 = vmatprep.subr.bf16.mxu0 %v2118
    %2267 = vmatpush1.bf16.msra.mxu0 %v2117
    %2268 = vmatprep.subr.bf16.mxu0 %v2115
    %2269 = vmatpush1.bf16.msra.mxu0 %v2114
    %2270 = vmatprep.subr.bf16.mxu0 %v2112
    %2271 = vmatpush1.bf16.msra.mxu0 %v2111
    %2272 = vmatprep.subr.bf16.mxu0 %v2109
    %2273 = vmatpush1.bf16.msra.mxu0 %v2108
    %2274 = vmatprep.subr.bf16.mxu0 %v2106
    %2275 = vmatpush1.bf16.msra.mxu0 %v2105
    %2276 = vmatprep.subr.bf16.mxu0 0
    %2277 = vmatpush2.bf16.msra.mxu0 0
    %2278 = vmatprep.subr.bf16.mxu0 0
    %2279 = vmatpush2.bf16.msra.mxu0 0
    %2280 = vmatprep.subr.bf16.mxu0 0
    %2281 = vmatpush2.bf16.msra.mxu0 0
    %2282 = vmatprep.subr.bf16.mxu0 0
    %2283 = vmatpush2.bf16.msra.mxu0 0
    %2284 = vmatprep.subr.bf16.mxu0 0
    %2285 = vmatpush2.bf16.msra.mxu0 0
    %2286 = vmatprep.subr.bf16.mxu0 0
    %2287 = vmatpush2.bf16.msra.mxu0 0
    %2288 = vmatprep.subr.bf16.mxu0 0
    %2289 = vmatpush2.bf16.msra.mxu0 0
    %2290 = vmatprep.subr.bf16.mxu0 0
    %2291 = vmatpush2.bf16.msra.mxu0 0
    %2292 = vmatprep.mubr.bf16.mxu0 0
    %2293 = vmatmul.mubr.bf16.gmra.mxu0 %v2259
    %v2294 = vpop.f32.mrf.mxu0
    %v2295 = vadd.f32 0.0, %v2294
    %v2296 = vpop.f32.mrf.mxu0
    %v2297 = vadd.f32 0.0, %v2296
    %v2298 = vpop.f32.mrf.mxu0
    %v2299 = vpop.f32.mrf.mxu0
    %2300 = vdwg.mxu0
    %2301 = vmatprep.subr.bf16.mxu0 0
    %2302 = vmatpush1.bf16.msra.mxu0 %v2128
    %2303 = vmatprep.subr.bf16.mxu0 0
    %2304 = vmatpush1.bf16.msra.mxu0 %v2125
    %2305 = vmatprep.subr.bf16.mxu0 0
    %2306 = vmatpush1.bf16.msra.mxu0 %v2122
    %2307 = vmatprep.subr.bf16.mxu0 0
    %2308 = vmatpush1.bf16.msra.mxu0 %v2119
    %2309 = vmatprep.subr.bf16.mxu0 0
    %2310 = vmatpush1.bf16.msra.mxu0 %v2116
    %2311 = vmatprep.subr.bf16.mxu0 0
    %2312 = vmatpush1.bf16.msra.mxu0 %v2113
    %2313 = vmatprep.subr.bf16.mxu0 0
    %2314 = vmatpush1.bf16.msra.mxu0 %v2110
    %2315 = vmatprep.subr.bf16.mxu0 0
    %2316 = vmatpush1.bf16.msra.mxu0 %v2107
    %2317 = vmatprep.subr.bf16.mxu0 0
    %2318 = vmatpush2.bf16.msra.mxu0 0
    %2319 = vmatprep.subr.bf16.mxu0 0
    %2320 = vmatpush2.bf16.msra.mxu0 0
    %2321 = vmatprep.subr.bf16.mxu0 0
    %2322 = vmatpush2.bf16.msra.mxu0 0
    %2323 = vmatprep.subr.bf16.mxu0 0
    %2324 = vmatpush2.bf16.msra.mxu0 0
    %2325 = vmatprep.subr.bf16.mxu0 0
    %2326 = vmatpush2.bf16.msra.mxu0 0
    %2327 = vmatprep.subr.bf16.mxu0 0
    %2328 = vmatpush2.bf16.msra.mxu0 0
    %2329 = vmatprep.subr.bf16.mxu0 0
    %2330 = vmatpush2.bf16.msra.mxu0 0
    %2331 = vmatprep.subr.bf16.mxu0 0
    %2332 = vmatpush2.bf16.msra.mxu0 0
    %2333 = vmatprep.mubr.bf16.mxu0 0
    %2334 = vmatmul.mubr.bf16.gmra.mxu0 %v2259
    %v2335 = vpop.f32.mrf.mxu0
    %v2336 = vadd.f32 0.0, %v2335
    %v2337 = vpop.f32.mrf.mxu0
    %v2338 = vpop.f32.mrf.mxu0
    %v2339 = vpop.f32.mrf.mxu0
    %2340 = vdwg.mxu0
    %v2341 = vadd.f32 %v2256, %v2295
    %v2342 = vxor.u32 %v2341, 2147483648
    %v2343 = vmul.f32 %v2342, 1.442695
    %v2344 = vpow.pop %v2343
    %v2345 = vadd.f32 %v2344, 1.0
    %v2346 = vrcp.pop %v2345
    %v2347 = vmul.f32 1.0, %v2346
    %v2348 = vadd.f32 %v2257, %v2297
    %v2349 = vxor.u32 %v2348, 2147483648
    %v2350 = vmul.f32 %v2349, 1.442695
    %v2351 = vpow.pop %v2350
    %v2352 = vadd.f32 %v2351, 1.0
    %v2353 = vrcp.pop %v2352
    %v2354 = vmul.f32 1.0, %v2353
    %v2355 = vadd.f32 %v2336, %v2020
    %v2356 = vmul.f32 %v2347, %v2355
    %v2357 = vadd.f32 %v2258, %v2356
    %v2358 = vtanh.pop %v2357
    %v2359 = vsub.f32 1.0, %v2354
    %v2360 = vmul.f32 %v2359, %v2358
    %v2361 = vmul.f32 %v2354, %v2255
    %v2362 = vadd.f32 %v2360, %v2361
    %v2363 = vld [vmem:[%s972] sm:$0xff]
    %v2364 = vld [vmem:[%s972 + $0x8] sm:$0xff]
    %v2365 = vld [vmem:[%s972 + $0x10] sm:$0xff]
    %v2366 = vpack.c.bf16 %v2362, %v2362
    %2367 = vmatprep.subr.bf16.mxu0 %v2127
    %2368 = vmatpush1.bf16.msra.mxu0 %v2126
    %2369 = vmatprep.subr.bf16.mxu0 %v2124
    %2370 = vmatpush1.bf16.msra.mxu0 %v2123
    %2371 = vmatprep.subr.bf16.mxu0 %v2121
    %2372 = vmatpush1.bf16.msra.mxu0 %v2120
    %2373 = vmatprep.subr.bf16.mxu0 %v2118
    %2374 = vmatpush1.bf16.msra.mxu0 %v2117
    %2375 = vmatprep.subr.bf16.mxu0 %v2115
    %2376 = vmatpush1.bf16.msra.mxu0 %v2114
    %2377 = vmatprep.subr.bf16.mxu0 %v2112
    %2378 = vmatpush1.bf16.msra.mxu0 %v2111
    %2379 = vmatprep.subr.bf16.mxu0 %v2109
    %2380 = vmatpush1.bf16.msra.mxu0 %v2108
    %2381 = vmatprep.subr.bf16.mxu0 %v2106
    %2382 = vmatpush1.bf16.msra.mxu0 %v2105
    %2383 = vmatprep.subr.bf16.mxu0 0
    %2384 = vmatpush2.bf16.msra.mxu0 0
    %2385 = vmatprep.subr.bf16.mxu0 0
    %2386 = vmatpush2.bf16.msra.mxu0 0
    %2387 = vmatprep.subr.bf16.mxu0 0
    %2388 = vmatpush2.bf16.msra.mxu0 0
    %2389 = vmatprep.subr.bf16.mxu0 0
    %2390 = vmatpush2.bf16.msra.mxu0 0
    %2391 = vmatprep.subr.bf16.mxu0 0
    %2392 = vmatpush2.bf16.msra.mxu0 0
    %2393 = vmatprep.subr.bf16.mxu0 0
    %2394 = vmatpush2.bf16.msra.mxu0 0
    %2395 = vmatprep.subr.bf16.mxu0 0
    %2396 = vmatpush2.bf16.msra.mxu0 0
    %2397 = vmatprep.subr.bf16.mxu0 0
    %2398 = vmatpush2.bf16.msra.mxu0 0
    %2399 = vmatprep.mubr.bf16.mxu0 0
    %2400 = vmatmul.mubr.bf16.gmra.mxu0 %v2366
    %v2401 = vpop.f32.mrf.mxu0
    %v2402 = vadd.f32 0.0, %v2401
    %v2403 = vpop.f32.mrf.mxu0
    %v2404 = vadd.f32 0.0, %v2403
    %v2405 = vpop.f32.mrf.mxu0
    %v2406 = vpop.f32.mrf.mxu0
    %2407 = vdwg.mxu0
    %2408 = vmatprep.subr.bf16.mxu0 0
    %2409 = vmatpush1.bf16.msra.mxu0 %v2128
    %2410 = vmatprep.subr.bf16.mxu0 0
    %2411 = vmatpush1.bf16.msra.mxu0 %v2125
    %2412 = vmatprep.subr.bf16.mxu0 0
    %2413 = vmatpush1.bf16.msra.mxu0 %v2122
    %2414 = vmatprep.subr.bf16.mxu0 0
    %2415 = vmatpush1.bf16.msra.mxu0 %v2119
    %2416 = vmatprep.subr.bf16.mxu0 0
    %2417 = vmatpush1.bf16.msra.mxu0 %v2116
    %2418 = vmatprep.subr.bf16.mxu0 0
    %2419 = vmatpush1.bf16.msra.mxu0 %v2113
    %2420 = vmatprep.subr.bf16.mxu0 0
    %2421 = vmatpush1.bf16.msra.mxu0 %v2110
    %2422 = vmatprep.subr.bf16.mxu0 0
    %2423 = vmatpush1.bf16.msra.mxu0 %v2107
    %2424 = vmatprep.subr.bf16.mxu0 0
    %2425 = vmatpush2.bf16.msra.mxu0 0
    %2426 = vmatprep.subr.bf16.mxu0 0
    %2427 = vmatpush2.bf16.msra.mxu0 0
    %2428 = vmatprep.subr.bf16.mxu0 0
    %2429 = vmatpush2.bf16.msra.mxu0 0
    %2430 = vmatprep.subr.bf16.mxu0 0
    %2431 = vmatpush2.bf16.msra.mxu0 0
    %2432 = vmatprep.subr.bf16.mxu0 0
    %2433 = vmatpush2.bf16.msra.mxu0 0
    %2434 = vmatprep.subr.bf16.mxu0 0
    %2435 = vmatpush2.bf16.msra.mxu0 0
    %2436 = vmatprep.subr.bf16.mxu0 0
    %2437 = vmatpush2.bf16.msra.mxu0 0
    %2438 = vmatprep.subr.bf16.mxu0 0
    %2439 = vmatpush2.bf16.msra.mxu0 0
    %2440 = vmatprep.mubr.bf16.mxu0 0
    %2441 = vmatmul.mubr.bf16.gmra.mxu0 %v2366
    %v2442 = vpop.f32.mrf.mxu0
    %v2443 = vadd.f32 0.0, %v2442
    %v2444 = vpop.f32.mrf.mxu0
    %v2445 = vpop.f32.mrf.mxu0
    %v2446 = vpop.f32.mrf.mxu0
    %2447 = vdwg.mxu0
    %v2448 = vadd.f32 %v2363, %v2402
    %v2449 = vxor.u32 %v2448, 2147483648
    %v2450 = vmul.f32 %v2449, 1.442695
    %v2451 = vpow.pop %v2450
    %v2452 = vadd.f32 %v2451, 1.0
    %v2453 = vrcp.pop %v2452
    %v2454 = vmul.f32 1.0, %v2453
    %v2455 = vadd.f32 %v2364, %v2404
    %v2456 = vxor.u32 %v2455, 2147483648
    %v2457 = vmul.f32 %v2456, 1.442695
    %v2458 = vpow.pop %v2457
    %v2459 = vadd.f32 %v2458, 1.0
    %v2460 = vrcp.pop %v2459
    %v2461 = vmul.f32 1.0, %v2460
    %v2462 = vadd.f32 %v2443, %v2020
    %v2463 = vmul.f32 %v2454, %v2462
    %v2464 = vadd.f32 %v2365, %v2463
    %v2465 = vtanh.pop %v2464
    %v2466 = vsub.f32 1.0, %v2461
    %v2467 = vmul.f32 %v2466, %v2465
    %v2468 = vmul.f32 %v2461, %v2362
    %v2469 = vadd.f32 %v2467, %v2468
    %v2470 = vld [vmem:[%s1082] sm:$0xff]
    %v2471 = vld [vmem:[%s1082 + $0x8] sm:$0xff]
    %v2472 = vld [vmem:[%s1082 + $0x10] sm:$0xff]
    %v2473 = vpack.c.bf16 %v2469, %v2469
    %2474 = vmatprep.subr.bf16.mxu0 %v2127
    %2475 = vmatpush1.bf16.msra.mxu0 %v2126
    %2476 = vmatprep.subr.bf16.mxu0 %v2124
    %2477 = vmatpush1.bf16.msra.mxu0 %v2123
    %2478 = vmatprep.subr.bf16.mxu0 %v2121
    %2479 = vmatpush1.bf16.msra.mxu0 %v2120
    %2480 = vmatprep.subr.bf16.mxu0 %v2118
    %2481 = vmatpush1.bf16.msra.mxu0 %v2117
    %2482 = vmatprep.subr.bf16.mxu0 %v2115
    %2483 = vmatpush1.bf16.msra.mxu0 %v2114
    %2484 = vmatprep.subr.bf16.mxu0 %v2112
    %2485 = vmatpush1.bf16.msra.mxu0 %v2111
    %2486 = vmatprep.subr.bf16.mxu0 %v2109
    %2487 = vmatpush1.bf16.msra.mxu0 %v2108
    %2488 = vmatprep.subr.bf16.mxu0 %v2106
    %2489 = vmatpush1.bf16.msra.mxu0 %v2105
    %2490 = vmatprep.subr.bf16.mxu0 0
    %2491 = vmatpush2.bf16.msra.mxu0 0
    %2492 = vmatprep.subr.bf16.mxu0 0
    %2493 = vmatpush2.bf16.msra.mxu0 0
    %2494 = vmatprep.subr.bf16.mxu0 0
    %2495 = vmatpush2.bf16.msra.mxu0 0
    %2496 = vmatprep.subr.bf16.mxu0 0
    %2497 = vmatpush2.bf16.msra.mxu0 0
    %2498 = vmatprep.subr.bf16.mxu0 0
    %2499 = vmatpush2.bf16.msra.mxu0 0
    %2500 = vmatprep.subr.bf16.mxu0 0
    %2501 = vmatpush2.bf16.msra.mxu0 0
    %2502 = vmatprep.subr.bf16.mxu0 0
    %2503 = vmatpush2.bf16.msra.mxu0 0
    %2504 = vmatprep.subr.bf16.mxu0 0
    %2505 = vmatpush2.bf16.msra.mxu0 0
    %2506 = vmatprep.mubr.bf16.mxu0 0
    %2507 = vmatmul.mubr.bf16.gmra.mxu0 %v2473
    %v2508 = vpop.f32.mrf.mxu0
    %v2509 = vadd.f32 0.0, %v2508
    %v2510 = vpop.f32.mrf.mxu0
    %v2511 = vadd.f32 0.0, %v2510
    %v2512 = vpop.f32.mrf.mxu0
    %v2513 = vpop.f32.mrf.mxu0
    %2514 = vdwg.mxu0
    %2515 = vmatprep.subr.bf16.mxu0 0
    %2516 = vmatpush1.bf16.msra.mxu0 %v2128
    %2517 = vmatprep.subr.bf16.mxu0 0
    %2518 = vmatpush1.bf16.msra.mxu0 %v2125
    %2519 = vmatprep.subr.bf16.mxu0 0
    %2520 = vmatpush1.bf16.msra.mxu0 %v2122
    %2521 = vmatprep.subr.bf16.mxu0 0
    %2522 = vmatpush1.bf16.msra.mxu0 %v2119
    %2523 = vmatprep.subr.bf16.mxu0 0
    %2524 = vmatpush1.bf16.msra.mxu0 %v2116
    %2525 = vmatprep.subr.bf16.mxu0 0
    %2526 = vmatpush1.bf16.msra.mxu0 %v2113
    %2527 = vmatprep.subr.bf16.mxu0 0
    %2528 = vmatpush1.bf16.msra.mxu0 %v2110
    %2529 = vmatprep.subr.bf16.mxu0 0
    %2530 = vmatpush1.bf16.msra.mxu0 %v2107
    %2531 = vmatprep.subr.bf16.mxu0 0
    %2532 = vmatpush2.bf16.msra.mxu0 0
    %2533 = vmatprep.subr.bf16.mxu0 0
    %2534 = vmatpush2.bf16.msra.mxu0 0
    %2535 = vmatprep.subr.bf16.mxu0 0
    %2536 = vmatpush2.bf16.msra.mxu0 0
    %2537 = vmatprep.subr.bf16.mxu0 0
    %2538 = vmatpush2.bf16.msra.mxu0 0
    %2539 = vmatprep.subr.bf16.mxu0 0
    %2540 = vmatpush2.bf16.msra.mxu0 0
    %2541 = vmatprep.subr.bf16.mxu0 0
    %2542 = vmatpush2.bf16.msra.mxu0 0
    %2543 = vmatprep.subr.bf16.mxu0 0
    %2544 = vmatpush2.bf16.msra.mxu0 0
    %2545 = vmatprep.subr.bf16.mxu0 0
    %2546 = vmatpush2.bf16.msra.mxu0 0
    %2547 = vmatprep.mubr.bf16.mxu0 0
    %2548 = vmatmul.mubr.bf16.gmra.mxu0 %v2473
    %v2549 = vpop.f32.mrf.mxu0
    %v2550 = vadd.f32 0.0, %v2549
    %v2551 = vpop.f32.mrf.mxu0
    %v2552 = vpop.f32.mrf.mxu0
    %v2553 = vpop.f32.mrf.mxu0
    %2554 = vdwg.mxu0
    %v2555 = vadd.f32 %v2470, %v2509
    %v2556 = vxor.u32 %v2555, 2147483648
    %v2557 = vmul.f32 %v2556, 1.442695
    %v2558 = vpow.pop %v2557
    %v2559 = vadd.f32 %v2558, 1.0
    %v2560 = vrcp.pop %v2559
    %v2561 = vmul.f32 1.0, %v2560
    %v2562 = vadd.f32 %v2471, %v2511
    %v2563 = vxor.u32 %v2562, 2147483648
    %v2564 = vmul.f32 %v2563, 1.442695
    %v2565 = vpow.pop %v2564
    %v2566 = vadd.f32 %v2565, 1.0
    %v2567 = vrcp.pop %v2566
    %v2568 = vmul.f32 1.0, %v2567
    %v2569 = vadd.f32 %v2550, %v2020
    %v2570 = vmul.f32 %v2561, %v2569
    %v2571 = vadd.f32 %v2472, %v2570
    %v2572 = vtanh.pop %v2571
    %v2573 = vsub.f32 1.0, %v2568
    %v2574 = vmul.f32 %v2573, %v2572
    %v2575 = vmul.f32 %v2568, %v2469
    %v2576 = vadd.f32 %v2574, %v2575
    %v2577 = vld [vmem:[%s1192] sm:$0xff]
    %v2578 = vld [vmem:[%s1192 + $0x8] sm:$0xff]
    %v2579 = vld [vmem:[%s1192 + $0x10] sm:$0xff]
    %v2580 = vpack.c.bf16 %v2576, %v2576
    %2581 = vmatprep.subr.bf16.mxu0 %v2127
    %2582 = vmatpush1.bf16.msra.mxu0 %v2126
    %2583 = vmatprep.subr.bf16.mxu0 %v2124
    %2584 = vmatpush1.bf16.msra.mxu0 %v2123
    %2585 = vmatprep.subr.bf16.mxu0 %v2121
    %2586 = vmatpush1.bf16.msra.mxu0 %v2120
    %2587 = vmatprep.subr.bf16.mxu0 %v2118
    %2588 = vmatpush1.bf16.msra.mxu0 %v2117
    %2589 = vmatprep.subr.bf16.mxu0 %v2115
    %2590 = vmatpush1.bf16.msra.mxu0 %v2114
    %2591 = vmatprep.subr.bf16.mxu0 %v2112
    %2592 = vmatpush1.bf16.msra.mxu0 %v2111
    %2593 = vmatprep.subr.bf16.mxu0 %v2109
    %2594 = vmatpush1.bf16.msra.mxu0 %v2108
    %2595 = vmatprep.subr.bf16.mxu0 %v2106
    %2596 = vmatpush1.bf16.msra.mxu0 %v2105
    %2597 = vmatprep.subr.bf16.mxu0 0
    %2598 = vmatpush2.bf16.msra.mxu0 0
    %2599 = vmatprep.subr.bf16.mxu0 0
    %2600 = vmatpush2.bf16.msra.mxu0 0
    %2601 = vmatprep.subr.bf16.mxu0 0
    %2602 = vmatpush2.bf16.msra.mxu0 0
    %2603 = vmatprep.subr.bf16.mxu0 0
    %2604 = vmatpush2.bf16.msra.mxu0 0
    %2605 = vmatprep.subr.bf16.mxu0 0
    %2606 = vmatpush2.bf16.msra.mxu0 0
    %2607 = vmatprep.subr.bf16.mxu0 0
    %2608 = vmatpush2.bf16.msra.mxu0 0
    %2609 = vmatprep.subr.bf16.mxu0 0
    %2610 = vmatpush2.bf16.msra.mxu0 0
    %2611 = vmatprep.subr.bf16.mxu0 0
    %2612 = vmatpush2.bf16.msra.mxu0 0
    %2613 = vmatprep.mubr.bf16.mxu0 0
    %2614 = vmatmul.mubr.bf16.gmra.mxu0 %v2580
    %v2615 = vpop.f32.mrf.mxu0
    %v2616 = vadd.f32 0.0, %v2615
    %v2617 = vpop.f32.mrf.mxu0
    %v2618 = vadd.f32 0.0, %v2617
    %v2619 = vpop.f32.mrf.mxu0
    %v2620 = vpop.f32.mrf.mxu0
    %2621 = vdwg.mxu0
    %2622 = vmatprep.subr.bf16.mxu0 0
    %2623 = vmatpush1.bf16.msra.mxu0 %v2128
    %2624 = vmatprep.subr.bf16.mxu0 0
    %2625 = vmatpush1.bf16.msra.mxu0 %v2125
    %2626 = vmatprep.subr.bf16.mxu0 0
    %2627 = vmatpush1.bf16.msra.mxu0 %v2122
    %2628 = vmatprep.subr.bf16.mxu0 0
    %2629 = vmatpush1.bf16.msra.mxu0 %v2119
    %2630 = vmatprep.subr.bf16.mxu0 0
    %2631 = vmatpush1.bf16.msra.mxu0 %v2116
    %2632 = vmatprep.subr.bf16.mxu0 0
    %2633 = vmatpush1.bf16.msra.mxu0 %v2113
    %2634 = vmatprep.subr.bf16.mxu0 0
    %2635 = vmatpush1.bf16.msra.mxu0 %v2110
    %2636 = vmatprep.subr.bf16.mxu0 0
    %2637 = vmatpush1.bf16.msra.mxu0 %v2107
    %2638 = vmatprep.subr.bf16.mxu0 0
    %2639 = vmatpush2.bf16.msra.mxu0 0
    %2640 = vmatprep.subr.bf16.mxu0 0
    %2641 = vmatpush2.bf16.msra.mxu0 0
    %2642 = vmatprep.subr.bf16.mxu0 0
    %2643 = vmatpush2.bf16.msra.mxu0 0
    %2644 = vmatprep.subr.bf16.mxu0 0
    %2645 = vmatpush2.bf16.msra.mxu0 0
    %2646 = vmatprep.subr.bf16.mxu0 0
    %2647 = vmatpush2.bf16.msra.mxu0 0
    %2648 = vmatprep.subr.bf16.mxu0 0
    %2649 = vmatpush2.bf16.msra.mxu0 0
    %2650 = vmatprep.subr.bf16.mxu0 0
    %2651 = vmatpush2.bf16.msra.mxu0 0
    %2652 = vmatprep.subr.bf16.mxu0 0
    %2653 = vmatpush2.bf16.msra.mxu0 0
    %2654 = vmatprep.mubr.bf16.mxu0 0
    %2655 = vmatmul.mubr.bf16.gmra.mxu0 %v2580
    %v2656 = vpop.f32.mrf.mxu0
    %v2657 = vadd.f32 0.0, %v2656
    %v2658 = vpop.f32.mrf.mxu0
    %v2659 = vpop.f32.mrf.mxu0
    %v2660 = vpop.f32.mrf.mxu0
    %2661 = vdwg.mxu0
    %v2662 = vadd.f32 %v2577, %v2616
    %v2663 = vxor.u32 %v2662, 2147483648
    %v2664 = vmul.f32 %v2663, 1.442695
    %v2665 = vpow.pop %v2664
    %v2666 = vadd.f32 %v2665, 1.0
    %v2667 = vrcp.pop %v2666
    %v2668 = vmul.f32 1.0, %v2667
    %v2669 = vadd.f32 %v2578, %v2618
    %v2670 = vxor.u32 %v2669, 2147483648
    %v2671 = vmul.f32 %v2670, 1.442695
    %v2672 = vpow.pop %v2671
    %v2673 = vadd.f32 %v2672, 1.0
    %v2674 = vrcp.pop %v2673
    %v2675 = vmul.f32 1.0, %v2674
    %v2676 = vadd.f32 %v2657, %v2020
    %v2677 = vmul.f32 %v2668, %v2676
    %v2678 = vadd.f32 %v2579, %v2677
    %v2679 = vtanh.pop %v2678
    %v2680 = vsub.f32 1.0, %v2675
    %v2681 = vmul.f32 %v2680, %v2679
    %v2682 = vmul.f32 %v2675, %v2576
    %v2683 = vadd.f32 %v2681, %v2682
    %v2684 = vld [vmem:[%s1302] sm:$0xff]
    %v2685 = vld [vmem:[%s1302 + $0x8] sm:$0xff]
    %v2686 = vld [vmem:[%s1302 + $0x10] sm:$0xff]
    %v2687 = vpack.c.bf16 %v2683, %v2683
    %2688 = vmatprep.subr.bf16.mxu0 %v2127
    %2689 = vmatpush1.bf16.msra.mxu0 %v2126
    %2690 = vmatprep.subr.bf16.mxu0 %v2124
    %2691 = vmatpush1.bf16.msra.mxu0 %v2123
    %2692 = vmatprep.subr.bf16.mxu0 %v2121
    %2693 = vmatpush1.bf16.msra.mxu0 %v2120
    %2694 = vmatprep.subr.bf16.mxu0 %v2118
    %2695 = vmatpush1.bf16.msra.mxu0 %v2117
    %2696 = vmatprep.subr.bf16.mxu0 %v2115
    %2697 = vmatpush1.bf16.msra.mxu0 %v2114
    %2698 = vmatprep.subr.bf16.mxu0 %v2112
    %2699 = vmatpush1.bf16.msra.mxu0 %v2111
    %2700 = vmatprep.subr.bf16.mxu0 %v2109
    %2701 = vmatpush1.bf16.msra.mxu0 %v2108
    %2702 = vmatprep.subr.bf16.mxu0 %v2106
    %2703 = vmatpush1.bf16.msra.mxu0 %v2105
    %2704 = vmatprep.subr.bf16.mxu0 0
    %2705 = vmatpush2.bf16.msra.mxu0 0
    %2706 = vmatprep.subr.bf16.mxu0 0
    %2707 = vmatpush2.bf16.msra.mxu0 0
    %2708 = vmatprep.subr.bf16.mxu0 0
    %2709 = vmatpush2.bf16.msra.mxu0 0
    %2710 = vmatprep.subr.bf16.mxu0 0
    %2711 = vmatpush2.bf16.msra.mxu0 0
    %2712 = vmatprep.subr.bf16.mxu0 0
    %2713 = vmatpush2.bf16.msra.mxu0 0
    %2714 = vmatprep.subr.bf16.mxu0 0
    %2715 = vmatpush2.bf16.msra.mxu0 0
    %2716 = vmatprep.subr.bf16.mxu0 0
    %2717 = vmatpush2.bf16.msra.mxu0 0
    %2718 = vmatprep.subr.bf16.mxu0 0
    %2719 = vmatpush2.bf16.msra.mxu0 0
    %2720 = vmatprep.mubr.bf16.mxu0 0
    %2721 = vmatmul.mubr.bf16.gmra.mxu0 %v2687
    %v2722 = vpop.f32.mrf.mxu0
    %v2723 = vadd.f32 0.0, %v2722
    %v2724 = vpop.f32.mrf.mxu0
    %v2725 = vadd.f32 0.0, %v2724
    %v2726 = vpop.f32.mrf.mxu0
    %v2727 = vpop.f32.mrf.mxu0
    %2728 = vdwg.mxu0
    %2729 = vmatprep.subr.bf16.mxu0 0
    %2730 = vmatpush1.bf16.msra.mxu0 %v2128
    %2731 = vmatprep.subr.bf16.mxu0 0
    %2732 = vmatpush1.bf16.msra.mxu0 %v2125
    %2733 = vmatprep.subr.bf16.mxu0 0
    %2734 = vmatpush1.bf16.msra.mxu0 %v2122
    %2735 = vmatprep.subr.bf16.mxu0 0
    %2736 = vmatpush1.bf16.msra.mxu0 %v2119
    %2737 = vmatprep.subr.bf16.mxu0 0
    %2738 = vmatpush1.bf16.msra.mxu0 %v2116
    %2739 = vmatprep.subr.bf16.mxu0 0
    %2740 = vmatpush1.bf16.msra.mxu0 %v2113
    %2741 = vmatprep.subr.bf16.mxu0 0
    %2742 = vmatpush1.bf16.msra.mxu0 %v2110
    %2743 = vmatprep.subr.bf16.mxu0 0
    %2744 = vmatpush1.bf16.msra.mxu0 %v2107
    %2745 = vmatprep.subr.bf16.mxu0 0
    %2746 = vmatpush2.bf16.msra.mxu0 0
    %2747 = vmatprep.subr.bf16.mxu0 0
    %2748 = vmatpush2.bf16.msra.mxu0 0
    %2749 = vmatprep.subr.bf16.mxu0 0
    %2750 = vmatpush2.bf16.msra.mxu0 0
    %2751 = vmatprep.subr.bf16.mxu0 0
    %2752 = vmatpush2.bf16.msra.mxu0 0
    %2753 = vmatprep.subr.bf16.mxu0 0
    %2754 = vmatpush2.bf16.msra.mxu0 0
    %2755 = vmatprep.subr.bf16.mxu0 0
    %2756 = vmatpush2.bf16.msra.mxu0 0
    %2757 = vmatprep.subr.bf16.mxu0 0
    %2758 = vmatpush2.bf16.msra.mxu0 0
    %2759 = vmatprep.subr.bf16.mxu0 0
    %2760 = vmatpush2.bf16.msra.mxu0 0
    %2761 = vmatprep.mubr.bf16.mxu0 0
    %2762 = vmatmul.mubr.bf16.gmra.mxu0 %v2687
    %v2763 = vpop.f32.mrf.mxu0
    %v2764 = vadd.f32 0.0, %v2763
    %v2765 = vpop.f32.mrf.mxu0
    %v2766 = vpop.f32.mrf.mxu0
    %v2767 = vpop.f32.mrf.mxu0
    %2768 = vdwg.mxu0
    %v2769 = vadd.f32 %v2684, %v2723
    %v2770 = vxor.u32 %v2769, 2147483648
    %v2771 = vmul.f32 %v2770, 1.442695
    %v2772 = vpow.pop %v2771
    %v2773 = vadd.f32 %v2772, 1.0
    %v2774 = vrcp.pop %v2773
    %v2775 = vmul.f32 1.0, %v2774
    %v2776 = vadd.f32 %v2685, %v2725
    %v2777 = vxor.u32 %v2776, 2147483648
    %v2778 = vmul.f32 %v2777, 1.442695
    %v2779 = vpow.pop %v2778
    %v2780 = vadd.f32 %v2779, 1.0
    %v2781 = vrcp.pop %v2780
    %v2782 = vmul.f32 1.0, %v2781
    %v2783 = vadd.f32 %v2764, %v2020
    %v2784 = vmul.f32 %v2775, %v2783
    %v2785 = vadd.f32 %v2686, %v2784
    %v2786 = vtanh.pop %v2785
    %v2787 = vsub.f32 1.0, %v2782
    %v2788 = vmul.f32 %v2787, %v2786
    %v2789 = vmul.f32 %v2782, %v2683
    %v2790 = vadd.f32 %v2788, %v2789
    %v2791 = vld [vmem:[%s1412] sm:$0xff]
    %v2792 = vld [vmem:[%s1412 + $0x8] sm:$0xff]
    %v2793 = vld [vmem:[%s1412 + $0x10] sm:$0xff]
    %v2794 = vpack.c.bf16 %v2790, %v2790
    %2795 = vmatprep.subr.bf16.mxu0 %v2127
    %2796 = vmatpush1.bf16.msra.mxu0 %v2126
    %2797 = vmatprep.subr.bf16.mxu0 %v2124
    %2798 = vmatpush1.bf16.msra.mxu0 %v2123
    %2799 = vmatprep.subr.bf16.mxu0 %v2121
    %2800 = vmatpush1.bf16.msra.mxu0 %v2120
    %2801 = vmatprep.subr.bf16.mxu0 %v2118
    %2802 = vmatpush1.bf16.msra.mxu0 %v2117
    %2803 = vmatprep.subr.bf16.mxu0 %v2115
    %2804 = vmatpush1.bf16.msra.mxu0 %v2114
    %2805 = vmatprep.subr.bf16.mxu0 %v2112
    %2806 = vmatpush1.bf16.msra.mxu0 %v2111
    %2807 = vmatprep.subr.bf16.mxu0 %v2109
    %2808 = vmatpush1.bf16.msra.mxu0 %v2108
    %2809 = vmatprep.subr.bf16.mxu0 %v2106
    %2810 = vmatpush1.bf16.msra.mxu0 %v2105
    %2811 = vmatprep.subr.bf16.mxu0 0
    %2812 = vmatpush2.bf16.msra.mxu0 0
    %2813 = vmatprep.subr.bf16.mxu0 0
    %2814 = vmatpush2.bf16.msra.mxu0 0
    %2815 = vmatprep.subr.bf16.mxu0 0
    %2816 = vmatpush2.bf16.msra.mxu0 0
    %2817 = vmatprep.subr.bf16.mxu0 0
    %2818 = vmatpush2.bf16.msra.mxu0 0
    %2819 = vmatprep.subr.bf16.mxu0 0
    %2820 = vmatpush2.bf16.msra.mxu0 0
    %2821 = vmatprep.subr.bf16.mxu0 0
    %2822 = vmatpush2.bf16.msra.mxu0 0
    %2823 = vmatprep.subr.bf16.mxu0 0
    %2824 = vmatpush2.bf16.msra.mxu0 0
    %2825 = vmatprep.subr.bf16.mxu0 0
    %2826 = vmatpush2.bf16.msra.mxu0 0
    %2827 = vmatprep.mubr.bf16.mxu0 0
    %2828 = vmatmul.mubr.bf16.gmra.mxu0 %v2794
    %v2829 = vpop.f32.mrf.mxu0
    %v2830 = vadd.f32 0.0, %v2829
    %v2831 = vpop.f32.mrf.mxu0
    %v2832 = vadd.f32 0.0, %v2831
    %v2833 = vpop.f32.mrf.mxu0
    %v2834 = vpop.f32.mrf.mxu0
    %2835 = vdwg.mxu0
    %2836 = vmatprep.subr.bf16.mxu0 0
    %2837 = vmatpush1.bf16.msra.mxu0 %v2128
    %2838 = vmatprep.subr.bf16.mxu0 0
    %2839 = vmatpush1.bf16.msra.mxu0 %v2125
    %2840 = vmatprep.subr.bf16.mxu0 0
    %2841 = vmatpush1.bf16.msra.mxu0 %v2122
    %2842 = vmatprep.subr.bf16.mxu0 0
    %2843 = vmatpush1.bf16.msra.mxu0 %v2119
    %2844 = vmatprep.subr.bf16.mxu0 0
    %2845 = vmatpush1.bf16.msra.mxu0 %v2116
    %2846 = vmatprep.subr.bf16.mxu0 0
    %2847 = vmatpush1.bf16.msra.mxu0 %v2113
    %2848 = vmatprep.subr.bf16.mxu0 0
    %2849 = vmatpush1.bf16.msra.mxu0 %v2110
    %2850 = vmatprep.subr.bf16.mxu0 0
    %2851 = vmatpush1.bf16.msra.mxu0 %v2107
    %2852 = vmatprep.subr.bf16.mxu0 0
    %2853 = vmatpush2.bf16.msra.mxu0 0
    %2854 = vmatprep.subr.bf16.mxu0 0
    %2855 = vmatpush2.bf16.msra.mxu0 0
    %2856 = vmatprep.subr.bf16.mxu0 0
    %2857 = vmatpush2.bf16.msra.mxu0 0
    %2858 = vmatprep.subr.bf16.mxu0 0
    %2859 = vmatpush2.bf16.msra.mxu0 0
    %2860 = vmatprep.subr.bf16.mxu0 0
    %2861 = vmatpush2.bf16.msra.mxu0 0
    %2862 = vmatprep.subr.bf16.mxu0 0
    %2863 = vmatpush2.bf16.msra.mxu0 0
    %2864 = vmatprep.subr.bf16.mxu0 0
    %2865 = vmatpush2.bf16.msra.mxu0 0
    %2866 = vmatprep.subr.bf16.mxu0 0
    %2867 = vmatpush2.bf16.msra.mxu0 0
    %2868 = vmatprep.mubr.bf16.mxu0 0
    %2869 = vmatmul.mubr.bf16.gmra.mxu0 %v2794
    %v2870 = vpop.f32.mrf.mxu0
    %v2871 = vadd.f32 0.0, %v2870
    %v2872 = vpop.f32.mrf.mxu0
    %v2873 = vpop.f32.mrf.mxu0
    %v2874 = vpop.f32.mrf.mxu0
    %2875 = vdwg.mxu0
    %v2876 = vadd.f32 %v2791, %v2830
    %v2877 = vxor.u32 %v2876, 2147483648
    %v2878 = vmul.f32 %v2877, 1.442695
    %v2879 = vpow.pop %v2878
    %v2880 = vadd.f32 %v2879, 1.0
    %v2881 = vrcp.pop %v2880
    %v2882 = vmul.f32 1.0, %v2881
    %v2883 = vadd.f32 %v2792, %v2832
    %v2884 = vxor.u32 %v2883, 2147483648
    %v2885 = vmul.f32 %v2884, 1.442695
    %v2886 = vpow.pop %v2885
    %v2887 = vadd.f32 %v2886, 1.0
    %v2888 = vrcp.pop %v2887
    %v2889 = vmul.f32 1.0, %v2888
    %v2890 = vadd.f32 %v2871, %v2020
    %v2891 = vmul.f32 %v2882, %v2890
    %v2892 = vadd.f32 %v2793, %v2891
    %v2893 = vtanh.pop %v2892
    %v2894 = vsub.f32 1.0, %v2889
    %v2895 = vmul.f32 %v2894, %v2893
    %v2896 = vmul.f32 %v2889, %v2790
    %v2897 = vadd.f32 %v2895, %v2896
    %v2898 = vld [vmem:[%s1522] sm:$0xff]
    %v2899 = vld [vmem:[%s1522 + $0x8] sm:$0xff]
    %v2900 = vld [vmem:[%s1522 + $0x10] sm:$0xff]
    %v2901 = vpack.c.bf16 %v2897, %v2897
    %2902 = vmatprep.subr.bf16.mxu0 %v2127
    %2903 = vmatpush1.bf16.msra.mxu0 %v2126
    %2904 = vmatprep.subr.bf16.mxu0 %v2124
    %2905 = vmatpush1.bf16.msra.mxu0 %v2123
    %2906 = vmatprep.subr.bf16.mxu0 %v2121
    %2907 = vmatpush1.bf16.msra.mxu0 %v2120
    %2908 = vmatprep.subr.bf16.mxu0 %v2118
    %2909 = vmatpush1.bf16.msra.mxu0 %v2117
    %2910 = vmatprep.subr.bf16.mxu0 %v2115
    %2911 = vmatpush1.bf16.msra.mxu0 %v2114
    %2912 = vmatprep.subr.bf16.mxu0 %v2112
    %2913 = vmatpush1.bf16.msra.mxu0 %v2111
    %2914 = vmatprep.subr.bf16.mxu0 %v2109
    %2915 = vmatpush1.bf16.msra.mxu0 %v2108
    %2916 = vmatprep.subr.bf16.mxu0 %v2106
    %2917 = vmatpush1.bf16.msra.mxu0 %v2105
    %2918 = vmatprep.subr.bf16.mxu0 0
    %2919 = vmatpush2.bf16.msra.mxu0 0
    %2920 = vmatprep.subr.bf16.mxu0 0
    %2921 = vmatpush2.bf16.msra.mxu0 0
    %2922 = vmatprep.subr.bf16.mxu0 0
    %2923 = vmatpush2.bf16.msra.mxu0 0
    %2924 = vmatprep.subr.bf16.mxu0 0
    %2925 = vmatpush2.bf16.msra.mxu0 0
    %2926 = vmatprep.subr.bf16.mxu0 0
    %2927 = vmatpush2.bf16.msra.mxu0 0
    %2928 = vmatprep.subr.bf16.mxu0 0
    %2929 = vmatpush2.bf16.msra.mxu0 0
    %2930 = vmatprep.subr.bf16.mxu0 0
    %2931 = vmatpush2.bf16.msra.mxu0 0
    %2932 = vmatprep.subr.bf16.mxu0 0
    %2933 = vmatpush2.bf16.msra.mxu0 0
    %2934 = vmatprep.mubr.bf16.mxu0 0
    %2935 = vmatmul.mubr.bf16.gmra.mxu0 %v2901
    %v2936 = vpop.f32.mrf.mxu0
    %v2937 = vadd.f32 0.0, %v2936
    %v2938 = vpop.f32.mrf.mxu0
    %v2939 = vadd.f32 0.0, %v2938
    %v2940 = vpop.f32.mrf.mxu0
    %v2941 = vpop.f32.mrf.mxu0
    %2942 = vdwg.mxu0
    %2943 = vmatprep.subr.bf16.mxu0 0
    %2944 = vmatpush1.bf16.msra.mxu0 %v2128
    %2945 = vmatprep.subr.bf16.mxu0 0
    %2946 = vmatpush1.bf16.msra.mxu0 %v2125
    %2947 = vmatprep.subr.bf16.mxu0 0
    %2948 = vmatpush1.bf16.msra.mxu0 %v2122
    %2949 = vmatprep.subr.bf16.mxu0 0
    %2950 = vmatpush1.bf16.msra.mxu0 %v2119
    %2951 = vmatprep.subr.bf16.mxu0 0
    %2952 = vmatpush1.bf16.msra.mxu0 %v2116
    %2953 = vmatprep.subr.bf16.mxu0 0
    %2954 = vmatpush1.bf16.msra.mxu0 %v2113
    %2955 = vmatprep.subr.bf16.mxu0 0
    %2956 = vmatpush1.bf16.msra.mxu0 %v2110
    %2957 = vmatprep.subr.bf16.mxu0 0
    %2958 = vmatpush1.bf16.msra.mxu0 %v2107
    %2959 = vmatprep.subr.bf16.mxu0 0
    %2960 = vmatpush2.bf16.msra.mxu0 0
    %2961 = vmatprep.subr.bf16.mxu0 0
    %2962 = vmatpush2.bf16.msra.mxu0 0
    %2963 = vmatprep.subr.bf16.mxu0 0
    %2964 = vmatpush2.bf16.msra.mxu0 0
    %2965 = vmatprep.subr.bf16.mxu0 0
    %2966 = vmatpush2.bf16.msra.mxu0 0
    %2967 = vmatprep.subr.bf16.mxu0 0
    %2968 = vmatpush2.bf16.msra.mxu0 0
    %2969 = vmatprep.subr.bf16.mxu0 0
    %2970 = vmatpush2.bf16.msra.mxu0 0
    %2971 = vmatprep.subr.bf16.mxu0 0
    %2972 = vmatpush2.bf16.msra.mxu0 0
    %2973 = vmatprep.subr.bf16.mxu0 0
    %2974 = vmatpush2.bf16.msra.mxu0 0
    %2975 = vmatprep.mubr.bf16.mxu0 0
    %2976 = vmatmul.mubr.bf16.gmra.mxu0 %v2901
    %v2977 = vpop.f32.mrf.mxu0
    %v2978 = vadd.f32 0.0, %v2977
    %v2979 = vpop.f32.mrf.mxu0
    %v2980 = vpop.f32.mrf.mxu0
    %v2981 = vpop.f32.mrf.mxu0
    %2982 = vdwg.mxu0
    %v2983 = vadd.f32 %v2898, %v2937
    %v2984 = vxor.u32 %v2983, 2147483648
    %v2985 = vmul.f32 %v2984, 1.442695
    %v2986 = vpow.pop %v2985
    %v2987 = vadd.f32 %v2986, 1.0
    %v2988 = vrcp.pop %v2987
    %v2989 = vmul.f32 1.0, %v2988
    %v2990 = vadd.f32 %v2899, %v2939
    %v2991 = vxor.u32 %v2990, 2147483648
    %v2992 = vmul.f32 %v2991, 1.442695
    %v2993 = vpow.pop %v2992
    %v2994 = vadd.f32 %v2993, 1.0
    %v2995 = vrcp.pop %v2994
    %v2996 = vmul.f32 1.0, %v2995
    %v2997 = vadd.f32 %v2978, %v2020
    %v2998 = vmul.f32 %v2989, %v2997
    %v2999 = vadd.f32 %v2900, %v2998
    %v3000 = vtanh.pop %v2999
    %v3001 = vsub.f32 1.0, %v2996
    %v3002 = vmul.f32 %v3001, %v3000
    %v3003 = vmul.f32 %v2996, %v2897
    %v3004 = vadd.f32 %v3002, %v3003
    %v3005 = vld [vmem:[%s10] sm:$0xf]
    %v3006 = vld [vmem:[%s10 + $0x4] sm:$0xf]
    %v3007 = vld [vmem:[%s10 + $0x8] sm:$0xf]
    %v3008 = vld [vmem:[%s10 + $0xc] sm:$0xf]
    %v3009 = vld [vmem:[%s10 + $0x10] sm:$0xf]
    %v3010 = vld [vmem:[%s10 + $0x14] sm:$0xf]
    %v3011 = vld [vmem:[%s10 + $0x18] sm:$0xf]
    %v3012 = vld [vmem:[%s10 + $0x1c] sm:$0xf]
    %v3013 = vld [vmem:[%s10 + $0x20] sm:$0xf]
    %v3014 = vld [vmem:[%s10 + $0x24] sm:$0xf]
    %v3015 = vld [vmem:[%s10 + $0x28] sm:$0xf]
    %v3016 = vld [vmem:[%s10 + $0x2c] sm:$0xf]
    %v3017 = vld [vmem:[%s10 + $0x30] sm:$0xf]
    %v3018 = vld [vmem:[%s10 + $0x34] sm:$0xf]
    %v3019 = vld [vmem:[%s10 + $0x38] sm:$0xf]
    %v3020 = vld [vmem:[%s10 + $0x3c] sm:$0xf]
    %v3021 = vpack.c.bf16 %v3004, %v3004
    %v3022 = vld [vmem:[%s11] sm:$0x1]
    %v3024 = vlaneseq
    %v3025 = vshrl.u32 %v3024, 7
    %v3026 = vsub.s32 0, %v3025
    %v3027 = vrot.slane %v3022, %v3026
    %v3045 = vunpack.c.l.b16 %v3005
    %v3046 = vunpack.c.l.b16 %v3006
    %v3047 = vunpack.c.l.b16 %v3007
    %v3048 = vunpack.c.l.b16 %v3008
    %v3049 = vunpack.c.l.b16 %v3009
    %v3050 = vunpack.c.l.b16 %v3010
    %v3051 = vunpack.c.l.b16 %v3011
    %v3052 = vunpack.c.l.b16 %v3012
    %v3053 = vunpack.c.l.b16 %v3013
    %v3054 = vunpack.c.l.b16 %v3014
    %v3055 = vunpack.c.l.b16 %v3015
    %v3056 = vunpack.c.l.b16 %v3016
    %v3057 = vunpack.c.l.b16 %v3017
    %v3058 = vunpack.c.l.b16 %v3018
    %v3059 = vunpack.c.l.b16 %v3019
    %v3060 = vunpack.c.l.b16 %v3020
    %v3061 = vpack.c.b16 %v3046, %v3045
    %v3062 = vpack.c.b16 %v3048, %v3047
    %v3063 = vpack.c.b16 %v3050, %v3049
    %v3064 = vpack.c.b16 %v3052, %v3051
    %v3065 = vpack.c.b16 %v3054, %v3053
    %v3066 = vpack.c.b16 %v3056, %v3055
    %v3067 = vpack.c.b16 %v3058, %v3057
    %v3068 = vpack.c.b16 %v3060, %v3059
    %3077 = vmatprep.subr.bf16.mxu0 0
    %3078 = vmatpush1.bf16.msra.mxu0 %v3068
    %3079 = vmatprep.subr.bf16.mxu0 0
    %3080 = vmatpush1.bf16.msra.mxu0 %v3067
    %3081 = vmatprep.subr.bf16.mxu0 0
    %3082 = vmatpush1.bf16.msra.mxu0 %v3066
    %3083 = vmatprep.subr.bf16.mxu0 0
    %3084 = vmatpush1.bf16.msra.mxu0 %v3065
    %3085 = vmatprep.subr.bf16.mxu0 0
    %3086 = vmatpush1.bf16.msra.mxu0 %v3064
    %3087 = vmatprep.subr.bf16.mxu0 0
    %3088 = vmatpush1.bf16.msra.mxu0 %v3063
    %3089 = vmatprep.subr.bf16.mxu0 0
    %3090 = vmatpush1.bf16.msra.mxu0 %v3062
    %3091 = vmatprep.subr.bf16.mxu0 0
    %3092 = vmatpush1.bf16.msra.mxu0 %v3061
    %3093 = vmatprep.subr.bf16.mxu0 0
    %3094 = vmatpush2.bf16.msra.mxu0 0
    %3095 = vmatprep.subr.bf16.mxu0 0
    %3096 = vmatpush2.bf16.msra.mxu0 0
    %3097 = vmatprep.subr.bf16.mxu0 0
    %3098 = vmatpush2.bf16.msra.mxu0 0
    %3099 = vmatprep.subr.bf16.mxu0 0
    %3100 = vmatpush2.bf16.msra.mxu0 0
    %3101 = vmatprep.subr.bf16.mxu0 0
    %3102 = vmatpush2.bf16.msra.mxu0 0
    %3103 = vmatprep.subr.bf16.mxu0 0
    %3104 = vmatpush2.bf16.msra.mxu0 0
    %3105 = vmatprep.subr.bf16.mxu0 0
    %3106 = vmatpush2.bf16.msra.mxu0 0
    %3107 = vmatprep.subr.bf16.mxu0 0
    %3108 = vmatpush2.bf16.msra.mxu0 0
    %3109 = vmatprep.mubr.bf16.mxu0 0
    %3110 = vmatmul.mubr.bf16.gmra.mxu0 %v3021
    %v3111 = vpop.f32.mrf.mxu0
    %v3112 = vadd.f32 %v3027, %v3111
    %v3113 = vpop.f32.mrf.mxu0
    %v3114 = vpop.f32.mrf.mxu0
    %v3115 = vpop.f32.mrf.mxu0
    %3116 = vdwg.mxu0
    %v3117 = vxor.u32 %v3112, 2147483648
    %v3118 = vmul.f32 %v3117, 1.442695
    %v3119 = vpow.pop %v3118
    %v3120 = vadd.f32 %v3119, 1.0
    %v3121 = vrcp.pop %v3120
    %v3122 = vmul.f32 1.0, %v3121
    %3123 = vst [vmem:[%s12] sm:$0xff] %v3122
    // Predicated region
    $region66: #{gru_forward.1} parent=1 // pred_check
      _
    $region67: #{gru_forward.1} parent=1 // pred_check_branch
      %3125 = sbr.rel (0) target = $region69
    $region68: #{gru_forward.1} parent=1 // pred_region
      _
    $region69: #{gru_forward.1} parent=1 // pred_fallthru
      _
    // Predicated region
    $region70: #{gru_forward.1} parent=1 // pred_check
      _
    $region71: #{gru_forward.1} parent=1 // pred_check_branch
      %3127 = sbr.rel (0) target = $region73
    $region72: #{gru_forward.1} parent=1 // pred_region
      _
    $region73: #{gru_forward.1} parent=1 // pred_fallthru
      _
    %3128 = vsyncpa [#allocation5], 1
    %3129 = vsyncpa [#allocation7], 1
    %3130 = vsyncpa [#allocation10], 1

</llo_original>
